<compile_context>
chip_gen: v7x
topology: tpu7x:2x2x1
jax: 0.10.0
libtpu: 0.0.40
codegen_flags: <defaults>
</compile_context>

<pallas_src>
import functools
import numpy as np
import jax
import jax.numpy as jnp
from jax import lax
from jax.experimental import pallas as pl
from jax.experimental.pallas import tpu as pltpu


def lenet5_kernel(patches1_ref, w1_ref, b1_ref, w2_ref, b2_ref,
                  wfc1_ref, bfc1_ref, wfc2_ref, bfc2_ref, wfc3_ref, bfc3_ref,
                  out_ref):
    f32 = jnp.float32
    bf16 = jnp.bfloat16
    Bt = out_ref.shape[0]                 # batch elements in this grid block

    # ---- conv_1 (1->6, k=5, valid): one MXU matmul over im2col patches ----
    a1 = jnp.dot(patches1_ref[...], w1_ref[...], preferred_element_type=f32)
    a1 = jnp.maximum(a1 + b1_ref[...], 0.0)                   # (Bt*576, 6)
    # rows are ordered (b, i', j') with i'/j' in even/odd-separated order;
    # 24 is a multiple of 8, so this reshape keeps sublane tiles aligned.
    a1 = a1.reshape(Bt, 24, 24, 6)

    # ---- avgpool 2x2 stride 2 (24x24 -> 12x12), vectorized on the VPU ----
    # even/odd separation turns the 2x2 reduction into two contiguous
    # half-slice adds along each spatial axis (pooled axes come out in
    # normal order).  The 1/4 scale is folded into w2 in the wrapper.
    hsum = a1[:, 0:12] + a1[:, 12:24]                          # (Bt, 12, 24, 6)
    pool1 = hsum[:, :, 0:12, :] + hsum[:, :, 12:24, :]         # (Bt, 12, 12, 6)

    # ---- conv_2 (6->16, k=5, valid): in-kernel im2col -> one MXU matmul ----
    taps = [pool1[:, kh:kh + 8, kw:kw + 8, :]
            for kh in range(5) for kw in range(5)]             # 25 x (Bt,8,8,6)
    patches2 = jnp.concatenate(taps, axis=-1)                  # (Bt, 8, 8, 150)
    patches2 = patches2.reshape(Bt * 64, 150).astype(bf16)
    a2 = jnp.dot(patches2, w2_ref[...], preferred_element_type=f32)
    a2 = jnp.maximum(a2 + b2_ref[...], 0.0)                    # (Bt*64, 16)
    a2 = a2.reshape(Bt, 8, 8, 16)

    # ---- avgpool 2x2 (8x8 -> 4x4) fused with the NHWC flatten: 16 lane- ----
    # ---- concat pieces in (h, w, c) order -> (Bt, 256).  1/4 scale is    ----
    # ---- folded into wfc1 in the wrapper.                                ----
    pieces = []
    for ph in range(4):
        row = a2[:, 2 * ph, :, :] + a2[:, 2 * ph + 1, :, :]    # (Bt, 8, 16)
        for pw in range(4):
            pieces.append(row[:, 2 * pw, :] + row[:, 2 * pw + 1, :])  # (Bt,16)
    flat = jnp.concatenate(pieces, axis=-1)                    # (Bt, 256)

    # ---- fc_1 -> relu -> fc_2 -> relu -> fc_3 (single MXU matmuls) ----
    h1 = jnp.maximum(
        jnp.dot(flat.astype(bf16), wfc1_ref[...], preferred_element_type=f32)
        + bfc1_ref[...], 0.0)
    h2 = jnp.maximum(
        jnp.dot(h1.astype(bf16), wfc2_ref[...], preferred_element_type=f32)
        + bfc2_ref[...], 0.0)
    out_ref[...] = (jnp.dot(h2.astype(bf16), wfc3_ref[...],
                            preferred_element_type=f32) + bfc3_ref[...])


# even/odd-separated spatial order used for the conv_1 output axes
_PERM24 = np.concatenate([np.arange(0, 24, 2), np.arange(1, 24, 2)])


@jax.jit
def lenet5_forward(x_nchw, p):
    """x_nchw: [B, 1, 28, 28] float32 (PyTorch layout).  Returns [B, 10]."""
    f32 = jnp.float32
    bf16 = jnp.bfloat16
    B = x_nchw.shape[0]

    # --- wrapper-side layout plumbing (no FLOPs) ---
    x2 = x_nchw[:, 0].astype(f32)                              # (B, 28, 28)
    # im2col of the input for conv_1: (B, 24, 24, 25), tap order (kh, kw).
    taps = [x2[:, kh:kh + 24, kw:kw + 24] for kh in range(5) for kw in range(5)]
    patches1 = jnp.stack(taps, axis=-1)
    # even/odd-separate both output spatial axes for the in-kernel avgpool.
    patches1 = patches1[:, _PERM24][:, :, _PERM24]
    patches1 = patches1.reshape(B * 576, 25).astype(bf16)

    w1 = jnp.transpose(p['conv1_w'][:, 0], (1, 2, 0)).reshape(25, 6).astype(bf16)
    b1 = p['conv1_b'].reshape(1, 6).astype(f32)
    # conv2 weight -> (kh, kw, c_in, c_out) -> (150, 16) matching the in-kernel
    # im2col column order; 0.25 pooling scale of pool_1 is folded in here.
    w2 = (jnp.transpose(p['conv2_w'], (2, 3, 1, 0)).reshape(150, 16)
          * 0.25).astype(bf16)
    b2 = p['conv2_b'].reshape(1, 16).astype(f32)
    # fc1 weight (120, 256) indexes 256 as NCHW (c, h, w); re-order to the
    # (h, w, c) order produced by the in-kernel flatten; fold pool_2's 0.25.
    wfc1 = (jnp.transpose(p['fc1_w'].reshape(120, 16, 4, 4),
                          (2, 3, 1, 0)).reshape(256, 120) * 0.25).astype(bf16)
    bfc1 = p['fc1_b'].reshape(1, 120).astype(f32)
    wfc2 = p['fc2_w'].T.astype(bf16)                           # (120, 84)
    bfc2 = p['fc2_b'].reshape(1, 84).astype(f32)
    # pad fc_3 to 128 output lanes for a lane-dense final store.
    wfc3 = jnp.zeros((84, 128), bf16).at[:, :10].set(p['fc3_w'].T.astype(bf16))
    bfc3 = jnp.zeros((1, 128), f32).at[:, :10].set(
        p['fc3_b'].reshape(1, 10).astype(f32))

    # batch tiling: whole batch for tiny B, blocks of 8 otherwise (multiple of
    # the 8-sublane tile); the axis is 'parallel' so v7x shards it across TCs.
    bt = B if B <= 8 else 8
    grid = (pl.cdiv(B, bt),)

    in_specs = [
        pl.BlockSpec((bt * 576, 25), lambda i: (i, 0)),
        pl.BlockSpec((25, 6), lambda i: (0, 0)),
        pl.BlockSpec((1, 6), lambda i: (0, 0)),
        pl.BlockSpec((150, 16), lambda i: (0, 0)),
        pl.BlockSpec((1, 16), lambda i: (0, 0)),
        pl.BlockSpec((256, 120), lambda i: (0, 0)),
        pl.BlockSpec((1, 120), lambda i: (0, 0)),
        pl.BlockSpec((120, 84), lambda i: (0, 0)),
        pl.BlockSpec((1, 84), lambda i: (0, 0)),
        pl.BlockSpec((84, 128), lambda i: (0, 0)),
        pl.BlockSpec((1, 128), lambda i: (0, 0)),
    ]

    out = pl.pallas_call(
        lenet5_kernel,
        out_shape=jax.ShapeDtypeStruct((B, 128), f32),
        grid=grid,
        in_specs=in_specs,
        out_specs=pl.BlockSpec((bt, 128), lambda i: (i, 0)),
        compiler_params=pltpu.CompilerParams(
            dimension_semantics=("parallel",)),
    )(patches1, w1, b1, w2, b2, wfc1, bfc1, wfc2, bfc2, wfc3, bfc3)
    return out[:, :10]


def init_params(key):
    ks = jax.random.split(key, 10)

    def nrm(k, shape, scale):
        return jax.random.normal(k, shape, dtype=jnp.float32) * scale

    return {
        'conv1_w': nrm(ks[0], (6, 1, 5, 5), 1.0 / np.sqrt(25.0)),
        'conv1_b': nrm(ks[1], (6,), 0.05),
        'conv2_w': nrm(ks[2], (16, 6, 5, 5), 1.0 / np.sqrt(150.0)),
        'conv2_b': nrm(ks[3], (16,), 0.05),
        'fc1_w': nrm(ks[4], (120, 256), 1.0 / np.sqrt(256.0)),
        'fc1_b': nrm(ks[5], (120,), 0.05),
        'fc2_w': nrm(ks[6], (84, 120), 1.0 / np.sqrt(120.0)),
        'fc2_b': nrm(ks[7], (84,), 0.05),
        'fc3_w': nrm(ks[8], (10, 84), 1.0 / np.sqrt(84.0)),
        'fc3_b': nrm(ks[9], (10,), 0.05),
    }


def ref_forward(x, p):
    """Pure-JAX reference matching the PyTorch forward exactly (drop_rate=0)."""
    def conv(a, w, b):
        y = lax.conv_general_dilated(a, w, (1, 1), 'VALID',
                                     dimension_numbers=('NCHW', 'OIHW', 'NCHW'),
                                     precision=lax.Precision.HIGHEST)
        return y + b[None, :, None, None]

    def avgpool2(a):
        B, C, H, W = a.shape
        return a.reshape(B, C, H // 2, 2, W // 2, 2).mean(axis=(3, 5))

    a = avgpool2(jax.nn.relu(conv(x, p['conv1_w'], p['conv1_b'])))
    a = avgpool2(jax.nn.relu(conv(a, p['conv2_w'], p['conv2_b'])))
    B = x.shape[0]
    flat = a.reshape(B, 16 * 4 * 4)                  # NCHW flatten, like .view
    h1 = jax.nn.relu(flat @ p['fc1_w'].T + p['fc1_b'])
    h2 = jax.nn.relu(h1 @ p['fc2_w'].T + p['fc2_b'])
    return h2 @ p['fc3_w'].T + p['fc3_b']


if __name__ == "__main__":
    key = jax.random.PRNGKey(0)
    kx, kp = jax.random.split(key)
    params = init_params(kp)
    x = jax.random.normal(kx, (2, 1, 28, 28), dtype=jnp.float32)  # [b,1,28,28]

    y = jax.block_until_ready(lenet5_forward(x, params))
    y_ref = jax.block_until_ready(ref_forward(x, params))

    assert y.shape == (2, 10), y.shape
    # tolerance accounts for bf16 MXU operands (f32 accumulation)
    assert np.allclose(np.asarray(y), np.asarray(y_ref), rtol=5e-2, atol=5e-2), \
        "Pallas kernel output mismatch vs JAX reference"
    print("KERNEL_OK")
</pallas_src>

<mosaic_0001>
module attributes {stable_mosaic.version = 11 : i64} {
  func.func @lenet5_kernel(%arg0: i32, %arg1: memref<1152x25xbf16, #tpu.memory_space<vmem>>, %arg2: memref<25x6xbf16, #tpu.memory_space<vmem>>, %arg3: memref<1x6xf32, #tpu.memory_space<vmem>>, %arg4: memref<150x16xbf16, #tpu.memory_space<vmem>>, %arg5: memref<1x16xf32, #tpu.memory_space<vmem>>, %arg6: memref<256x120xbf16, #tpu.memory_space<vmem>>, %arg7: memref<1x120xf32, #tpu.memory_space<vmem>>, %arg8: memref<120x84xbf16, #tpu.memory_space<vmem>>, %arg9: memref<1x84xf32, #tpu.memory_space<vmem>>, %arg10: memref<84x128xbf16, #tpu.memory_space<vmem>>, %arg11: memref<1x128xf32, #tpu.memory_space<vmem>>, %arg12: memref<2x128xf32, #tpu.memory_space<vmem>>) attributes {dimension_semantics = [#tpu.dimension_semantics<parallel>], iteration_bounds = array<i64: 1>, scalar_prefetch = 0 : i64, scratch_operands = 0 : i64, tpu.core_type = #tpu.core_type<tc>, window_params = [{transform_indices = @transform_0, window_bounds = array<i64: 1152, 25>}, {pipeline_mode = #tpu.pipeline_mode<synchronous>, transform_indices = @transform_1, window_bounds = array<i64: 25, 6>}, {pipeline_mode = #tpu.pipeline_mode<synchronous>, transform_indices = @transform_2, window_bounds = array<i64: 1, 6>}, {pipeline_mode = #tpu.pipeline_mode<synchronous>, transform_indices = @transform_3, window_bounds = array<i64: 150, 16>}, {pipeline_mode = #tpu.pipeline_mode<synchronous>, transform_indices = @transform_4, window_bounds = array<i64: 1, 16>}, {pipeline_mode = #tpu.pipeline_mode<synchronous>, transform_indices = @transform_5, window_bounds = array<i64: 256, 120>}, {pipeline_mode = #tpu.pipeline_mode<synchronous>, transform_indices = @transform_6, window_bounds = array<i64: 1, 120>}, {pipeline_mode = #tpu.pipeline_mode<synchronous>, transform_indices = @transform_7, window_bounds = array<i64: 120, 84>}, {pipeline_mode = #tpu.pipeline_mode<synchronous>, transform_indices = @transform_8, window_bounds = array<i64: 1, 84>}, {pipeline_mode = #tpu.pipeline_mode<synchronous>, transform_indices = @transform_9, window_bounds = array<i64: 84, 128>}, {pipeline_mode = #tpu.pipeline_mode<synchronous>, transform_indices = @transform_10, window_bounds = array<i64: 1, 128>}, {transform_indices = @transform_11, window_bounds = array<i64: 2, 128>}]} {
    %c0 = arith.constant 0 : index
    %c0_0 = arith.constant 0 : index
    %0 = vector.load %arg1[%c0, %c0_0] : memref<1152x25xbf16, #tpu.memory_space<vmem>>, vector<1152x25xbf16>
    %c0_1 = arith.constant 0 : index
    %c0_2 = arith.constant 0 : index
    %1 = vector.load %arg2[%c0_1, %c0_2] : memref<25x6xbf16, #tpu.memory_space<vmem>>, vector<25x6xbf16>
    %cst = arith.constant dense<0.000000e+00> : vector<1152x6xf32>
    %2 = tpu.matmul %0, %1, %cst {dimension_numbers = #tpu.dot_dimension_numbers<[1], [0], [0], [1], [0, 0, 1, 1], [], []>} : vector<1152x25xbf16>, vector<25x6xbf16>, vector<1152x6xf32> -> vector<1152x6xf32>
    %c0_3 = arith.constant 0 : index
    %c0_4 = arith.constant 0 : index
    %3 = vector.load %arg3[%c0_3, %c0_4] : memref<1x6xf32, #tpu.memory_space<vmem>>, vector<1x6xf32>
    %4 = vector.broadcast %3 : vector<1x6xf32> to vector<1152x6xf32>
    %5 = arith.addf %2, %4 : vector<1152x6xf32>
    %cst_5 = arith.constant 0.000000e+00 : f32
    %6 = vector.broadcast %cst_5 : f32 to vector<1152x6xf32>
    %7 = arith.maximumf %5, %6 : vector<1152x6xf32>
    %8 = vector.shape_cast %7 : vector<1152x6xf32> to vector<2x24x24x6xf32>
    %9 = vector.extract_strided_slice %8 {offsets = [0, 0, 0, 0], sizes = [2, 12, 24, 6], strides = [1, 1, 1, 1]} : vector<2x24x24x6xf32> to vector<2x12x24x6xf32>
    %10 = vector.extract_strided_slice %8 {offsets = [0, 12, 0, 0], sizes = [2, 12, 24, 6], strides = [1, 1, 1, 1]} : vector<2x24x24x6xf32> to vector<2x12x24x6xf32>
    %11 = arith.addf %9, %10 : vector<2x12x24x6xf32>
    %12 = vector.extract_strided_slice %11 {offsets = [0, 0, 0, 0], sizes = [2, 12, 12, 6], strides = [1, 1, 1, 1]} : vector<2x12x24x6xf32> to vector<2x12x12x6xf32>
    %13 = vector.extract_strided_slice %11 {offsets = [0, 0, 12, 0], sizes = [2, 12, 12, 6], strides = [1, 1, 1, 1]} : vector<2x12x24x6xf32> to vector<2x12x12x6xf32>
    %14 = arith.addf %12, %13 : vector<2x12x12x6xf32>
    %15 = vector.extract_strided_slice %14 {offsets = [0, 0, 0, 0], sizes = [2, 8, 8, 6], strides = [1, 1, 1, 1]} : vector<2x12x12x6xf32> to vector<2x8x8x6xf32>
    %16 = vector.extract_strided_slice %14 {offsets = [0, 0, 1, 0], sizes = [2, 8, 8, 6], strides = [1, 1, 1, 1]} : vector<2x12x12x6xf32> to vector<2x8x8x6xf32>
    %17 = vector.extract_strided_slice %14 {offsets = [0, 0, 2, 0], sizes = [2, 8, 8, 6], strides = [1, 1, 1, 1]} : vector<2x12x12x6xf32> to vector<2x8x8x6xf32>
    %18 = vector.extract_strided_slice %14 {offsets = [0, 0, 3, 0], sizes = [2, 8, 8, 6], strides = [1, 1, 1, 1]} : vector<2x12x12x6xf32> to vector<2x8x8x6xf32>
    %19 = vector.extract_strided_slice %14 {offsets = [0, 0, 4, 0], sizes = [2, 8, 8, 6], strides = [1, 1, 1, 1]} : vector<2x12x12x6xf32> to vector<2x8x8x6xf32>
    %20 = vector.extract_strided_slice %14 {offsets = [0, 1, 0, 0], sizes = [2, 8, 8, 6], strides = [1, 1, 1, 1]} : vector<2x12x12x6xf32> to vector<2x8x8x6xf32>
    %21 = vector.extract_strided_slice %14 {offsets = [0, 1, 1, 0], sizes = [2, 8, 8, 6], strides = [1, 1, 1, 1]} : vector<2x12x12x6xf32> to vector<2x8x8x6xf32>
    %22 = vector.extract_strided_slice %14 {offsets = [0, 1, 2, 0], sizes = [2, 8, 8, 6], strides = [1, 1, 1, 1]} : vector<2x12x12x6xf32> to vector<2x8x8x6xf32>
    %23 = vector.extract_strided_slice %14 {offsets = [0, 1, 3, 0], sizes = [2, 8, 8, 6], strides = [1, 1, 1, 1]} : vector<2x12x12x6xf32> to vector<2x8x8x6xf32>
    %24 = vector.extract_strided_slice %14 {offsets = [0, 1, 4, 0], sizes = [2, 8, 8, 6], strides = [1, 1, 1, 1]} : vector<2x12x12x6xf32> to vector<2x8x8x6xf32>
    %25 = vector.extract_strided_slice %14 {offsets = [0, 2, 0, 0], sizes = [2, 8, 8, 6], strides = [1, 1, 1, 1]} : vector<2x12x12x6xf32> to vector<2x8x8x6xf32>
    %26 = vector.extract_strided_slice %14 {offsets = [0, 2, 1, 0], sizes = [2, 8, 8, 6], strides = [1, 1, 1, 1]} : vector<2x12x12x6xf32> to vector<2x8x8x6xf32>
    %27 = vector.extract_strided_slice %14 {offsets = [0, 2, 2, 0], sizes = [2, 8, 8, 6], strides = [1, 1, 1, 1]} : vector<2x12x12x6xf32> to vector<2x8x8x6xf32>
    %28 = vector.extract_strided_slice %14 {offsets = [0, 2, 3, 0], sizes = [2, 8, 8, 6], strides = [1, 1, 1, 1]} : vector<2x12x12x6xf32> to vector<2x8x8x6xf32>
    %29 = vector.extract_strided_slice %14 {offsets = [0, 2, 4, 0], sizes = [2, 8, 8, 6], strides = [1, 1, 1, 1]} : vector<2x12x12x6xf32> to vector<2x8x8x6xf32>
    %30 = vector.extract_strided_slice %14 {offsets = [0, 3, 0, 0], sizes = [2, 8, 8, 6], strides = [1, 1, 1, 1]} : vector<2x12x12x6xf32> to vector<2x8x8x6xf32>
    %31 = vector.extract_strided_slice %14 {offsets = [0, 3, 1, 0], sizes = [2, 8, 8, 6], strides = [1, 1, 1, 1]} : vector<2x12x12x6xf32> to vector<2x8x8x6xf32>
    %32 = vector.extract_strided_slice %14 {offsets = [0, 3, 2, 0], sizes = [2, 8, 8, 6], strides = [1, 1, 1, 1]} : vector<2x12x12x6xf32> to vector<2x8x8x6xf32>
    %33 = vector.extract_strided_slice %14 {offsets = [0, 3, 3, 0], sizes = [2, 8, 8, 6], strides = [1, 1, 1, 1]} : vector<2x12x12x6xf32> to vector<2x8x8x6xf32>
    %34 = vector.extract_strided_slice %14 {offsets = [0, 3, 4, 0], sizes = [2, 8, 8, 6], strides = [1, 1, 1, 1]} : vector<2x12x12x6xf32> to vector<2x8x8x6xf32>
    %35 = vector.extract_strided_slice %14 {offsets = [0, 4, 0, 0], sizes = [2, 8, 8, 6], strides = [1, 1, 1, 1]} : vector<2x12x12x6xf32> to vector<2x8x8x6xf32>
    %36 = vector.extract_strided_slice %14 {offsets = [0, 4, 1, 0], sizes = [2, 8, 8, 6], strides = [1, 1, 1, 1]} : vector<2x12x12x6xf32> to vector<2x8x8x6xf32>
    %37 = vector.extract_strided_slice %14 {offsets = [0, 4, 2, 0], sizes = [2, 8, 8, 6], strides = [1, 1, 1, 1]} : vector<2x12x12x6xf32> to vector<2x8x8x6xf32>
    %38 = vector.extract_strided_slice %14 {offsets = [0, 4, 3, 0], sizes = [2, 8, 8, 6], strides = [1, 1, 1, 1]} : vector<2x12x12x6xf32> to vector<2x8x8x6xf32>
    %39 = vector.extract_strided_slice %14 {offsets = [0, 4, 4, 0], sizes = [2, 8, 8, 6], strides = [1, 1, 1, 1]} : vector<2x12x12x6xf32> to vector<2x8x8x6xf32>
    %40 = tpu.concatenate %15, %16, %17, %18, %19, %20, %21, %22, %23, %24, %25, %26, %27, %28, %29, %30 in 3 : vector<2x8x8x6xf32>, vector<2x8x8x6xf32>, vector<2x8x8x6xf32>, vector<2x8x8x6xf32>, vector<2x8x8x6xf32>, vector<2x8x8x6xf32>, vector<2x8x8x6xf32>, vector<2x8x8x6xf32>, vector<2x8x8x6xf32>, vector<2x8x8x6xf32>, vector<2x8x8x6xf32>, vector<2x8x8x6xf32>, vector<2x8x8x6xf32>, vector<2x8x8x6xf32>, vector<2x8x8x6xf32>, vector<2x8x8x6xf32> -> vector<2x8x8x96xf32>
    %41 = tpu.concatenate %31, %32, %33, %34, %35, %36, %37, %38, %39 in 3 : vector<2x8x8x6xf32>, vector<2x8x8x6xf32>, vector<2x8x8x6xf32>, vector<2x8x8x6xf32>, vector<2x8x8x6xf32>, vector<2x8x8x6xf32>, vector<2x8x8x6xf32>, vector<2x8x8x6xf32>, vector<2x8x8x6xf32> -> vector<2x8x8x54xf32>
    %42 = tpu.concatenate %40, %41 in 3 : vector<2x8x8x96xf32>, vector<2x8x8x54xf32> -> vector<2x8x8x150xf32>
    %43 = vector.shape_cast %42 : vector<2x8x8x150xf32> to vector<128x150xf32>
    %44 = arith.truncf %43 : vector<128x150xf32> to vector<128x150xbf16>
    %c0_6 = arith.constant 0 : index
    %c0_7 = arith.constant 0 : index
    %45 = vector.load %arg4[%c0_6, %c0_7] : memref<150x16xbf16, #tpu.memory_space<vmem>>, vector<150x16xbf16>
    %cst_8 = arith.constant dense<0.000000e+00> : vector<128x16xf32>
    %46 = tpu.matmul %44, %45, %cst_8 {dimension_numbers = #tpu.dot_dimension_numbers<[1], [0], [0], [1], [0, 0, 1, 1], [], []>} : vector<128x150xbf16>, vector<150x16xbf16>, vector<128x16xf32> -> vector<128x16xf32>
    %c0_9 = arith.constant 0 : index
    %c0_10 = arith.constant 0 : index
    %47 = vector.load %arg5[%c0_9, %c0_10] : memref<1x16xf32, #tpu.memory_space<vmem>>, vector<1x16xf32>
    %48 = vector.broadcast %47 : vector<1x16xf32> to vector<128x16xf32>
    %49 = arith.addf %46, %48 : vector<128x16xf32>
    %cst_11 = arith.constant 0.000000e+00 : f32
    %50 = vector.broadcast %cst_11 : f32 to vector<128x16xf32>
    %51 = arith.maximumf %49, %50 : vector<128x16xf32>
    %52 = vector.shape_cast %51 : vector<128x16xf32> to vector<2x8x8x16xf32>
    %53 = vector.extract_strided_slice %52 {offsets = [0, 0, 0, 0], sizes = [2, 1, 8, 16], strides = [1, 1, 1, 1]} : vector<2x8x8x16xf32> to vector<2x1x8x16xf32>
    %54 = vector.shape_cast %53 : vector<2x1x8x16xf32> to vector<2x8x16xf32>
    %55 = vector.extract_strided_slice %52 {offsets = [0, 1, 0, 0], sizes = [2, 1, 8, 16], strides = [1, 1, 1, 1]} : vector<2x8x8x16xf32> to vector<2x1x8x16xf32>
    %56 = vector.shape_cast %55 : vector<2x1x8x16xf32> to vector<2x8x16xf32>
    %57 = arith.addf %54, %56 : vector<2x8x16xf32>
    %58 = vector.extract_strided_slice %57 {offsets = [0, 0, 0], sizes = [2, 1, 16], strides = [1, 1, 1]} : vector<2x8x16xf32> to vector<2x1x16xf32>
    %59 = vector.shape_cast %58 : vector<2x1x16xf32> to vector<2x16xf32>
    %60 = vector.extract_strided_slice %57 {offsets = [0, 1, 0], sizes = [2, 1, 16], strides = [1, 1, 1]} : vector<2x8x16xf32> to vector<2x1x16xf32>
    %61 = vector.shape_cast %60 : vector<2x1x16xf32> to vector<2x16xf32>
    %62 = arith.addf %59, %61 : vector<2x16xf32>
    %63 = vector.extract_strided_slice %57 {offsets = [0, 2, 0], sizes = [2, 1, 16], strides = [1, 1, 1]} : vector<2x8x16xf32> to vector<2x1x16xf32>
    %64 = vector.shape_cast %63 : vector<2x1x16xf32> to vector<2x16xf32>
    %65 = vector.extract_strided_slice %57 {offsets = [0, 3, 0], sizes = [2, 1, 16], strides = [1, 1, 1]} : vector<2x8x16xf32> to vector<2x1x16xf32>
    %66 = vector.shape_cast %65 : vector<2x1x16xf32> to vector<2x16xf32>
    %67 = arith.addf %64, %66 : vector<2x16xf32>
    %68 = vector.extract_strided_slice %57 {offsets = [0, 4, 0], sizes = [2, 1, 16], strides = [1, 1, 1]} : vector<2x8x16xf32> to vector<2x1x16xf32>
    %69 = vector.shape_cast %68 : vector<2x1x16xf32> to vector<2x16xf32>
    %70 = vector.extract_strided_slice %57 {offsets = [0, 5, 0], sizes = [2, 1, 16], strides = [1, 1, 1]} : vector<2x8x16xf32> to vector<2x1x16xf32>
    %71 = vector.shape_cast %70 : vector<2x1x16xf32> to vector<2x16xf32>
    %72 = arith.addf %69, %71 : vector<2x16xf32>
    %73 = vector.extract_strided_slice %57 {offsets = [0, 6, 0], sizes = [2, 1, 16], strides = [1, 1, 1]} : vector<2x8x16xf32> to vector<2x1x16xf32>
    %74 = vector.shape_cast %73 : vector<2x1x16xf32> to vector<2x16xf32>
    %75 = vector.extract_strided_slice %57 {offsets = [0, 7, 0], sizes = [2, 1, 16], strides = [1, 1, 1]} : vector<2x8x16xf32> to vector<2x1x16xf32>
    %76 = vector.shape_cast %75 : vector<2x1x16xf32> to vector<2x16xf32>
    %77 = arith.addf %74, %76 : vector<2x16xf32>
    %78 = vector.extract_strided_slice %52 {offsets = [0, 2, 0, 0], sizes = [2, 1, 8, 16], strides = [1, 1, 1, 1]} : vector<2x8x8x16xf32> to vector<2x1x8x16xf32>
    %79 = vector.shape_cast %78 : vector<2x1x8x16xf32> to vector<2x8x16xf32>
    %80 = vector.extract_strided_slice %52 {offsets = [0, 3, 0, 0], sizes = [2, 1, 8, 16], strides = [1, 1, 1, 1]} : vector<2x8x8x16xf32> to vector<2x1x8x16xf32>
    %81 = vector.shape_cast %80 : vector<2x1x8x16xf32> to vector<2x8x16xf32>
    %82 = arith.addf %79, %81 : vector<2x8x16xf32>
    %83 = vector.extract_strided_slice %82 {offsets = [0, 0, 0], sizes = [2, 1, 16], strides = [1, 1, 1]} : vector<2x8x16xf32> to vector<2x1x16xf32>
    %84 = vector.shape_cast %83 : vector<2x1x16xf32> to vector<2x16xf32>
    %85 = vector.extract_strided_slice %82 {offsets = [0, 1, 0], sizes = [2, 1, 16], strides = [1, 1, 1]} : vector<2x8x16xf32> to vector<2x1x16xf32>
    %86 = vector.shape_cast %85 : vector<2x1x16xf32> to vector<2x16xf32>
    %87 = arith.addf %84, %86 : vector<2x16xf32>
    %88 = vector.extract_strided_slice %82 {offsets = [0, 2, 0], sizes = [2, 1, 16], strides = [1, 1, 1]} : vector<2x8x16xf32> to vector<2x1x16xf32>
    %89 = vector.shape_cast %88 : vector<2x1x16xf32> to vector<2x16xf32>
    %90 = vector.extract_strided_slice %82 {offsets = [0, 3, 0], sizes = [2, 1, 16], strides = [1, 1, 1]} : vector<2x8x16xf32> to vector<2x1x16xf32>
    %91 = vector.shape_cast %90 : vector<2x1x16xf32> to vector<2x16xf32>
    %92 = arith.addf %89, %91 : vector<2x16xf32>
    %93 = vector.extract_strided_slice %82 {offsets = [0, 4, 0], sizes = [2, 1, 16], strides = [1, 1, 1]} : vector<2x8x16xf32> to vector<2x1x16xf32>
    %94 = vector.shape_cast %93 : vector<2x1x16xf32> to vector<2x16xf32>
    %95 = vector.extract_strided_slice %82 {offsets = [0, 5, 0], sizes = [2, 1, 16], strides = [1, 1, 1]} : vector<2x8x16xf32> to vector<2x1x16xf32>
    %96 = vector.shape_cast %95 : vector<2x1x16xf32> to vector<2x16xf32>
    %97 = arith.addf %94, %96 : vector<2x16xf32>
    %98 = vector.extract_strided_slice %82 {offsets = [0, 6, 0], sizes = [2, 1, 16], strides = [1, 1, 1]} : vector<2x8x16xf32> to vector<2x1x16xf32>
    %99 = vector.shape_cast %98 : vector<2x1x16xf32> to vector<2x16xf32>
    %100 = vector.extract_strided_slice %82 {offsets = [0, 7, 0], sizes = [2, 1, 16], strides = [1, 1, 1]} : vector<2x8x16xf32> to vector<2x1x16xf32>
    %101 = vector.shape_cast %100 : vector<2x1x16xf32> to vector<2x16xf32>
    %102 = arith.addf %99, %101 : vector<2x16xf32>
    %103 = vector.extract_strided_slice %52 {offsets = [0, 4, 0, 0], sizes = [2, 1, 8, 16], strides = [1, 1, 1, 1]} : vector<2x8x8x16xf32> to vector<2x1x8x16xf32>
    %104 = vector.shape_cast %103 : vector<2x1x8x16xf32> to vector<2x8x16xf32>
    %105 = vector.extract_strided_slice %52 {offsets = [0, 5, 0, 0], sizes = [2, 1, 8, 16], strides = [1, 1, 1, 1]} : vector<2x8x8x16xf32> to vector<2x1x8x16xf32>
    %106 = vector.shape_cast %105 : vector<2x1x8x16xf32> to vector<2x8x16xf32>
    %107 = arith.addf %104, %106 : vector<2x8x16xf32>
    %108 = vector.extract_strided_slice %107 {offsets = [0, 0, 0], sizes = [2, 1, 16], strides = [1, 1, 1]} : vector<2x8x16xf32> to vector<2x1x16xf32>
    %109 = vector.shape_cast %108 : vector<2x1x16xf32> to vector<2x16xf32>
    %110 = vector.extract_strided_slice %107 {offsets = [0, 1, 0], sizes = [2, 1, 16], strides = [1, 1, 1]} : vector<2x8x16xf32> to vector<2x1x16xf32>
    %111 = vector.shape_cast %110 : vector<2x1x16xf32> to vector<2x16xf32>
    %112 = arith.addf %109, %111 : vector<2x16xf32>
    %113 = vector.extract_strided_slice %107 {offsets = [0, 2, 0], sizes = [2, 1, 16], strides = [1, 1, 1]} : vector<2x8x16xf32> to vector<2x1x16xf32>
    %114 = vector.shape_cast %113 : vector<2x1x16xf32> to vector<2x16xf32>
    %115 = vector.extract_strided_slice %107 {offsets = [0, 3, 0], sizes = [2, 1, 16], strides = [1, 1, 1]} : vector<2x8x16xf32> to vector<2x1x16xf32>
    %116 = vector.shape_cast %115 : vector<2x1x16xf32> to vector<2x16xf32>
    %117 = arith.addf %114, %116 : vector<2x16xf32>
    %118 = vector.extract_strided_slice %107 {offsets = [0, 4, 0], sizes = [2, 1, 16], strides = [1, 1, 1]} : vector<2x8x16xf32> to vector<2x1x16xf32>
    %119 = vector.shape_cast %118 : vector<2x1x16xf32> to vector<2x16xf32>
    %120 = vector.extract_strided_slice %107 {offsets = [0, 5, 0], sizes = [2, 1, 16], strides = [1, 1, 1]} : vector<2x8x16xf32> to vector<2x1x16xf32>
    %121 = vector.shape_cast %120 : vector<2x1x16xf32> to vector<2x16xf32>
    %122 = arith.addf %119, %121 : vector<2x16xf32>
    %123 = vector.extract_strided_slice %107 {offsets = [0, 6, 0], sizes = [2, 1, 16], strides = [1, 1, 1]} : vector<2x8x16xf32> to vector<2x1x16xf32>
    %124 = vector.shape_cast %123 : vector<2x1x16xf32> to vector<2x16xf32>
    %125 = vector.extract_strided_slice %107 {offsets = [0, 7, 0], sizes = [2, 1, 16], strides = [1, 1, 1]} : vector<2x8x16xf32> to vector<2x1x16xf32>
    %126 = vector.shape_cast %125 : vector<2x1x16xf32> to vector<2x16xf32>
    %127 = arith.addf %124, %126 : vector<2x16xf32>
    %128 = vector.extract_strided_slice %52 {offsets = [0, 6, 0, 0], sizes = [2, 1, 8, 16], strides = [1, 1, 1, 1]} : vector<2x8x8x16xf32> to vector<2x1x8x16xf32>
    %129 = vector.shape_cast %128 : vector<2x1x8x16xf32> to vector<2x8x16xf32>
    %130 = vector.extract_strided_slice %52 {offsets = [0, 7, 0, 0], sizes = [2, 1, 8, 16], strides = [1, 1, 1, 1]} : vector<2x8x8x16xf32> to vector<2x1x8x16xf32>
    %131 = vector.shape_cast %130 : vector<2x1x8x16xf32> to vector<2x8x16xf32>
    %132 = arith.addf %129, %131 : vector<2x8x16xf32>
    %133 = vector.extract_strided_slice %132 {offsets = [0, 0, 0], sizes = [2, 1, 16], strides = [1, 1, 1]} : vector<2x8x16xf32> to vector<2x1x16xf32>
    %134 = vector.shape_cast %133 : vector<2x1x16xf32> to vector<2x16xf32>
    %135 = vector.extract_strided_slice %132 {offsets = [0, 1, 0], sizes = [2, 1, 16], strides = [1, 1, 1]} : vector<2x8x16xf32> to vector<2x1x16xf32>
    %136 = vector.shape_cast %135 : vector<2x1x16xf32> to vector<2x16xf32>
    %137 = arith.addf %134, %136 : vector<2x16xf32>
    %138 = vector.extract_strided_slice %132 {offsets = [0, 2, 0], sizes = [2, 1, 16], strides = [1, 1, 1]} : vector<2x8x16xf32> to vector<2x1x16xf32>
    %139 = vector.shape_cast %138 : vector<2x1x16xf32> to vector<2x16xf32>
    %140 = vector.extract_strided_slice %132 {offsets = [0, 3, 0], sizes = [2, 1, 16], strides = [1, 1, 1]} : vector<2x8x16xf32> to vector<2x1x16xf32>
    %141 = vector.shape_cast %140 : vector<2x1x16xf32> to vector<2x16xf32>
    %142 = arith.addf %139, %141 : vector<2x16xf32>
    %143 = vector.extract_strided_slice %132 {offsets = [0, 4, 0], sizes = [2, 1, 16], strides = [1, 1, 1]} : vector<2x8x16xf32> to vector<2x1x16xf32>
    %144 = vector.shape_cast %143 : vector<2x1x16xf32> to vector<2x16xf32>
    %145 = vector.extract_strided_slice %132 {offsets = [0, 5, 0], sizes = [2, 1, 16], strides = [1, 1, 1]} : vector<2x8x16xf32> to vector<2x1x16xf32>
    %146 = vector.shape_cast %145 : vector<2x1x16xf32> to vector<2x16xf32>
    %147 = arith.addf %144, %146 : vector<2x16xf32>
    %148 = vector.extract_strided_slice %132 {offsets = [0, 6, 0], sizes = [2, 1, 16], strides = [1, 1, 1]} : vector<2x8x16xf32> to vector<2x1x16xf32>
    %149 = vector.shape_cast %148 : vector<2x1x16xf32> to vector<2x16xf32>
    %150 = vector.extract_strided_slice %132 {offsets = [0, 7, 0], sizes = [2, 1, 16], strides = [1, 1, 1]} : vector<2x8x16xf32> to vector<2x1x16xf32>
    %151 = vector.shape_cast %150 : vector<2x1x16xf32> to vector<2x16xf32>
    %152 = arith.addf %149, %151 : vector<2x16xf32>
    %153 = tpu.concatenate %62, %67, %72, %77, %87, %92, %97, %102, %112, %117, %122, %127, %137, %142, %147, %152 in 1 : vector<2x16xf32>, vector<2x16xf32>, vector<2x16xf32>, vector<2x16xf32>, vector<2x16xf32>, vector<2x16xf32>, vector<2x16xf32>, vector<2x16xf32>, vector<2x16xf32>, vector<2x16xf32>, vector<2x16xf32>, vector<2x16xf32>, vector<2x16xf32>, vector<2x16xf32>, vector<2x16xf32>, vector<2x16xf32> -> vector<2x256xf32>
    %154 = arith.truncf %153 : vector<2x256xf32> to vector<2x256xbf16>
    %c0_12 = arith.constant 0 : index
    %c0_13 = arith.constant 0 : index
    %155 = vector.load %arg6[%c0_12, %c0_13] : memref<256x120xbf16, #tpu.memory_space<vmem>>, vector<256x120xbf16>
    %cst_14 = arith.constant dense<0.000000e+00> : vector<2x120xf32>
    %156 = tpu.matmul %154, %155, %cst_14 {dimension_numbers = #tpu.dot_dimension_numbers<[1], [0], [0], [1], [0, 0, 1, 1], [], []>} : vector<2x256xbf16>, vector<256x120xbf16>, vector<2x120xf32> -> vector<2x120xf32>
    %c0_15 = arith.constant 0 : index
    %c0_16 = arith.constant 0 : index
    %157 = vector.load %arg7[%c0_15, %c0_16] : memref<1x120xf32, #tpu.memory_space<vmem>>, vector<1x120xf32>
    %158 = vector.broadcast %157 : vector<1x120xf32> to vector<2x120xf32>
    %159 = arith.addf %156, %158 : vector<2x120xf32>
    %cst_17 = arith.constant 0.000000e+00 : f32
    %160 = vector.broadcast %cst_17 : f32 to vector<2x120xf32>
    %161 = arith.maximumf %159, %160 : vector<2x120xf32>
    %162 = arith.truncf %161 : vector<2x120xf32> to vector<2x120xbf16>
    %c0_18 = arith.constant 0 : index
    %c0_19 = arith.constant 0 : index
    %163 = vector.load %arg8[%c0_18, %c0_19] : memref<120x84xbf16, #tpu.memory_space<vmem>>, vector<120x84xbf16>
    %cst_20 = arith.constant dense<0.000000e+00> : vector<2x84xf32>
    %164 = tpu.matmul %162, %163, %cst_20 {dimension_numbers = #tpu.dot_dimension_numbers<[1], [0], [0], [1], [0, 0, 1, 1], [], []>} : vector<2x120xbf16>, vector<120x84xbf16>, vector<2x84xf32> -> vector<2x84xf32>
    %c0_21 = arith.constant 0 : index
    %c0_22 = arith.constant 0 : index
    %165 = vector.load %arg9[%c0_21, %c0_22] : memref<1x84xf32, #tpu.memory_space<vmem>>, vector<1x84xf32>
    %166 = vector.broadcast %165 : vector<1x84xf32> to vector<2x84xf32>
    %167 = arith.addf %164, %166 : vector<2x84xf32>
    %cst_23 = arith.constant 0.000000e+00 : f32
    %168 = vector.broadcast %cst_23 : f32 to vector<2x84xf32>
    %169 = arith.maximumf %167, %168 : vector<2x84xf32>
    %170 = arith.truncf %169 : vector<2x84xf32> to vector<2x84xbf16>
    %c0_24 = arith.constant 0 : index
    %c0_25 = arith.constant 0 : index
    %171 = vector.load %arg10[%c0_24, %c0_25] : memref<84x128xbf16, #tpu.memory_space<vmem>>, vector<84x128xbf16>
    %cst_26 = arith.constant dense<0.000000e+00> : vector<2x128xf32>
    %172 = tpu.matmul %170, %171, %cst_26 {dimension_numbers = #tpu.dot_dimension_numbers<[1], [0], [0], [1], [0, 0, 1, 1], [], []>} : vector<2x84xbf16>, vector<84x128xbf16>, vector<2x128xf32> -> vector<2x128xf32>
    %c0_27 = arith.constant 0 : index
    %c0_28 = arith.constant 0 : index
    %173 = vector.load %arg11[%c0_27, %c0_28] : memref<1x128xf32, #tpu.memory_space<vmem>>, vector<1x128xf32>
    %174 = vector.broadcast %173 : vector<1x128xf32> to vector<2x128xf32>
    %175 = arith.addf %172, %174 : vector<2x128xf32>
    %c0_29 = arith.constant 0 : index
    %c0_30 = arith.constant 0 : index
    %176 = vector.load %arg12[%c0_29, %c0_30] : memref<2x128xf32, #tpu.memory_space<vmem>>, vector<2x128xf32>
    tpu.vector_store %arg12[%c0_29, %c0_30], %175 {strides = array<i32>} : memref<2x128xf32, #tpu.memory_space<vmem>>, vector<2x128xf32>,
    return
  }
  func.func @transform_0(%arg0: i32) -> (i32, i32) {
    %c0_i32 = arith.constant 0 : i32
    %c0_i32_0 = arith.constant 0 : i32
    return %arg0, %c0_i32 : i32, i32
  }
  func.func @transform_1(%arg0: i32) -> (i32, i32) {
    %c0_i32 = arith.constant 0 : i32
    %c0_i32_0 = arith.constant 0 : i32
    %c0_i32_1 = arith.constant 0 : i32
    return %c0_i32, %c0_i32_0 : i32, i32
  }
  func.func @transform_2(%arg0: i32) -> (i32, i32) {
    %c0_i32 = arith.constant 0 : i32
    %c0_i32_0 = arith.constant 0 : i32
    %c0_i32_1 = arith.constant 0 : i32
    return %c0_i32, %c0_i32_0 : i32, i32
  }
  func.func @transform_3(%arg0: i32) -> (i32, i32) {
    %c0_i32 = arith.constant 0 : i32
    %c0_i32_0 = arith.constant 0 : i32
    %c0_i32_1 = arith.constant 0 : i32
    return %c0_i32, %c0_i32_0 : i32, i32
  }
  func.func @transform_4(%arg0: i32) -> (i32, i32) {
    %c0_i32 = arith.constant 0 : i32
    %c0_i32_0 = arith.constant 0 : i32
    %c0_i32_1 = arith.constant 0 : i32
    return %c0_i32, %c0_i32_0 : i32, i32
  }
  func.func @transform_5(%arg0: i32) -> (i32, i32) {
    %c0_i32 = arith.constant 0 : i32
    %c0_i32_0 = arith.constant 0 : i32
    %c0_i32_1 = arith.constant 0 : i32
    return %c0_i32, %c0_i32_0 : i32, i32
  }
  func.func @transform_6(%arg0: i32) -> (i32, i32) {
    %c0_i32 = arith.constant 0 : i32
    %c0_i32_0 = arith.constant 0 : i32
    %c0_i32_1 = arith.constant 0 : i32
    return %c0_i32, %c0_i32_0 : i32, i32
  }
  func.func @transform_7(%arg0: i32) -> (i32, i32) {
    %c0_i32 = arith.constant 0 : i32
    %c0_i32_0 = arith.constant 0 : i32
    %c0_i32_1 = arith.constant 0 : i32
    return %c0_i32, %c0_i32_0 : i32, i32
  }
  func.func @transform_8(%arg0: i32) -> (i32, i32) {
    %c0_i32 = arith.constant 0 : i32
    %c0_i32_0 = arith.constant 0 : i32
    %c0_i32_1 = arith.constant 0 : i32
    return %c0_i32, %c0_i32_0 : i32, i32
  }
  func.func @transform_9(%arg0: i32) -> (i32, i32) {
    %c0_i32 = arith.constant 0 : i32
    %c0_i32_0 = arith.constant 0 : i32
    %c0_i32_1 = arith.constant 0 : i32
    return %c0_i32, %c0_i32_0 : i32, i32
  }
  func.func @transform_10(%arg0: i32) -> (i32, i32) {
    %c0_i32 = arith.constant 0 : i32
    %c0_i32_0 = arith.constant 0 : i32
    %c0_i32_1 = arith.constant 0 : i32
    return %c0_i32, %c0_i32_0 : i32, i32
  }
  func.func @transform_11(%arg0: i32) -> (i32, i32) {
    %c0_i32 = arith.constant 0 : i32
    %c0_i32_0 = arith.constant 0 : i32
    return %arg0, %c0_i32 : i32, i32
  }
}

</mosaic_0001>

<llo_original>
// kernel: lenet5_forward.1
$region0: #{lenet5_forward.1}
  #allocation0 [shape = 'u32[]', space=smem, size = 0x4, offset = 0x4, fixed_abs, tag = 'smem constant byte address 0x4 - core index']
  #allocation1 [shape = 'u32[144,128]{1,0:T(1,128)}', space=vmem, size = 0x12000, scoped, tag = 'internal scratch']
  %s0 = inlined_call_operand.vmem [shape: bf16[1152,25], index: 0, kind: input, shape index: {}]
  %s1 = inlined_call_operand.vmem [shape: bf16[25,6], index: 1, kind: input, shape index: {}]
  %s2 = inlined_call_operand.vmem [shape: f32[1,6], index: 2, kind: input, shape index: {}]
  %s3 = inlined_call_operand.vmem [shape: bf16[150,16], index: 3, kind: input, shape index: {}]
  %s4 = inlined_call_operand.vmem [shape: f32[1,16], index: 4, kind: input, shape index: {}]
  %s5 = inlined_call_operand.vmem [shape: bf16[256,120], index: 5, kind: input, shape index: {}]
  %s6 = inlined_call_operand.vmem [shape: f32[1,120], index: 6, kind: input, shape index: {}]
  %s7 = inlined_call_operand.vmem [shape: bf16[120,84], index: 7, kind: input, shape index: {}]
  %s8 = inlined_call_operand.vmem [shape: f32[1,84], index: 8, kind: input, shape index: {}]
  %s9 = inlined_call_operand.vmem [shape: bf16[84,128], index: 9, kind: input, shape index: {}]
  %s10 = inlined_call_operand.vmem [shape: f32[1,128], index: 10, kind: input, shape index: {}]
  %s11 = inlined_call_operand.hbm [shape: f32[2,128], index: 11, kind: output, shape index: {}]
  %s12 = sld [smem:[#allocation0]]
  $region54: #{lenet5_forward.1} parent=0
    _
  %s14 = ssub.s32 1, %s12
  %s15 = scalar_select 0, %s14, %s12
  $region1: #{lenet5_forward.1} parent=0
    #allocation2 [shape = 'u8[1024]{0}', space=vmem, size = 0x400, scoped, tag = 'output window, operand 0, single buffered']
    #allocation3 [shape = 's32[1]{0}', space=sflag, size = 0x4, scoped, tag = 'scoped memory for lenet5_forward.1']
    %16 = vsyncpa [#allocation3], 0
    // Predicated region
    $region2: #{lenet5_forward.1} parent=1 // pred_check
      _
    $region3: #{lenet5_forward.1} parent=1 // pred_check_branch
      %18 = sbr.rel (0) target = $region5
    $region4: #{lenet5_forward.1} parent=1 // pred_region
      _
    $region5: #{lenet5_forward.1} parent=1 // pred_fallthru
      _
    // Predicated region
    $region6: #{lenet5_forward.1} parent=1 // pred_check
      _
    $region7: #{lenet5_forward.1} parent=1 // pred_check_branch
      %20 = sbr.rel (0) target = $region9
    $region8: #{lenet5_forward.1} parent=1 // pred_region
      _
    $region9: #{lenet5_forward.1} parent=1 // pred_fallthru
      _
    // Predicated region
    $region10: #{lenet5_forward.1} parent=1 // pred_check
      _
    $region11: #{lenet5_forward.1} parent=1 // pred_check_branch
      %22 = sbr.rel (0) target = $region13
    $region12: #{lenet5_forward.1} parent=1 // pred_region
      _
    $region13: #{lenet5_forward.1} parent=1 // pred_fallthru
      _
    // Predicated region
    $region14: #{lenet5_forward.1} parent=1 // pred_check
      _
    $region15: #{lenet5_forward.1} parent=1 // pred_check_branch
      %24 = sbr.rel (0) target = $region17
    $region16: #{lenet5_forward.1} parent=1 // pred_region
      _
    $region17: #{lenet5_forward.1} parent=1 // pred_fallthru
      _
    // Predicated region
    $region18: #{lenet5_forward.1} parent=1 // pred_check
      _
    $region19: #{lenet5_forward.1} parent=1 // pred_check_branch
      %26 = sbr.rel (0) target = $region21
    $region20: #{lenet5_forward.1} parent=1 // pred_region
      _
    $region21: #{lenet5_forward.1} parent=1 // pred_fallthru
      _
    // Predicated region
    $region22: #{lenet5_forward.1} parent=1 // pred_check
      _
    $region23: #{lenet5_forward.1} parent=1 // pred_check_branch
      %28 = sbr.rel (0) target = $region25
    $region24: #{lenet5_forward.1} parent=1 // pred_region
      _
    $region25: #{lenet5_forward.1} parent=1 // pred_fallthru
      _
    // Predicated region
    $region26: #{lenet5_forward.1} parent=1 // pred_check
      _
    $region27: #{lenet5_forward.1} parent=1 // pred_check_branch
      %30 = sbr.rel (0) target = $region29
    $region28: #{lenet5_forward.1} parent=1 // pred_region
      _
    $region29: #{lenet5_forward.1} parent=1 // pred_fallthru
      _
    // Predicated region
    $region30: #{lenet5_forward.1} parent=1 // pred_check
      _
    $region31: #{lenet5_forward.1} parent=1 // pred_check_branch
      %32 = sbr.rel (0) target = $region33
    $region32: #{lenet5_forward.1} parent=1 // pred_region
      _
    $region33: #{lenet5_forward.1} parent=1 // pred_fallthru
      _
    // Predicated region
    $region34: #{lenet5_forward.1} parent=1 // pred_check
      _
    $region35: #{lenet5_forward.1} parent=1 // pred_check_branch
      %34 = sbr.rel (0) target = $region37
    $region36: #{lenet5_forward.1} parent=1 // pred_region
      _
    $region37: #{lenet5_forward.1} parent=1 // pred_fallthru
      _
    // Predicated region
    $region38: #{lenet5_forward.1} parent=1 // pred_check
      _
    $region39: #{lenet5_forward.1} parent=1 // pred_check_branch
      %36 = sbr.rel (0) target = $region41
    $region40: #{lenet5_forward.1} parent=1 // pred_region
      _
    $region41: #{lenet5_forward.1} parent=1 // pred_fallthru
      _
    // Predicated region
    $region42: #{lenet5_forward.1} parent=1 // pred_check
      _
    $region43: #{lenet5_forward.1} parent=1 // pred_check_branch
      %38 = sbr.rel (0) target = $region45
    $region44: #{lenet5_forward.1} parent=1 // pred_region
      _
    $region45: #{lenet5_forward.1} parent=1 // pred_fallthru
      _
    %v40 = vld [vmem:[%s0] sm:$0xf]
    %v41 = vld [vmem:[%s0 + $0x4] sm:$0xf]
    %v42 = vld [vmem:[%s0 + $0x8] sm:$0xf]
    %v43 = vld [vmem:[%s0 + $0xc] sm:$0xf]
    %v44 = vld [vmem:[%s0 + $0x10] sm:$0xf]
    %v45 = vld [vmem:[%s0 + $0x14] sm:$0xf]
    %v46 = vld [vmem:[%s0 + $0x18] sm:$0xf]
    %v47 = vld [vmem:[%s0 + $0x1c] sm:$0xf]
    %v48 = vld [vmem:[%s0 + $0x20] sm:$0xf]
    %v49 = vld [vmem:[%s0 + $0x24] sm:$0xf]
    %v50 = vld [vmem:[%s0 + $0x28] sm:$0xf]
    %v51 = vld [vmem:[%s0 + $0x2c] sm:$0xf]
    %v52 = vld [vmem:[%s0 + $0x30] sm:$0xf]
    %v53 = vld [vmem:[%s0 + $0x34] sm:$0xf]
    %v54 = vld [vmem:[%s0 + $0x38] sm:$0xf]
    %v55 = vld [vmem:[%s0 + $0x3c] sm:$0xf]
    %v56 = vld [vmem:[%s0 + $0x40] sm:$0xf]
    %v57 = vld [vmem:[%s0 + $0x44] sm:$0xf]
    %v58 = vld [vmem:[%s0 + $0x48] sm:$0xf]
    %v59 = vld [vmem:[%s0 + $0x4c] sm:$0xf]
    %v60 = vld [vmem:[%s0 + $0x50] sm:$0xf]
    %v61 = vld [vmem:[%s0 + $0x54] sm:$0xf]
    %v62 = vld [vmem:[%s0 + $0x58] sm:$0xf]
    %v63 = vld [vmem:[%s0 + $0x5c] sm:$0xf]
    %v64 = vld [vmem:[%s0 + $0x60] sm:$0xf]
    %v65 = vld [vmem:[%s0 + $0x64] sm:$0xf]
    %v66 = vld [vmem:[%s0 + $0x68] sm:$0xf]
    %v67 = vld [vmem:[%s0 + $0x6c] sm:$0xf]
    %v68 = vld [vmem:[%s0 + $0x70] sm:$0xf]
    %v69 = vld [vmem:[%s0 + $0x74] sm:$0xf]
    %v70 = vld [vmem:[%s0 + $0x78] sm:$0xf]
    %v71 = vld [vmem:[%s0 + $0x7c] sm:$0xf]
    %v72 = vld [vmem:[%s0 + $0x80] sm:$0xf]
    %v73 = vld [vmem:[%s0 + $0x84] sm:$0xf]
    %v74 = vld [vmem:[%s0 + $0x88] sm:$0xf]
    %v75 = vld [vmem:[%s0 + $0x8c] sm:$0xf]
    %v76 = vld [vmem:[%s0 + $0x90] sm:$0xf]
    %v77 = vld [vmem:[%s0 + $0x94] sm:$0xf]
    %v78 = vld [vmem:[%s0 + $0x98] sm:$0xf]
    %v79 = vld [vmem:[%s0 + $0x9c] sm:$0xf]
    %v80 = vld [vmem:[%s0 + $0xa0] sm:$0xf]
    %v81 = vld [vmem:[%s0 + $0xa4] sm:$0xf]
    %v82 = vld [vmem:[%s0 + $0xa8] sm:$0xf]
    %v83 = vld [vmem:[%s0 + $0xac] sm:$0xf]
    %v84 = vld [vmem:[%s0 + $0xb0] sm:$0xf]
    %v85 = vld [vmem:[%s0 + $0xb4] sm:$0xf]
    %v86 = vld [vmem:[%s0 + $0xb8] sm:$0xf]
    %v87 = vld [vmem:[%s0 + $0xbc] sm:$0xf]
    %v88 = vld [vmem:[%s0 + $0xc0] sm:$0xf]
    %v89 = vld [vmem:[%s0 + $0xc4] sm:$0xf]
    %v90 = vld [vmem:[%s0 + $0xc8] sm:$0xf]
    %v91 = vld [vmem:[%s0 + $0xcc] sm:$0xf]
    %v92 = vld [vmem:[%s0 + $0xd0] sm:$0xf]
    %v93 = vld [vmem:[%s0 + $0xd4] sm:$0xf]
    %v94 = vld [vmem:[%s0 + $0xd8] sm:$0xf]
    %v95 = vld [vmem:[%s0 + $0xdc] sm:$0xf]
    %v96 = vld [vmem:[%s0 + $0xe0] sm:$0xf]
    %v97 = vld [vmem:[%s0 + $0xe4] sm:$0xf]
    %v98 = vld [vmem:[%s0 + $0xe8] sm:$0xf]
    %v99 = vld [vmem:[%s0 + $0xec] sm:$0xf]
    %v100 = vld [vmem:[%s0 + $0xf0] sm:$0xf]
    %v101 = vld [vmem:[%s0 + $0xf4] sm:$0xf]
    %v102 = vld [vmem:[%s0 + $0xf8] sm:$0xf]
    %v103 = vld [vmem:[%s0 + $0xfc] sm:$0xf]
    %v104 = vld [vmem:[%s0 + $0x100] sm:$0xf]
    %v105 = vld [vmem:[%s0 + $0x104] sm:$0xf]
    %v106 = vld [vmem:[%s0 + $0x108] sm:$0xf]
    %v107 = vld [vmem:[%s0 + $0x10c] sm:$0xf]
    %v108 = vld [vmem:[%s0 + $0x110] sm:$0xf]
    %v109 = vld [vmem:[%s0 + $0x114] sm:$0xf]
    %v110 = vld [vmem:[%s0 + $0x118] sm:$0xf]
    %v111 = vld [vmem:[%s0 + $0x11c] sm:$0xf]
    %v112 = vld [vmem:[%s0 + $0x120] sm:$0xf]
    %v113 = vld [vmem:[%s0 + $0x124] sm:$0xf]
    %v114 = vld [vmem:[%s0 + $0x128] sm:$0xf]
    %v115 = vld [vmem:[%s0 + $0x12c] sm:$0xf]
    %v116 = vld [vmem:[%s0 + $0x130] sm:$0xf]
    %v117 = vld [vmem:[%s0 + $0x134] sm:$0xf]
    %v118 = vld [vmem:[%s0 + $0x138] sm:$0xf]
    %v119 = vld [vmem:[%s0 + $0x13c] sm:$0xf]
    %v120 = vld [vmem:[%s0 + $0x140] sm:$0xf]
    %v121 = vld [vmem:[%s0 + $0x144] sm:$0xf]
    %v122 = vld [vmem:[%s0 + $0x148] sm:$0xf]
    %v123 = vld [vmem:[%s0 + $0x14c] sm:$0xf]
    %v124 = vld [vmem:[%s0 + $0x150] sm:$0xf]
    %v125 = vld [vmem:[%s0 + $0x154] sm:$0xf]
    %v126 = vld [vmem:[%s0 + $0x158] sm:$0xf]
    %v127 = vld [vmem:[%s0 + $0x15c] sm:$0xf]
    %v128 = vld [vmem:[%s0 + $0x160] sm:$0xf]
    %v129 = vld [vmem:[%s0 + $0x164] sm:$0xf]
    %v130 = vld [vmem:[%s0 + $0x168] sm:$0xf]
    %v131 = vld [vmem:[%s0 + $0x16c] sm:$0xf]
    %v132 = vld [vmem:[%s0 + $0x170] sm:$0xf]
    %v133 = vld [vmem:[%s0 + $0x174] sm:$0xf]
    %v134 = vld [vmem:[%s0 + $0x178] sm:$0xf]
    %v135 = vld [vmem:[%s0 + $0x17c] sm:$0xf]
    %v136 = vld [vmem:[%s0 + $0x180] sm:$0xf]
    %v137 = vld [vmem:[%s0 + $0x184] sm:$0xf]
    %v138 = vld [vmem:[%s0 + $0x188] sm:$0xf]
    %v139 = vld [vmem:[%s0 + $0x18c] sm:$0xf]
    %v140 = vld [vmem:[%s0 + $0x190] sm:$0xf]
    %v141 = vld [vmem:[%s0 + $0x194] sm:$0xf]
    %v142 = vld [vmem:[%s0 + $0x198] sm:$0xf]
    %v143 = vld [vmem:[%s0 + $0x19c] sm:$0xf]
    %v144 = vld [vmem:[%s0 + $0x1a0] sm:$0xf]
    %v145 = vld [vmem:[%s0 + $0x1a4] sm:$0xf]
    %v146 = vld [vmem:[%s0 + $0x1a8] sm:$0xf]
    %v147 = vld [vmem:[%s0 + $0x1ac] sm:$0xf]
    %v148 = vld [vmem:[%s0 + $0x1b0] sm:$0xf]
    %v149 = vld [vmem:[%s0 + $0x1b4] sm:$0xf]
    %v150 = vld [vmem:[%s0 + $0x1b8] sm:$0xf]
    %v151 = vld [vmem:[%s0 + $0x1bc] sm:$0xf]
    %v152 = vld [vmem:[%s0 + $0x1c0] sm:$0xf]
    %v153 = vld [vmem:[%s0 + $0x1c4] sm:$0xf]
    %v154 = vld [vmem:[%s0 + $0x1c8] sm:$0xf]
    %v155 = vld [vmem:[%s0 + $0x1cc] sm:$0xf]
    %v156 = vld [vmem:[%s0 + $0x1d0] sm:$0xf]
    %v157 = vld [vmem:[%s0 + $0x1d4] sm:$0xf]
    %v158 = vld [vmem:[%s0 + $0x1d8] sm:$0xf]
    %v159 = vld [vmem:[%s0 + $0x1dc] sm:$0xf]
    %v160 = vld [vmem:[%s0 + $0x1e0] sm:$0xf]
    %v161 = vld [vmem:[%s0 + $0x1e4] sm:$0xf]
    %v162 = vld [vmem:[%s0 + $0x1e8] sm:$0xf]
    %v163 = vld [vmem:[%s0 + $0x1ec] sm:$0xf]
    %v164 = vld [vmem:[%s0 + $0x1f0] sm:$0xf]
    %v165 = vld [vmem:[%s0 + $0x1f4] sm:$0xf]
    %v166 = vld [vmem:[%s0 + $0x1f8] sm:$0xf]
    %v167 = vld [vmem:[%s0 + $0x1fc] sm:$0xf]
    %v168 = vld [vmem:[%s0 + $0x200] sm:$0xf]
    %v169 = vld [vmem:[%s0 + $0x204] sm:$0xf]
    %v170 = vld [vmem:[%s0 + $0x208] sm:$0xf]
    %v171 = vld [vmem:[%s0 + $0x20c] sm:$0xf]
    %v172 = vld [vmem:[%s0 + $0x210] sm:$0xf]
    %v173 = vld [vmem:[%s0 + $0x214] sm:$0xf]
    %v174 = vld [vmem:[%s0 + $0x218] sm:$0xf]
    %v175 = vld [vmem:[%s0 + $0x21c] sm:$0xf]
    %v176 = vld [vmem:[%s0 + $0x220] sm:$0xf]
    %v177 = vld [vmem:[%s0 + $0x224] sm:$0xf]
    %v178 = vld [vmem:[%s0 + $0x228] sm:$0xf]
    %v179 = vld [vmem:[%s0 + $0x22c] sm:$0xf]
    %v180 = vld [vmem:[%s0 + $0x230] sm:$0xf]
    %v181 = vld [vmem:[%s0 + $0x234] sm:$0xf]
    %v182 = vld [vmem:[%s0 + $0x238] sm:$0xf]
    %v183 = vld [vmem:[%s0 + $0x23c] sm:$0xf]
    %v184 = vld [vmem:[%s1] sm:$0xf]
    %v185 = vld [vmem:[%s1 + $0x4] sm:$0xf]
    %v186 = vld [vmem:[%s1 + $0x8] sm:$0xf]
    %v187 = vld [vmem:[%s1 + $0xc] sm:$0x1]
    %v188 = vld [vmem:[%s2] sm:$0x1]
    %v190 = vlaneseq
    %v191 = vshrl.u32 %v190, 7
    %v192 = vsub.s32 0, %v191
    %v193 = vrot.slane %v188, %v192
    %v339 = vunpack.c.l.b16 %v40
    %v340 = vunpack.c.l.b16 %v41
    %v341 = vunpack.c.l.b16 %v42
    %v342 = vunpack.c.l.b16 %v43
    %v343 = vunpack.c.l.b16 %v44
    %v344 = vunpack.c.l.b16 %v45
    %v345 = vunpack.c.l.b16 %v46
    %v346 = vunpack.c.l.b16 %v47
    %v347 = vunpack.c.l.b16 %v48
    %v348 = vunpack.c.l.b16 %v49
    %v349 = vunpack.c.l.b16 %v50
    %v350 = vunpack.c.l.b16 %v51
    %v351 = vunpack.c.l.b16 %v52
    %v352 = vunpack.c.l.b16 %v53
    %v353 = vunpack.c.l.b16 %v54
    %v354 = vunpack.c.l.b16 %v55
    %v355 = vunpack.c.l.b16 %v56
    %v356 = vunpack.c.l.b16 %v57
    %v357 = vunpack.c.l.b16 %v58
    %v358 = vunpack.c.l.b16 %v59
    %v359 = vunpack.c.l.b16 %v60
    %v360 = vunpack.c.l.b16 %v61
    %v361 = vunpack.c.l.b16 %v62
    %v362 = vunpack.c.l.b16 %v63
    %v363 = vunpack.c.l.b16 %v64
    %v364 = vunpack.c.l.b16 %v65
    %v365 = vunpack.c.l.b16 %v66
    %v366 = vunpack.c.l.b16 %v67
    %v367 = vunpack.c.l.b16 %v68
    %v368 = vunpack.c.l.b16 %v69
    %v369 = vunpack.c.l.b16 %v70
    %v370 = vunpack.c.l.b16 %v71
    %v371 = vunpack.c.l.b16 %v72
    %v372 = vunpack.c.l.b16 %v73
    %v373 = vunpack.c.l.b16 %v74
    %v374 = vunpack.c.l.b16 %v75
    %v375 = vunpack.c.l.b16 %v76
    %v376 = vunpack.c.l.b16 %v77
    %v377 = vunpack.c.l.b16 %v78
    %v378 = vunpack.c.l.b16 %v79
    %v379 = vunpack.c.l.b16 %v80
    %v380 = vunpack.c.l.b16 %v81
    %v381 = vunpack.c.l.b16 %v82
    %v382 = vunpack.c.l.b16 %v83
    %v383 = vunpack.c.l.b16 %v84
    %v384 = vunpack.c.l.b16 %v85
    %v385 = vunpack.c.l.b16 %v86
    %v386 = vunpack.c.l.b16 %v87
    %v387 = vunpack.c.l.b16 %v88
    %v388 = vunpack.c.l.b16 %v89
    %v389 = vunpack.c.l.b16 %v90
    %v390 = vunpack.c.l.b16 %v91
    %v391 = vunpack.c.l.b16 %v92
    %v392 = vunpack.c.l.b16 %v93
    %v393 = vunpack.c.l.b16 %v94
    %v394 = vunpack.c.l.b16 %v95
    %v395 = vunpack.c.l.b16 %v96
    %v396 = vunpack.c.l.b16 %v97
    %v397 = vunpack.c.l.b16 %v98
    %v398 = vunpack.c.l.b16 %v99
    %v399 = vunpack.c.l.b16 %v100
    %v400 = vunpack.c.l.b16 %v101
    %v401 = vunpack.c.l.b16 %v102
    %v402 = vunpack.c.l.b16 %v103
    %v403 = vunpack.c.l.b16 %v104
    %v404 = vunpack.c.l.b16 %v105
    %v405 = vunpack.c.l.b16 %v106
    %v406 = vunpack.c.l.b16 %v107
    %v407 = vunpack.c.l.b16 %v108
    %v408 = vunpack.c.l.b16 %v109
    %v409 = vunpack.c.l.b16 %v110
    %v410 = vunpack.c.l.b16 %v111
    %v411 = vunpack.c.l.b16 %v112
    %v412 = vunpack.c.l.b16 %v113
    %v413 = vunpack.c.l.b16 %v114
    %v414 = vunpack.c.l.b16 %v115
    %v415 = vunpack.c.l.b16 %v116
    %v416 = vunpack.c.l.b16 %v117
    %v417 = vunpack.c.l.b16 %v118
    %v418 = vunpack.c.l.b16 %v119
    %v419 = vunpack.c.l.b16 %v120
    %v420 = vunpack.c.l.b16 %v121
    %v421 = vunpack.c.l.b16 %v122
    %v422 = vunpack.c.l.b16 %v123
    %v423 = vunpack.c.l.b16 %v124
    %v424 = vunpack.c.l.b16 %v125
    %v425 = vunpack.c.l.b16 %v126
    %v426 = vunpack.c.l.b16 %v127
    %v427 = vunpack.c.l.b16 %v128
    %v428 = vunpack.c.l.b16 %v129
    %v429 = vunpack.c.l.b16 %v130
    %v430 = vunpack.c.l.b16 %v131
    %v431 = vunpack.c.l.b16 %v132
    %v432 = vunpack.c.l.b16 %v133
    %v433 = vunpack.c.l.b16 %v134
    %v434 = vunpack.c.l.b16 %v135
    %v435 = vunpack.c.l.b16 %v136
    %v436 = vunpack.c.l.b16 %v137
    %v437 = vunpack.c.l.b16 %v138
    %v438 = vunpack.c.l.b16 %v139
    %v439 = vunpack.c.l.b16 %v140
    %v440 = vunpack.c.l.b16 %v141
    %v441 = vunpack.c.l.b16 %v142
    %v442 = vunpack.c.l.b16 %v143
    %v443 = vunpack.c.l.b16 %v144
    %v444 = vunpack.c.l.b16 %v145
    %v445 = vunpack.c.l.b16 %v146
    %v446 = vunpack.c.l.b16 %v147
    %v447 = vunpack.c.l.b16 %v148
    %v448 = vunpack.c.l.b16 %v149
    %v449 = vunpack.c.l.b16 %v150
    %v450 = vunpack.c.l.b16 %v151
    %v451 = vunpack.c.l.b16 %v152
    %v452 = vunpack.c.l.b16 %v153
    %v453 = vunpack.c.l.b16 %v154
    %v454 = vunpack.c.l.b16 %v155
    %v455 = vunpack.c.l.b16 %v156
    %v456 = vunpack.c.l.b16 %v157
    %v457 = vunpack.c.l.b16 %v158
    %v458 = vunpack.c.l.b16 %v159
    %v459 = vunpack.c.l.b16 %v160
    %v460 = vunpack.c.l.b16 %v161
    %v461 = vunpack.c.l.b16 %v162
    %v462 = vunpack.c.l.b16 %v163
    %v463 = vunpack.c.l.b16 %v164
    %v464 = vunpack.c.l.b16 %v165
    %v465 = vunpack.c.l.b16 %v166
    %v466 = vunpack.c.l.b16 %v167
    %v467 = vunpack.c.l.b16 %v168
    %v468 = vunpack.c.l.b16 %v169
    %v469 = vunpack.c.l.b16 %v170
    %v470 = vunpack.c.l.b16 %v171
    %v471 = vunpack.c.l.b16 %v172
    %v472 = vunpack.c.l.b16 %v173
    %v473 = vunpack.c.l.b16 %v174
    %v474 = vunpack.c.l.b16 %v175
    %v475 = vunpack.c.l.b16 %v176
    %v476 = vunpack.c.l.b16 %v177
    %v477 = vunpack.c.l.b16 %v178
    %v478 = vunpack.c.l.b16 %v179
    %v479 = vunpack.c.l.b16 %v180
    %v480 = vunpack.c.l.b16 %v181
    %v481 = vunpack.c.l.b16 %v182
    %v482 = vunpack.c.l.b16 %v183
    %v483 = vpack.c.b16 %v340, %v339
    %v484 = vpack.c.b16 %v342, %v341
    %v485 = vpack.c.b16 %v344, %v343
    %v486 = vpack.c.b16 %v346, %v345
    %v487 = vpack.c.b16 %v348, %v347
    %v488 = vpack.c.b16 %v350, %v349
    %v489 = vpack.c.b16 %v352, %v351
    %v490 = vpack.c.b16 %v354, %v353
    %v491 = vpack.c.b16 %v356, %v355
    %v492 = vpack.c.b16 %v358, %v357
    %v493 = vpack.c.b16 %v360, %v359
    %v494 = vpack.c.b16 %v362, %v361
    %v495 = vpack.c.b16 %v364, %v363
    %v496 = vpack.c.b16 %v366, %v365
    %v497 = vpack.c.b16 %v368, %v367
    %v498 = vpack.c.b16 %v370, %v369
    %v499 = vpack.c.b16 %v372, %v371
    %v500 = vpack.c.b16 %v374, %v373
    %v501 = vpack.c.b16 %v376, %v375
    %v502 = vpack.c.b16 %v378, %v377
    %v503 = vpack.c.b16 %v380, %v379
    %v504 = vpack.c.b16 %v382, %v381
    %v505 = vpack.c.b16 %v384, %v383
    %v506 = vpack.c.b16 %v386, %v385
    %v507 = vpack.c.b16 %v388, %v387
    %v508 = vpack.c.b16 %v390, %v389
    %v509 = vpack.c.b16 %v392, %v391
    %v510 = vpack.c.b16 %v394, %v393
    %v511 = vpack.c.b16 %v396, %v395
    %v512 = vpack.c.b16 %v398, %v397
    %v513 = vpack.c.b16 %v400, %v399
    %v514 = vpack.c.b16 %v402, %v401
    %v515 = vpack.c.b16 %v404, %v403
    %v516 = vpack.c.b16 %v406, %v405
    %v517 = vpack.c.b16 %v408, %v407
    %v518 = vpack.c.b16 %v410, %v409
    %v519 = vpack.c.b16 %v412, %v411
    %v520 = vpack.c.b16 %v414, %v413
    %v521 = vpack.c.b16 %v416, %v415
    %v522 = vpack.c.b16 %v418, %v417
    %v523 = vpack.c.b16 %v420, %v419
    %v524 = vpack.c.b16 %v422, %v421
    %v525 = vpack.c.b16 %v424, %v423
    %v526 = vpack.c.b16 %v426, %v425
    %v527 = vpack.c.b16 %v428, %v427
    %v528 = vpack.c.b16 %v430, %v429
    %v529 = vpack.c.b16 %v432, %v431
    %v530 = vpack.c.b16 %v434, %v433
    %v531 = vpack.c.b16 %v436, %v435
    %v532 = vpack.c.b16 %v438, %v437
    %v533 = vpack.c.b16 %v440, %v439
    %v534 = vpack.c.b16 %v442, %v441
    %v535 = vpack.c.b16 %v444, %v443
    %v536 = vpack.c.b16 %v446, %v445
    %v537 = vpack.c.b16 %v448, %v447
    %v538 = vpack.c.b16 %v450, %v449
    %v539 = vpack.c.b16 %v452, %v451
    %v540 = vpack.c.b16 %v454, %v453
    %v541 = vpack.c.b16 %v456, %v455
    %v542 = vpack.c.b16 %v458, %v457
    %v543 = vpack.c.b16 %v460, %v459
    %v544 = vpack.c.b16 %v462, %v461
    %v545 = vpack.c.b16 %v464, %v463
    %v546 = vpack.c.b16 %v466, %v465
    %v547 = vpack.c.b16 %v468, %v467
    %v548 = vpack.c.b16 %v470, %v469
    %v549 = vpack.c.b16 %v472, %v471
    %v550 = vpack.c.b16 %v474, %v473
    %v551 = vpack.c.b16 %v476, %v475
    %v552 = vpack.c.b16 %v478, %v477
    %v553 = vpack.c.b16 %v480, %v479
    %v554 = vpack.c.b16 %v482, %v481
    %v559 = vunpack.c.l.b16 %v184
    %v560 = vunpack.c.l.b16 %v185
    %v561 = vunpack.c.l.b16 %v186
    %v562 = vunpack.c.l.b16 %v187
    %v563 = vpack.c.b16 %v560, %v559
    %v564 = vpack.c.b16 %v562, %v561
    %vm566 = vcmask 203776
    %v568 = vsel %vm566, %v483, 0
    %v571 = vsel %vm566, %v484, 0
    %v574 = vsel %vm566, %v485, 0
    %v577 = vsel %vm566, %v486, 0
    %v580 = vsel %vm566, %v487, 0
    %v583 = vsel %vm566, %v488, 0
    %v586 = vsel %vm566, %v489, 0
    %v589 = vsel %vm566, %v490, 0
    %v592 = vsel %vm566, %v491, 0
    %v595 = vsel %vm566, %v492, 0
    %v598 = vsel %vm566, %v493, 0
    %v601 = vsel %vm566, %v494, 0
    %v604 = vsel %vm566, %v495, 0
    %v607 = vsel %vm566, %v496, 0
    %v610 = vsel %vm566, %v497, 0
    %v613 = vsel %vm566, %v498, 0
    %v616 = vsel %vm566, %v499, 0
    %v619 = vsel %vm566, %v500, 0
    %v622 = vsel %vm566, %v501, 0
    %v625 = vsel %vm566, %v502, 0
    %v628 = vsel %vm566, %v503, 0
    %v631 = vsel %vm566, %v504, 0
    %v634 = vsel %vm566, %v505, 0
    %v637 = vsel %vm566, %v506, 0
    %v640 = vsel %vm566, %v507, 0
    %v643 = vsel %vm566, %v508, 0
    %v646 = vsel %vm566, %v509, 0
    %v649 = vsel %vm566, %v510, 0
    %v652 = vsel %vm566, %v511, 0
    %v655 = vsel %vm566, %v512, 0
    %v658 = vsel %vm566, %v513, 0
    %v661 = vsel %vm566, %v514, 0
    %v664 = vsel %vm566, %v515, 0
    %v667 = vsel %vm566, %v516, 0
    %v670 = vsel %vm566, %v517, 0
    %v673 = vsel %vm566, %v518, 0
    %v676 = vsel %vm566, %v519, 0
    %v679 = vsel %vm566, %v520, 0
    %v682 = vsel %vm566, %v521, 0
    %v685 = vsel %vm566, %v522, 0
    %v688 = vsel %vm566, %v523, 0
    %v691 = vsel %vm566, %v524, 0
    %v694 = vsel %vm566, %v525, 0
    %v697 = vsel %vm566, %v526, 0
    %v700 = vsel %vm566, %v527, 0
    %v703 = vsel %vm566, %v528, 0
    %v706 = vsel %vm566, %v529, 0
    %v709 = vsel %vm566, %v530, 0
    %v712 = vsel %vm566, %v531, 0
    %v715 = vsel %vm566, %v532, 0
    %v718 = vsel %vm566, %v533, 0
    %v721 = vsel %vm566, %v534, 0
    %v724 = vsel %vm566, %v535, 0
    %v727 = vsel %vm566, %v536, 0
    %v730 = vsel %vm566, %v537, 0
    %v733 = vsel %vm566, %v538, 0
    %v736 = vsel %vm566, %v539, 0
    %v739 = vsel %vm566, %v540, 0
    %v742 = vsel %vm566, %v541, 0
    %v745 = vsel %vm566, %v542, 0
    %v748 = vsel %vm566, %v543, 0
    %v751 = vsel %vm566, %v544, 0
    %v754 = vsel %vm566, %v545, 0
    %v757 = vsel %vm566, %v546, 0
    %v760 = vsel %vm566, %v547, 0
    %v763 = vsel %vm566, %v548, 0
    %v766 = vsel %vm566, %v549, 0
    %v769 = vsel %vm566, %v550, 0
    %v772 = vsel %vm566, %v551, 0
    %v775 = vsel %vm566, %v552, 0
    %v778 = vsel %vm566, %v553, 0
    %v781 = vsel %vm566, %v554, 0
    %vm783 = vcmask 1043456
    %vm784 = vcmask 1044480
    %v785 = vsel %vm783, 4294967295, 65535
    %v786 = vsel %vm784, %v785, 0
    %v788 = vand.u32 %v564, %v786
    %790 = vmatprep.subr.bf16.mxu0 0
    %791 = vmatpush1.bf16.msra.mxu0 %v563
    %792 = vmatprep.subr.bf16.mxu0 0
    %793 = vmatpush1.bf16.msra.mxu0 %v788
    %794 = vmatprep.subr.bf16.mxu0 0
    %795 = vmatpush1.bf16.msra.mxu0 0
    %796 = vmatprep.subr.bf16.mxu0 0
    %797 = vmatpush1.bf16.msra.mxu0 0
    %798 = vmatprep.subr.bf16.mxu0 0
    %799 = vmatpush1.bf16.msra.mxu0 0
    %800 = vmatprep.subr.bf16.mxu0 0
    %801 = vmatpush1.bf16.msra.mxu0 0
    %802 = vmatprep.subr.bf16.mxu0 0
    %803 = vmatpush1.bf16.msra.mxu0 0
    %804 = vmatprep.subr.bf16.mxu0 0
    %805 = vmatpush1.bf16.msra.mxu0 0
    %806 = vmatprep.subr.bf16.mxu0 0
    %807 = vmatpush1.bf16.msra.mxu0 0
    %808 = vmatprep.subr.bf16.mxu0 0
    %809 = vmatpush1.bf16.msra.mxu0 0
    %810 = vmatprep.subr.bf16.mxu0 0
    %811 = vmatpush1.bf16.msra.mxu0 0
    %812 = vmatprep.subr.bf16.mxu0 0
    %813 = vmatpush1.bf16.msra.mxu0 0
    %814 = vmatprep.subr.bf16.mxu0 0
    %815 = vmatpush1.bf16.msra.mxu0 0
    %816 = vmatprep.subr.bf16.mxu0 0
    %817 = vmatpush1.bf16.msra.mxu0 0
    %818 = vmatprep.subr.bf16.mxu0 0
    %819 = vmatpush1.bf16.msra.mxu0 0
    %820 = vmatprep.subr.bf16.mxu0 0
    %821 = vmatpush1.bf16.msra.mxu0 0
    %822 = vmatprep.mubr.bf16.mxu0 0
    %823 = vmatmul.mubr.bf16.gmra.mrb[0].mxu0 %v568
    %v824 = vpop.f32.mrb[0].mxu0
    %v825 = vadd.f32 %v193, %v824
    %v826 = vpop.f32.mrb[0].mxu0
    %v827 = vpop.f32.mrb[0].mxu0
    %v828 = vadd.f32 %v193, %v827
    %v829 = vpop.f32.mrb[0].mxu0
    %830 = vmatprep.mubr.bf16.mxu0 0
    %831 = vmatmul.mubr.bf16.gmra.mrb[0].mxu0 %v571
    %v832 = vpop.f32.mrb[0].mxu0
    %v833 = vadd.f32 %v193, %v832
    %v834 = vpop.f32.mrb[0].mxu0
    %v835 = vpop.f32.mrb[0].mxu0
    %v836 = vadd.f32 %v193, %v835
    %v837 = vpop.f32.mrb[0].mxu0
    %838 = vmatprep.mubr.bf16.mxu0 0
    %839 = vmatmul.mubr.bf16.gmra.mrb[0].mxu0 %v574
    %v840 = vpop.f32.mrb[0].mxu0
    %v841 = vadd.f32 %v193, %v840
    %v842 = vpop.f32.mrb[0].mxu0
    %v843 = vpop.f32.mrb[0].mxu0
    %v844 = vadd.f32 %v193, %v843
    %v845 = vpop.f32.mrb[0].mxu0
    %846 = vmatprep.mubr.bf16.mxu0 0
    %847 = vmatmul.mubr.bf16.gmra.mrb[0].mxu0 %v577
    %v848 = vpop.f32.mrb[0].mxu0
    %v849 = vadd.f32 %v193, %v848
    %v850 = vpop.f32.mrb[0].mxu0
    %v851 = vpop.f32.mrb[0].mxu0
    %v852 = vadd.f32 %v193, %v851
    %v853 = vpop.f32.mrb[0].mxu0
    %854 = vmatprep.mubr.bf16.mxu0 0
    %855 = vmatmul.mubr.bf16.gmra.mrb[0].mxu0 %v580
    %v856 = vpop.f32.mrb[0].mxu0
    %v857 = vadd.f32 %v193, %v856
    %v858 = vpop.f32.mrb[0].mxu0
    %v859 = vpop.f32.mrb[0].mxu0
    %v860 = vadd.f32 %v193, %v859
    %v861 = vpop.f32.mrb[0].mxu0
    %862 = vmatprep.mubr.bf16.mxu0 0
    %863 = vmatmul.mubr.bf16.gmra.mrb[0].mxu0 %v583
    %v864 = vpop.f32.mrb[0].mxu0
    %v865 = vadd.f32 %v193, %v864
    %v866 = vpop.f32.mrb[0].mxu0
    %v867 = vpop.f32.mrb[0].mxu0
    %v868 = vadd.f32 %v193, %v867
    %v869 = vpop.f32.mrb[0].mxu0
    %870 = vmatprep.mubr.bf16.mxu0 0
    %871 = vmatmul.mubr.bf16.gmra.mrb[0].mxu0 %v586
    %v872 = vpop.f32.mrb[0].mxu0
    %v873 = vadd.f32 %v193, %v872
    %v874 = vpop.f32.mrb[0].mxu0
    %v875 = vpop.f32.mrb[0].mxu0
    %v876 = vadd.f32 %v193, %v875
    %v877 = vpop.f32.mrb[0].mxu0
    %878 = vmatprep.mubr.bf16.mxu0 0
    %879 = vmatmul.mubr.bf16.gmra.mrb[0].mxu0 %v589
    %v880 = vpop.f32.mrb[0].mxu0
    %v881 = vadd.f32 %v193, %v880
    %v882 = vpop.f32.mrb[0].mxu0
    %v883 = vpop.f32.mrb[0].mxu0
    %v884 = vadd.f32 %v193, %v883
    %v885 = vpop.f32.mrb[0].mxu0
    %886 = vmatprep.mubr.bf16.mxu0 0
    %887 = vmatmul.mubr.bf16.gmra.mrb[0].mxu0 %v592
    %v888 = vpop.f32.mrb[0].mxu0
    %v889 = vadd.f32 %v193, %v888
    %v890 = vpop.f32.mrb[0].mxu0
    %v891 = vpop.f32.mrb[0].mxu0
    %v892 = vadd.f32 %v193, %v891
    %v893 = vpop.f32.mrb[0].mxu0
    %894 = vmatprep.mubr.bf16.mxu0 0
    %895 = vmatmul.mubr.bf16.gmra.mrb[0].mxu0 %v595
    %v896 = vpop.f32.mrb[0].mxu0
    %v897 = vadd.f32 %v193, %v896
    %v898 = vpop.f32.mrb[0].mxu0
    %v899 = vpop.f32.mrb[0].mxu0
    %v900 = vadd.f32 %v193, %v899
    %v901 = vpop.f32.mrb[0].mxu0
    %902 = vmatprep.mubr.bf16.mxu0 0
    %903 = vmatmul.mubr.bf16.gmra.mrb[0].mxu0 %v598
    %v904 = vpop.f32.mrb[0].mxu0
    %v905 = vadd.f32 %v193, %v904
    %v906 = vpop.f32.mrb[0].mxu0
    %v907 = vpop.f32.mrb[0].mxu0
    %v908 = vadd.f32 %v193, %v907
    %v909 = vpop.f32.mrb[0].mxu0
    %910 = vmatprep.mubr.bf16.mxu0 0
    %911 = vmatmul.mubr.bf16.gmra.mrb[0].mxu0 %v601
    %v912 = vpop.f32.mrb[0].mxu0
    %v913 = vadd.f32 %v193, %v912
    %v914 = vpop.f32.mrb[0].mxu0
    %v915 = vpop.f32.mrb[0].mxu0
    %v916 = vadd.f32 %v193, %v915
    %v917 = vpop.f32.mrb[0].mxu0
    %918 = vmatprep.mubr.bf16.mxu0 0
    %919 = vmatmul.mubr.bf16.gmra.mrb[0].mxu0 %v604
    %v920 = vpop.f32.mrb[0].mxu0
    %v921 = vadd.f32 %v193, %v920
    %v922 = vpop.f32.mrb[0].mxu0
    %v923 = vpop.f32.mrb[0].mxu0
    %v924 = vadd.f32 %v193, %v923
    %v925 = vpop.f32.mrb[0].mxu0
    %926 = vmatprep.mubr.bf16.mxu0 0
    %927 = vmatmul.mubr.bf16.gmra.mrb[0].mxu0 %v607
    %v928 = vpop.f32.mrb[0].mxu0
    %v929 = vadd.f32 %v193, %v928
    %v930 = vpop.f32.mrb[0].mxu0
    %v931 = vpop.f32.mrb[0].mxu0
    %v932 = vadd.f32 %v193, %v931
    %v933 = vpop.f32.mrb[0].mxu0
    %934 = vmatprep.mubr.bf16.mxu0 0
    %935 = vmatmul.mubr.bf16.gmra.mrb[0].mxu0 %v610
    %v936 = vpop.f32.mrb[0].mxu0
    %v937 = vadd.f32 %v193, %v936
    %v938 = vpop.f32.mrb[0].mxu0
    %v939 = vpop.f32.mrb[0].mxu0
    %v940 = vadd.f32 %v193, %v939
    %v941 = vpop.f32.mrb[0].mxu0
    %942 = vmatprep.mubr.bf16.mxu0 0
    %943 = vmatmul.mubr.bf16.gmra.mrb[0].mxu0 %v613
    %v944 = vpop.f32.mrb[0].mxu0
    %v945 = vadd.f32 %v193, %v944
    %v946 = vpop.f32.mrb[0].mxu0
    %v947 = vpop.f32.mrb[0].mxu0
    %v948 = vadd.f32 %v193, %v947
    %v949 = vpop.f32.mrb[0].mxu0
    %950 = vmatprep.mubr.bf16.mxu0 0
    %951 = vmatmul.mubr.bf16.gmra.mrb[0].mxu0 %v616
    %v952 = vpop.f32.mrb[0].mxu0
    %v953 = vadd.f32 %v193, %v952
    %v954 = vpop.f32.mrb[0].mxu0
    %v955 = vpop.f32.mrb[0].mxu0
    %v956 = vadd.f32 %v193, %v955
    %v957 = vpop.f32.mrb[0].mxu0
    %958 = vmatprep.mubr.bf16.mxu0 0
    %959 = vmatmul.mubr.bf16.gmra.mrb[0].mxu0 %v619
    %v960 = vpop.f32.mrb[0].mxu0
    %v961 = vadd.f32 %v193, %v960
    %v962 = vpop.f32.mrb[0].mxu0
    %v963 = vpop.f32.mrb[0].mxu0
    %v964 = vadd.f32 %v193, %v963
    %v965 = vpop.f32.mrb[0].mxu0
    %966 = vmatprep.mubr.bf16.mxu0 0
    %967 = vmatmul.mubr.bf16.gmra.mrb[0].mxu0 %v622
    %v968 = vpop.f32.mrb[0].mxu0
    %v969 = vadd.f32 %v193, %v968
    %v970 = vpop.f32.mrb[0].mxu0
    %v971 = vpop.f32.mrb[0].mxu0
    %v972 = vadd.f32 %v193, %v971
    %v973 = vpop.f32.mrb[0].mxu0
    %974 = vmatprep.mubr.bf16.mxu0 0
    %975 = vmatmul.mubr.bf16.gmra.mrb[0].mxu0 %v625
    %v976 = vpop.f32.mrb[0].mxu0
    %v977 = vadd.f32 %v193, %v976
    %v978 = vpop.f32.mrb[0].mxu0
    %v979 = vpop.f32.mrb[0].mxu0
    %v980 = vadd.f32 %v193, %v979
    %v981 = vpop.f32.mrb[0].mxu0
    %982 = vmatprep.mubr.bf16.mxu0 0
    %983 = vmatmul.mubr.bf16.gmra.mrb[0].mxu0 %v628
    %v984 = vpop.f32.mrb[0].mxu0
    %v985 = vadd.f32 %v193, %v984
    %v986 = vpop.f32.mrb[0].mxu0
    %v987 = vpop.f32.mrb[0].mxu0
    %v988 = vadd.f32 %v193, %v987
    %v989 = vpop.f32.mrb[0].mxu0
    %990 = vmatprep.mubr.bf16.mxu0 0
    %991 = vmatmul.mubr.bf16.gmra.mrb[0].mxu0 %v631
    %v992 = vpop.f32.mrb[0].mxu0
    %v993 = vadd.f32 %v193, %v992
    %v994 = vpop.f32.mrb[0].mxu0
    %v995 = vpop.f32.mrb[0].mxu0
    %v996 = vadd.f32 %v193, %v995
    %v997 = vpop.f32.mrb[0].mxu0
    %998 = vmatprep.mubr.bf16.mxu0 0
    %999 = vmatmul.mubr.bf16.gmra.mrb[0].mxu0 %v634
    %v1000 = vpop.f32.mrb[0].mxu0
    %v1001 = vadd.f32 %v193, %v1000
    %v1002 = vpop.f32.mrb[0].mxu0
    %v1003 = vpop.f32.mrb[0].mxu0
    %v1004 = vadd.f32 %v193, %v1003
    %v1005 = vpop.f32.mrb[0].mxu0
    %1006 = vmatprep.mubr.bf16.mxu0 0
    %1007 = vmatmul.mubr.bf16.gmra.mrb[0].mxu0 %v637
    %v1008 = vpop.f32.mrb[0].mxu0
    %v1009 = vadd.f32 %v193, %v1008
    %v1010 = vpop.f32.mrb[0].mxu0
    %v1011 = vpop.f32.mrb[0].mxu0
    %v1012 = vadd.f32 %v193, %v1011
    %v1013 = vpop.f32.mrb[0].mxu0
    %1014 = vmatprep.mubr.bf16.mxu0 0
    %1015 = vmatmul.mubr.bf16.gmra.mrb[0].mxu0 %v640
    %v1016 = vpop.f32.mrb[0].mxu0
    %v1017 = vadd.f32 %v193, %v1016
    %v1018 = vpop.f32.mrb[0].mxu0
    %v1019 = vpop.f32.mrb[0].mxu0
    %v1020 = vadd.f32 %v193, %v1019
    %v1021 = vpop.f32.mrb[0].mxu0
    %1022 = vmatprep.mubr.bf16.mxu0 0
    %1023 = vmatmul.mubr.bf16.gmra.mrb[0].mxu0 %v643
    %v1024 = vpop.f32.mrb[0].mxu0
    %v1025 = vadd.f32 %v193, %v1024
    %v1026 = vpop.f32.mrb[0].mxu0
    %v1027 = vpop.f32.mrb[0].mxu0
    %v1028 = vadd.f32 %v193, %v1027
    %v1029 = vpop.f32.mrb[0].mxu0
    %1030 = vmatprep.mubr.bf16.mxu0 0
    %1031 = vmatmul.mubr.bf16.gmra.mrb[0].mxu0 %v646
    %v1032 = vpop.f32.mrb[0].mxu0
    %v1033 = vadd.f32 %v193, %v1032
    %v1034 = vpop.f32.mrb[0].mxu0
    %v1035 = vpop.f32.mrb[0].mxu0
    %v1036 = vadd.f32 %v193, %v1035
    %v1037 = vpop.f32.mrb[0].mxu0
    %1038 = vmatprep.mubr.bf16.mxu0 0
    %1039 = vmatmul.mubr.bf16.gmra.mrb[0].mxu0 %v649
    %v1040 = vpop.f32.mrb[0].mxu0
    %v1041 = vadd.f32 %v193, %v1040
    %v1042 = vpop.f32.mrb[0].mxu0
    %v1043 = vpop.f32.mrb[0].mxu0
    %v1044 = vadd.f32 %v193, %v1043
    %v1045 = vpop.f32.mrb[0].mxu0
    %1046 = vmatprep.mubr.bf16.mxu0 0
    %1047 = vmatmul.mubr.bf16.gmra.mrb[0].mxu0 %v652
    %v1048 = vpop.f32.mrb[0].mxu0
    %v1049 = vadd.f32 %v193, %v1048
    %v1050 = vpop.f32.mrb[0].mxu0
    %v1051 = vpop.f32.mrb[0].mxu0
    %v1052 = vadd.f32 %v193, %v1051
    %v1053 = vpop.f32.mrb[0].mxu0
    %1054 = vmatprep.mubr.bf16.mxu0 0
    %1055 = vmatmul.mubr.bf16.gmra.mrb[0].mxu0 %v655
    %v1056 = vpop.f32.mrb[0].mxu0
    %v1057 = vadd.f32 %v193, %v1056
    %v1058 = vpop.f32.mrb[0].mxu0
    %v1059 = vpop.f32.mrb[0].mxu0
    %v1060 = vadd.f32 %v193, %v1059
    %v1061 = vpop.f32.mrb[0].mxu0
    %1062 = vmatprep.mubr.bf16.mxu0 0
    %1063 = vmatmul.mubr.bf16.gmra.mrb[0].mxu0 %v658
    %v1064 = vpop.f32.mrb[0].mxu0
    %v1065 = vadd.f32 %v193, %v1064
    %v1066 = vpop.f32.mrb[0].mxu0
    %v1067 = vpop.f32.mrb[0].mxu0
    %v1068 = vadd.f32 %v193, %v1067
    %v1069 = vpop.f32.mrb[0].mxu0
    %1070 = vmatprep.mubr.bf16.mxu0 0
    %1071 = vmatmul.mubr.bf16.gmra.mrb[0].mxu0 %v661
    %v1072 = vpop.f32.mrb[0].mxu0
    %v1073 = vadd.f32 %v193, %v1072
    %v1074 = vpop.f32.mrb[0].mxu0
    %v1075 = vpop.f32.mrb[0].mxu0
    %v1076 = vadd.f32 %v193, %v1075
    %v1077 = vpop.f32.mrb[0].mxu0
    %1078 = vmatprep.mubr.bf16.mxu0 0
    %1079 = vmatmul.mubr.bf16.gmra.mrb[0].mxu0 %v664
    %v1080 = vpop.f32.mrb[0].mxu0
    %v1081 = vadd.f32 %v193, %v1080
    %v1082 = vpop.f32.mrb[0].mxu0
    %v1083 = vpop.f32.mrb[0].mxu0
    %v1084 = vadd.f32 %v193, %v1083
    %v1085 = vpop.f32.mrb[0].mxu0
    %1086 = vmatprep.mubr.bf16.mxu0 0
    %1087 = vmatmul.mubr.bf16.gmra.mrb[0].mxu0 %v667
    %v1088 = vpop.f32.mrb[0].mxu0
    %v1089 = vadd.f32 %v193, %v1088
    %v1090 = vpop.f32.mrb[0].mxu0
    %v1091 = vpop.f32.mrb[0].mxu0
    %v1092 = vadd.f32 %v193, %v1091
    %v1093 = vpop.f32.mrb[0].mxu0
    %1094 = vmatprep.mubr.bf16.mxu0 0
    %1095 = vmatmul.mubr.bf16.gmra.mrb[0].mxu0 %v670
    %v1096 = vpop.f32.mrb[0].mxu0
    %v1097 = vadd.f32 %v193, %v1096
    %v1098 = vpop.f32.mrb[0].mxu0
    %v1099 = vpop.f32.mrb[0].mxu0
    %v1100 = vadd.f32 %v193, %v1099
    %v1101 = vpop.f32.mrb[0].mxu0
    %1102 = vmatprep.mubr.bf16.mxu0 0
    %1103 = vmatmul.mubr.bf16.gmra.mrb[0].mxu0 %v673
    %v1104 = vpop.f32.mrb[0].mxu0
    %v1105 = vadd.f32 %v193, %v1104
    %v1106 = vpop.f32.mrb[0].mxu0
    %v1107 = vpop.f32.mrb[0].mxu0
    %v1108 = vadd.f32 %v193, %v1107
    %v1109 = vpop.f32.mrb[0].mxu0
    %1110 = vmatprep.mubr.bf16.mxu0 0
    %1111 = vmatmul.mubr.bf16.gmra.mrb[0].mxu0 %v676
    %v1112 = vpop.f32.mrb[0].mxu0
    %v1113 = vadd.f32 %v193, %v1112
    %v1114 = vpop.f32.mrb[0].mxu0
    %v1115 = vpop.f32.mrb[0].mxu0
    %v1116 = vadd.f32 %v193, %v1115
    %v1117 = vpop.f32.mrb[0].mxu0
    %1118 = vmatprep.mubr.bf16.mxu0 0
    %1119 = vmatmul.mubr.bf16.gmra.mrb[0].mxu0 %v679
    %v1120 = vpop.f32.mrb[0].mxu0
    %v1121 = vadd.f32 %v193, %v1120
    %v1122 = vpop.f32.mrb[0].mxu0
    %v1123 = vpop.f32.mrb[0].mxu0
    %v1124 = vadd.f32 %v193, %v1123
    %v1125 = vpop.f32.mrb[0].mxu0
    %1126 = vmatprep.mubr.bf16.mxu0 0
    %1127 = vmatmul.mubr.bf16.gmra.mrb[0].mxu0 %v682
    %v1128 = vpop.f32.mrb[0].mxu0
    %v1129 = vadd.f32 %v193, %v1128
    %v1130 = vpop.f32.mrb[0].mxu0
    %v1131 = vpop.f32.mrb[0].mxu0
    %v1132 = vadd.f32 %v193, %v1131
    %v1133 = vpop.f32.mrb[0].mxu0
    %1134 = vmatprep.mubr.bf16.mxu0 0
    %1135 = vmatmul.mubr.bf16.gmra.mrb[0].mxu0 %v685
    %v1136 = vpop.f32.mrb[0].mxu0
    %v1137 = vadd.f32 %v193, %v1136
    %v1138 = vpop.f32.mrb[0].mxu0
    %v1139 = vpop.f32.mrb[0].mxu0
    %v1140 = vadd.f32 %v193, %v1139
    %v1141 = vpop.f32.mrb[0].mxu0
    %1142 = vmatprep.mubr.bf16.mxu0 0
    %1143 = vmatmul.mubr.bf16.gmra.mrb[0].mxu0 %v688
    %v1144 = vpop.f32.mrb[0].mxu0
    %v1145 = vadd.f32 %v193, %v1144
    %v1146 = vpop.f32.mrb[0].mxu0
    %v1147 = vpop.f32.mrb[0].mxu0
    %v1148 = vadd.f32 %v193, %v1147
    %v1149 = vpop.f32.mrb[0].mxu0
    %1150 = vmatprep.mubr.bf16.mxu0 0
    %1151 = vmatmul.mubr.bf16.gmra.mrb[0].mxu0 %v691
    %v1152 = vpop.f32.mrb[0].mxu0
    %v1153 = vadd.f32 %v193, %v1152
    %v1154 = vpop.f32.mrb[0].mxu0
    %v1155 = vpop.f32.mrb[0].mxu0
    %v1156 = vadd.f32 %v193, %v1155
    %v1157 = vpop.f32.mrb[0].mxu0
    %1158 = vmatprep.mubr.bf16.mxu0 0
    %1159 = vmatmul.mubr.bf16.gmra.mrb[0].mxu0 %v694
    %v1160 = vpop.f32.mrb[0].mxu0
    %v1161 = vadd.f32 %v193, %v1160
    %v1162 = vpop.f32.mrb[0].mxu0
    %v1163 = vpop.f32.mrb[0].mxu0
    %v1164 = vadd.f32 %v193, %v1163
    %v1165 = vpop.f32.mrb[0].mxu0
    %1166 = vmatprep.mubr.bf16.mxu0 0
    %1167 = vmatmul.mubr.bf16.gmra.mrb[0].mxu0 %v697
    %v1168 = vpop.f32.mrb[0].mxu0
    %v1169 = vadd.f32 %v193, %v1168
    %v1170 = vpop.f32.mrb[0].mxu0
    %v1171 = vpop.f32.mrb[0].mxu0
    %v1172 = vadd.f32 %v193, %v1171
    %v1173 = vpop.f32.mrb[0].mxu0
    %1174 = vmatprep.mubr.bf16.mxu0 0
    %1175 = vmatmul.mubr.bf16.gmra.mrb[0].mxu0 %v700
    %v1176 = vpop.f32.mrb[0].mxu0
    %v1177 = vadd.f32 %v193, %v1176
    %v1178 = vpop.f32.mrb[0].mxu0
    %v1179 = vpop.f32.mrb[0].mxu0
    %v1180 = vadd.f32 %v193, %v1179
    %v1181 = vpop.f32.mrb[0].mxu0
    %1182 = vmatprep.mubr.bf16.mxu0 0
    %1183 = vmatmul.mubr.bf16.gmra.mrb[0].mxu0 %v703
    %v1184 = vpop.f32.mrb[0].mxu0
    %v1185 = vadd.f32 %v193, %v1184
    %v1186 = vpop.f32.mrb[0].mxu0
    %v1187 = vpop.f32.mrb[0].mxu0
    %v1188 = vadd.f32 %v193, %v1187
    %v1189 = vpop.f32.mrb[0].mxu0
    %1190 = vmatprep.mubr.bf16.mxu0 0
    %1191 = vmatmul.mubr.bf16.gmra.mrb[0].mxu0 %v706
    %v1192 = vpop.f32.mrb[0].mxu0
    %v1193 = vadd.f32 %v193, %v1192
    %v1194 = vpop.f32.mrb[0].mxu0
    %v1195 = vpop.f32.mrb[0].mxu0
    %v1196 = vadd.f32 %v193, %v1195
    %v1197 = vpop.f32.mrb[0].mxu0
    %1198 = vmatprep.mubr.bf16.mxu0 0
    %1199 = vmatmul.mubr.bf16.gmra.mrb[0].mxu0 %v709
    %v1200 = vpop.f32.mrb[0].mxu0
    %v1201 = vadd.f32 %v193, %v1200
    %v1202 = vpop.f32.mrb[0].mxu0
    %v1203 = vpop.f32.mrb[0].mxu0
    %v1204 = vadd.f32 %v193, %v1203
    %v1205 = vpop.f32.mrb[0].mxu0
    %1206 = vmatprep.mubr.bf16.mxu0 0
    %1207 = vmatmul.mubr.bf16.gmra.mrb[0].mxu0 %v712
    %v1208 = vpop.f32.mrb[0].mxu0
    %v1209 = vadd.f32 %v193, %v1208
    %v1210 = vpop.f32.mrb[0].mxu0
    %v1211 = vpop.f32.mrb[0].mxu0
    %v1212 = vadd.f32 %v193, %v1211
    %v1213 = vpop.f32.mrb[0].mxu0
    %1214 = vmatprep.mubr.bf16.mxu0 0
    %1215 = vmatmul.mubr.bf16.gmra.mrb[0].mxu0 %v715
    %v1216 = vpop.f32.mrb[0].mxu0
    %v1217 = vadd.f32 %v193, %v1216
    %v1218 = vpop.f32.mrb[0].mxu0
    %v1219 = vpop.f32.mrb[0].mxu0
    %v1220 = vadd.f32 %v193, %v1219
    %v1221 = vpop.f32.mrb[0].mxu0
    %1222 = vmatprep.mubr.bf16.mxu0 0
    %1223 = vmatmul.mubr.bf16.gmra.mrb[0].mxu0 %v718
    %v1224 = vpop.f32.mrb[0].mxu0
    %v1225 = vadd.f32 %v193, %v1224
    %v1226 = vpop.f32.mrb[0].mxu0
    %v1227 = vpop.f32.mrb[0].mxu0
    %v1228 = vadd.f32 %v193, %v1227
    %v1229 = vpop.f32.mrb[0].mxu0
    %1230 = vmatprep.mubr.bf16.mxu0 0
    %1231 = vmatmul.mubr.bf16.gmra.mrb[0].mxu0 %v721
    %v1232 = vpop.f32.mrb[0].mxu0
    %v1233 = vadd.f32 %v193, %v1232
    %v1234 = vpop.f32.mrb[0].mxu0
    %v1235 = vpop.f32.mrb[0].mxu0
    %v1236 = vadd.f32 %v193, %v1235
    %v1237 = vpop.f32.mrb[0].mxu0
    %1238 = vmatprep.mubr.bf16.mxu0 0
    %1239 = vmatmul.mubr.bf16.gmra.mrb[0].mxu0 %v724
    %v1240 = vpop.f32.mrb[0].mxu0
    %v1241 = vadd.f32 %v193, %v1240
    %v1242 = vpop.f32.mrb[0].mxu0
    %v1243 = vpop.f32.mrb[0].mxu0
    %v1244 = vadd.f32 %v193, %v1243
    %v1245 = vpop.f32.mrb[0].mxu0
    %1246 = vmatprep.mubr.bf16.mxu0 0
    %1247 = vmatmul.mubr.bf16.gmra.mrb[0].mxu0 %v727
    %v1248 = vpop.f32.mrb[0].mxu0
    %v1249 = vadd.f32 %v193, %v1248
    %v1250 = vpop.f32.mrb[0].mxu0
    %v1251 = vpop.f32.mrb[0].mxu0
    %v1252 = vadd.f32 %v193, %v1251
    %v1253 = vpop.f32.mrb[0].mxu0
    %1254 = vmatprep.mubr.bf16.mxu0 0
    %1255 = vmatmul.mubr.bf16.gmra.mrb[0].mxu0 %v730
    %v1256 = vpop.f32.mrb[0].mxu0
    %v1257 = vadd.f32 %v193, %v1256
    %v1258 = vpop.f32.mrb[0].mxu0
    %v1259 = vpop.f32.mrb[0].mxu0
    %v1260 = vadd.f32 %v193, %v1259
    %v1261 = vpop.f32.mrb[0].mxu0
    %1262 = vmatprep.mubr.bf16.mxu0 0
    %1263 = vmatmul.mubr.bf16.gmra.mrb[0].mxu0 %v733
    %v1264 = vpop.f32.mrb[0].mxu0
    %v1265 = vadd.f32 %v193, %v1264
    %v1266 = vpop.f32.mrb[0].mxu0
    %v1267 = vpop.f32.mrb[0].mxu0
    %v1268 = vadd.f32 %v193, %v1267
    %v1269 = vpop.f32.mrb[0].mxu0
    %1270 = vmatprep.mubr.bf16.mxu0 0
    %1271 = vmatmul.mubr.bf16.gmra.mrb[0].mxu0 %v736
    %v1272 = vpop.f32.mrb[0].mxu0
    %v1273 = vadd.f32 %v193, %v1272
    %v1274 = vpop.f32.mrb[0].mxu0
    %v1275 = vpop.f32.mrb[0].mxu0
    %v1276 = vadd.f32 %v193, %v1275
    %v1277 = vpop.f32.mrb[0].mxu0
    %1278 = vmatprep.mubr.bf16.mxu0 0
    %1279 = vmatmul.mubr.bf16.gmra.mrb[0].mxu0 %v739
    %v1280 = vpop.f32.mrb[0].mxu0
    %v1281 = vadd.f32 %v193, %v1280
    %v1282 = vpop.f32.mrb[0].mxu0
    %v1283 = vpop.f32.mrb[0].mxu0
    %v1284 = vadd.f32 %v193, %v1283
    %v1285 = vpop.f32.mrb[0].mxu0
    %1286 = vmatprep.mubr.bf16.mxu0 0
    %1287 = vmatmul.mubr.bf16.gmra.mrb[0].mxu0 %v742
    %v1288 = vpop.f32.mrb[0].mxu0
    %v1289 = vadd.f32 %v193, %v1288
    %v1290 = vpop.f32.mrb[0].mxu0
    %v1291 = vpop.f32.mrb[0].mxu0
    %v1292 = vadd.f32 %v193, %v1291
    %v1293 = vpop.f32.mrb[0].mxu0
    %1294 = vmatprep.mubr.bf16.mxu0 0
    %1295 = vmatmul.mubr.bf16.gmra.mrb[0].mxu0 %v745
    %v1296 = vpop.f32.mrb[0].mxu0
    %v1297 = vadd.f32 %v193, %v1296
    %v1298 = vpop.f32.mrb[0].mxu0
    %v1299 = vpop.f32.mrb[0].mxu0
    %v1300 = vadd.f32 %v193, %v1299
    %v1301 = vpop.f32.mrb[0].mxu0
    %1302 = vmatprep.mubr.bf16.mxu0 0
    %1303 = vmatmul.mubr.bf16.gmra.mrb[0].mxu0 %v748
    %v1304 = vpop.f32.mrb[0].mxu0
    %v1305 = vadd.f32 %v193, %v1304
    %v1306 = vpop.f32.mrb[0].mxu0
    %v1307 = vpop.f32.mrb[0].mxu0
    %v1308 = vadd.f32 %v193, %v1307
    %v1309 = vpop.f32.mrb[0].mxu0
    %1310 = vmatprep.mubr.bf16.mxu0 0
    %1311 = vmatmul.mubr.bf16.gmra.mrb[0].mxu0 %v751
    %v1312 = vpop.f32.mrb[0].mxu0
    %v1313 = vadd.f32 %v193, %v1312
    %v1314 = vpop.f32.mrb[0].mxu0
    %v1315 = vpop.f32.mrb[0].mxu0
    %v1316 = vadd.f32 %v193, %v1315
    %v1317 = vpop.f32.mrb[0].mxu0
    %1318 = vmatprep.mubr.bf16.mxu0 0
    %1319 = vmatmul.mubr.bf16.gmra.mrb[0].mxu0 %v754
    %v1320 = vpop.f32.mrb[0].mxu0
    %v1321 = vadd.f32 %v193, %v1320
    %v1322 = vpop.f32.mrb[0].mxu0
    %v1323 = vpop.f32.mrb[0].mxu0
    %v1324 = vadd.f32 %v193, %v1323
    %v1325 = vpop.f32.mrb[0].mxu0
    %1326 = vmatprep.mubr.bf16.mxu0 0
    %1327 = vmatmul.mubr.bf16.gmra.mrb[0].mxu0 %v757
    %v1328 = vpop.f32.mrb[0].mxu0
    %v1329 = vadd.f32 %v193, %v1328
    %v1330 = vpop.f32.mrb[0].mxu0
    %v1331 = vpop.f32.mrb[0].mxu0
    %v1332 = vadd.f32 %v193, %v1331
    %v1333 = vpop.f32.mrb[0].mxu0
    %1334 = vmatprep.mubr.bf16.mxu0 0
    %1335 = vmatmul.mubr.bf16.gmra.mrb[0].mxu0 %v760
    %v1336 = vpop.f32.mrb[0].mxu0
    %v1337 = vadd.f32 %v193, %v1336
    %v1338 = vpop.f32.mrb[0].mxu0
    %v1339 = vpop.f32.mrb[0].mxu0
    %v1340 = vadd.f32 %v193, %v1339
    %v1341 = vpop.f32.mrb[0].mxu0
    %1342 = vmatprep.mubr.bf16.mxu0 0
    %1343 = vmatmul.mubr.bf16.gmra.mrb[0].mxu0 %v763
    %v1344 = vpop.f32.mrb[0].mxu0
    %v1345 = vadd.f32 %v193, %v1344
    %v1346 = vpop.f32.mrb[0].mxu0
    %v1347 = vpop.f32.mrb[0].mxu0
    %v1348 = vadd.f32 %v193, %v1347
    %v1349 = vpop.f32.mrb[0].mxu0
    %1350 = vmatprep.mubr.bf16.mxu0 0
    %1351 = vmatmul.mubr.bf16.gmra.mrb[0].mxu0 %v766
    %v1352 = vpop.f32.mrb[0].mxu0
    %v1353 = vadd.f32 %v193, %v1352
    %v1354 = vpop.f32.mrb[0].mxu0
    %v1355 = vpop.f32.mrb[0].mxu0
    %v1356 = vadd.f32 %v193, %v1355
    %v1357 = vpop.f32.mrb[0].mxu0
    %1358 = vmatprep.mubr.bf16.mxu0 0
    %1359 = vmatmul.mubr.bf16.gmra.mrb[0].mxu0 %v769
    %v1360 = vpop.f32.mrb[0].mxu0
    %v1361 = vadd.f32 %v193, %v1360
    %v1362 = vpop.f32.mrb[0].mxu0
    %v1363 = vpop.f32.mrb[0].mxu0
    %v1364 = vadd.f32 %v193, %v1363
    %v1365 = vpop.f32.mrb[0].mxu0
    %1366 = vmatprep.mubr.bf16.mxu0 0
    %1367 = vmatmul.mubr.bf16.gmra.mrb[0].mxu0 %v772
    %v1368 = vpop.f32.mrb[0].mxu0
    %v1369 = vadd.f32 %v193, %v1368
    %v1370 = vpop.f32.mrb[0].mxu0
    %v1371 = vpop.f32.mrb[0].mxu0
    %v1372 = vadd.f32 %v193, %v1371
    %v1373 = vpop.f32.mrb[0].mxu0
    %1374 = vmatprep.mubr.bf16.mxu0 0
    %1375 = vmatmul.mubr.bf16.gmra.mrb[0].mxu0 %v775
    %v1376 = vpop.f32.mrb[0].mxu0
    %v1377 = vadd.f32 %v193, %v1376
    %v1378 = vpop.f32.mrb[0].mxu0
    %v1379 = vpop.f32.mrb[0].mxu0
    %v1380 = vadd.f32 %v193, %v1379
    %v1381 = vpop.f32.mrb[0].mxu0
    %1382 = vmatprep.mubr.bf16.mxu0 0
    %1383 = vmatmul.mubr.bf16.gmra.mrb[0].mxu0 %v778
    %v1384 = vpop.f32.mrb[0].mxu0
    %v1385 = vadd.f32 %v193, %v1384
    %v1386 = vpop.f32.mrb[0].mxu0
    %v1387 = vpop.f32.mrb[0].mxu0
    %v1388 = vadd.f32 %v193, %v1387
    %v1389 = vpop.f32.mrb[0].mxu0
    %1390 = vmatprep.mubr.bf16.mxu0 0
    %1391 = vmatmul.mubr.bf16.gmra.mrb[0].mxu0 %v781
    %v1392 = vpop.f32.mrb[0].mxu0
    %v1393 = vadd.f32 %v193, %v1392
    %v1394 = vpop.f32.mrb[0].mxu0
    %v1395 = vpop.f32.mrb[0].mxu0
    %v1396 = vadd.f32 %v193, %v1395
    %v1397 = vpop.f32.mrb[0].mxu0
    %1398 = vdwg.mxu0
    %v1399 = vmax.f32 %v825, 0.0
    %v1400 = vmax.f32 %v828, 0.0
    %v1401 = vmax.f32 %v833, 0.0
    %v1402 = vmax.f32 %v836, 0.0
    %v1403 = vmax.f32 %v841, 0.0
    %v1404 = vmax.f32 %v844, 0.0
    %v1405 = vmax.f32 %v849, 0.0
    %v1406 = vmax.f32 %v852, 0.0
    %v1407 = vmax.f32 %v857, 0.0
    %v1408 = vmax.f32 %v860, 0.0
    %v1409 = vmax.f32 %v865, 0.0
    %v1410 = vmax.f32 %v868, 0.0
    %v1411 = vmax.f32 %v873, 0.0
    %v1412 = vmax.f32 %v876, 0.0
    %v1413 = vmax.f32 %v881, 0.0
    %v1414 = vmax.f32 %v884, 0.0
    %v1415 = vmax.f32 %v889, 0.0
    %v1416 = vmax.f32 %v892, 0.0
    %v1417 = vmax.f32 %v897, 0.0
    %v1418 = vmax.f32 %v900, 0.0
    %v1419 = vmax.f32 %v905, 0.0
    %v1420 = vmax.f32 %v908, 0.0
    %v1421 = vmax.f32 %v913, 0.0
    %v1422 = vmax.f32 %v916, 0.0
    %v1423 = vmax.f32 %v921, 0.0
    %v1424 = vmax.f32 %v924, 0.0
    %v1425 = vmax.f32 %v929, 0.0
    %v1426 = vmax.f32 %v932, 0.0
    %v1427 = vmax.f32 %v937, 0.0
    %v1428 = vmax.f32 %v940, 0.0
    %v1429 = vmax.f32 %v945, 0.0
    %v1430 = vmax.f32 %v948, 0.0
    %v1431 = vmax.f32 %v953, 0.0
    %v1432 = vmax.f32 %v956, 0.0
    %v1433 = vmax.f32 %v961, 0.0
    %v1434 = vmax.f32 %v964, 0.0
    %v1435 = vmax.f32 %v969, 0.0
    %v1436 = vmax.f32 %v972, 0.0
    %v1437 = vmax.f32 %v977, 0.0
    %v1438 = vmax.f32 %v980, 0.0
    %v1439 = vmax.f32 %v985, 0.0
    %v1440 = vmax.f32 %v988, 0.0
    %v1441 = vmax.f32 %v993, 0.0
    %v1442 = vmax.f32 %v996, 0.0
    %v1443 = vmax.f32 %v1001, 0.0
    %v1444 = vmax.f32 %v1004, 0.0
    %v1445 = vmax.f32 %v1009, 0.0
    %v1446 = vmax.f32 %v1012, 0.0
    %v1447 = vmax.f32 %v1017, 0.0
    %v1448 = vmax.f32 %v1020, 0.0
    %v1449 = vmax.f32 %v1025, 0.0
    %v1450 = vmax.f32 %v1028, 0.0
    %v1451 = vmax.f32 %v1033, 0.0
    %v1452 = vmax.f32 %v1036, 0.0
    %v1453 = vmax.f32 %v1041, 0.0
    %v1454 = vmax.f32 %v1044, 0.0
    %v1455 = vmax.f32 %v1049, 0.0
    %v1456 = vmax.f32 %v1052, 0.0
    %v1457 = vmax.f32 %v1057, 0.0
    %v1458 = vmax.f32 %v1060, 0.0
    %v1459 = vmax.f32 %v1065, 0.0
    %v1460 = vmax.f32 %v1068, 0.0
    %v1461 = vmax.f32 %v1073, 0.0
    %v1462 = vmax.f32 %v1076, 0.0
    %v1463 = vmax.f32 %v1081, 0.0
    %v1464 = vmax.f32 %v1084, 0.0
    %v1465 = vmax.f32 %v1089, 0.0
    %v1466 = vmax.f32 %v1092, 0.0
    %v1467 = vmax.f32 %v1097, 0.0
    %v1468 = vmax.f32 %v1100, 0.0
    %v1469 = vmax.f32 %v1105, 0.0
    %v1470 = vmax.f32 %v1108, 0.0
    %v1471 = vmax.f32 %v1113, 0.0
    %v1472 = vmax.f32 %v1116, 0.0
    %v1473 = vmax.f32 %v1121, 0.0
    %v1474 = vmax.f32 %v1124, 0.0
    %v1475 = vmax.f32 %v1129, 0.0
    %v1476 = vmax.f32 %v1132, 0.0
    %v1477 = vmax.f32 %v1137, 0.0
    %v1478 = vmax.f32 %v1140, 0.0
    %v1479 = vmax.f32 %v1145, 0.0
    %v1480 = vmax.f32 %v1148, 0.0
    %v1481 = vmax.f32 %v1153, 0.0
    %v1482 = vmax.f32 %v1156, 0.0
    %v1483 = vmax.f32 %v1161, 0.0
    %v1484 = vmax.f32 %v1164, 0.0
    %v1485 = vmax.f32 %v1169, 0.0
    %v1486 = vmax.f32 %v1172, 0.0
    %v1487 = vmax.f32 %v1177, 0.0
    %v1488 = vmax.f32 %v1180, 0.0
    %v1489 = vmax.f32 %v1185, 0.0
    %v1490 = vmax.f32 %v1188, 0.0
    %v1491 = vmax.f32 %v1193, 0.0
    %v1492 = vmax.f32 %v1196, 0.0
    %v1493 = vmax.f32 %v1201, 0.0
    %v1494 = vmax.f32 %v1204, 0.0
    %v1495 = vmax.f32 %v1209, 0.0
    %v1496 = vmax.f32 %v1212, 0.0
    %v1497 = vmax.f32 %v1217, 0.0
    %v1498 = vmax.f32 %v1220, 0.0
    %v1499 = vmax.f32 %v1225, 0.0
    %v1500 = vmax.f32 %v1228, 0.0
    %v1501 = vmax.f32 %v1233, 0.0
    %v1502 = vmax.f32 %v1236, 0.0
    %v1503 = vmax.f32 %v1241, 0.0
    %v1504 = vmax.f32 %v1244, 0.0
    %v1505 = vmax.f32 %v1249, 0.0
    %v1506 = vmax.f32 %v1252, 0.0
    %v1507 = vmax.f32 %v1257, 0.0
    %v1508 = vmax.f32 %v1260, 0.0
    %v1509 = vmax.f32 %v1265, 0.0
    %v1510 = vmax.f32 %v1268, 0.0
    %v1511 = vmax.f32 %v1273, 0.0
    %v1512 = vmax.f32 %v1276, 0.0
    %v1513 = vmax.f32 %v1281, 0.0
    %v1514 = vmax.f32 %v1284, 0.0
    %v1515 = vmax.f32 %v1289, 0.0
    %v1516 = vmax.f32 %v1292, 0.0
    %v1517 = vmax.f32 %v1297, 0.0
    %v1518 = vmax.f32 %v1300, 0.0
    %v1519 = vmax.f32 %v1305, 0.0
    %v1520 = vmax.f32 %v1308, 0.0
    %v1521 = vmax.f32 %v1313, 0.0
    %v1522 = vmax.f32 %v1316, 0.0
    %v1523 = vmax.f32 %v1321, 0.0
    %v1524 = vmax.f32 %v1324, 0.0
    %v1525 = vmax.f32 %v1329, 0.0
    %v1526 = vmax.f32 %v1332, 0.0
    %v1527 = vmax.f32 %v1337, 0.0
    %v1528 = vmax.f32 %v1340, 0.0
    %v1529 = vmax.f32 %v1345, 0.0
    %v1530 = vmax.f32 %v1348, 0.0
    %v1531 = vmax.f32 %v1353, 0.0
    %v1532 = vmax.f32 %v1356, 0.0
    %v1533 = vmax.f32 %v1361, 0.0
    %v1534 = vmax.f32 %v1364, 0.0
    %v1535 = vmax.f32 %v1369, 0.0
    %v1536 = vmax.f32 %v1372, 0.0
    %v1537 = vmax.f32 %v1377, 0.0
    %v1538 = vmax.f32 %v1380, 0.0
    %v1539 = vmax.f32 %v1385, 0.0
    %v1540 = vmax.f32 %v1388, 0.0
    %v1541 = vmax.f32 %v1393, 0.0
    %v1542 = vmax.f32 %v1396, 0.0
    %v1543 = vadd.f32 %v1399, %v1435
    %v1544 = vadd.f32 %v1400, %v1436
    %v1545 = vadd.f32 %v1401, %v1437
    %v1546 = vadd.f32 %v1402, %v1438
    %v1547 = vadd.f32 %v1403, %v1439
    %v1548 = vadd.f32 %v1404, %v1440
    %v1549 = vadd.f32 %v1405, %v1441
    %v1550 = vadd.f32 %v1406, %v1442
    %v1551 = vadd.f32 %v1407, %v1443
    %v1552 = vadd.f32 %v1408, %v1444
    %v1553 = vadd.f32 %v1409, %v1445
    %v1554 = vadd.f32 %v1410, %v1446
    %v1555 = vadd.f32 %v1411, %v1447
    %v1556 = vadd.f32 %v1412, %v1448
    %v1557 = vadd.f32 %v1413, %v1449
    %v1558 = vadd.f32 %v1414, %v1450
    %v1559 = vadd.f32 %v1415, %v1451
    %v1560 = vadd.f32 %v1416, %v1452
    %v1561 = vadd.f32 %v1417, %v1453
    %v1562 = vadd.f32 %v1418, %v1454
    %v1563 = vadd.f32 %v1419, %v1455
    %v1564 = vadd.f32 %v1420, %v1456
    %v1565 = vadd.f32 %v1421, %v1457
    %v1566 = vadd.f32 %v1422, %v1458
    %v1567 = vadd.f32 %v1423, %v1459
    %v1568 = vadd.f32 %v1424, %v1460
    %v1569 = vadd.f32 %v1425, %v1461
    %v1570 = vadd.f32 %v1426, %v1462
    %v1571 = vadd.f32 %v1427, %v1463
    %v1572 = vadd.f32 %v1428, %v1464
    %v1573 = vadd.f32 %v1429, %v1465
    %v1574 = vadd.f32 %v1430, %v1466
    %v1575 = vadd.f32 %v1431, %v1467
    %v1576 = vadd.f32 %v1432, %v1468
    %v1577 = vadd.f32 %v1433, %v1469
    %v1578 = vadd.f32 %v1434, %v1470
    %v1579 = vadd.f32 %v1471, %v1507
    %v1580 = vadd.f32 %v1472, %v1508
    %v1581 = vadd.f32 %v1473, %v1509
    %v1582 = vadd.f32 %v1474, %v1510
    %v1583 = vadd.f32 %v1475, %v1511
    %v1584 = vadd.f32 %v1476, %v1512
    %v1585 = vadd.f32 %v1477, %v1513
    %v1586 = vadd.f32 %v1478, %v1514
    %v1587 = vadd.f32 %v1479, %v1515
    %v1588 = vadd.f32 %v1480, %v1516
    %v1589 = vadd.f32 %v1481, %v1517
    %v1590 = vadd.f32 %v1482, %v1518
    %v1591 = vadd.f32 %v1483, %v1519
    %v1592 = vadd.f32 %v1484, %v1520
    %v1593 = vadd.f32 %v1485, %v1521
    %v1594 = vadd.f32 %v1486, %v1522
    %v1595 = vadd.f32 %v1487, %v1523
    %v1596 = vadd.f32 %v1488, %v1524
    %v1597 = vadd.f32 %v1489, %v1525
    %v1598 = vadd.f32 %v1490, %v1526
    %v1599 = vadd.f32 %v1491, %v1527
    %v1600 = vadd.f32 %v1492, %v1528
    %v1601 = vadd.f32 %v1493, %v1529
    %v1602 = vadd.f32 %v1494, %v1530
    %v1603 = vadd.f32 %v1495, %v1531
    %v1604 = vadd.f32 %v1496, %v1532
    %v1605 = vadd.f32 %v1497, %v1533
    %v1606 = vadd.f32 %v1498, %v1534
    %v1607 = vadd.f32 %v1499, %v1535
    %v1608 = vadd.f32 %v1500, %v1536
    %v1609 = vadd.f32 %v1501, %v1537
    %v1610 = vadd.f32 %v1502, %v1538
    %v1611 = vadd.f32 %v1503, %v1539
    %v1612 = vadd.f32 %v1504, %v1540
    %v1613 = vadd.f32 %v1505, %v1541
    %v1614 = vadd.f32 %v1506, %v1542
    %v1663 = vrot.slane %v1544, 4
    %v1664 = vrot.slane %v1545, 4
    %v1665 = vsel %vm783, %v1663, %v1664
    %v1666 = vrot.slane %v1547, 4
    %v1667 = vrot.slane %v1548, 4
    %v1668 = vsel %vm783, %v1666, %v1667
    %v1669 = vrot.slane %v1550, 4
    %v1670 = vrot.slane %v1551, 4
    %v1671 = vsel %vm783, %v1669, %v1670
    %v1672 = vrot.slane %v1553, 4
    %v1673 = vrot.slane %v1554, 4
    %v1674 = vsel %vm783, %v1672, %v1673
    %v1675 = vrot.slane %v1556, 4
    %v1676 = vrot.slane %v1557, 4
    %v1677 = vsel %vm783, %v1675, %v1676
    %v1678 = vrot.slane %v1559, 4
    %v1679 = vrot.slane %v1560, 4
    %v1680 = vsel %vm783, %v1678, %v1679
    %v1681 = vrot.slane %v1562, 4
    %v1682 = vrot.slane %v1563, 4
    %v1683 = vsel %vm783, %v1681, %v1682
    %v1684 = vrot.slane %v1565, 4
    %v1685 = vrot.slane %v1566, 4
    %v1686 = vsel %vm783, %v1684, %v1685
    %v1687 = vrot.slane %v1568, 4
    %v1688 = vrot.slane %v1569, 4
    %v1689 = vsel %vm783, %v1687, %v1688
    %v1690 = vrot.slane %v1571, 4
    %v1691 = vrot.slane %v1572, 4
    %v1692 = vsel %vm783, %v1690, %v1691
    %v1693 = vrot.slane %v1574, 4
    %v1694 = vrot.slane %v1575, 4
    %v1695 = vsel %vm783, %v1693, %v1694
    %v1696 = vrot.slane %v1577, 4
    %v1697 = vrot.slane %v1578, 4
    %v1698 = vsel %vm783, %v1696, %v1697
    %v1699 = vrot.slane %v1580, 4
    %v1700 = vrot.slane %v1581, 4
    %v1701 = vsel %vm783, %v1699, %v1700
    %v1702 = vrot.slane %v1583, 4
    %v1703 = vrot.slane %v1584, 4
    %v1704 = vsel %vm783, %v1702, %v1703
    %v1705 = vrot.slane %v1586, 4
    %v1706 = vrot.slane %v1587, 4
    %v1707 = vsel %vm783, %v1705, %v1706
    %v1708 = vrot.slane %v1589, 4
    %v1709 = vrot.slane %v1590, 4
    %v1710 = vsel %vm783, %v1708, %v1709
    %v1711 = vrot.slane %v1592, 4
    %v1712 = vrot.slane %v1593, 4
    %v1713 = vsel %vm783, %v1711, %v1712
    %v1714 = vrot.slane %v1595, 4
    %v1715 = vrot.slane %v1596, 4
    %v1716 = vsel %vm783, %v1714, %v1715
    %v1717 = vrot.slane %v1598, 4
    %v1718 = vrot.slane %v1599, 4
    %v1719 = vsel %vm783, %v1717, %v1718
    %v1720 = vrot.slane %v1601, 4
    %v1721 = vrot.slane %v1602, 4
    %v1722 = vsel %vm783, %v1720, %v1721
    %v1723 = vrot.slane %v1604, 4
    %v1724 = vrot.slane %v1605, 4
    %v1725 = vsel %vm783, %v1723, %v1724
    %v1726 = vrot.slane %v1607, 4
    %v1727 = vrot.slane %v1608, 4
    %v1728 = vsel %vm783, %v1726, %v1727
    %v1729 = vrot.slane %v1610, 4
    %v1730 = vrot.slane %v1611, 4
    %v1731 = vsel %vm783, %v1729, %v1730
    %v1732 = vrot.slane %v1613, 4
    %v1733 = vrot.slane %v1614, 4
    %v1734 = vsel %vm783, %v1732, %v1733
    %v1783 = vadd.f32 %v1543, %v1665
    %v1784 = vadd.f32 %v1544, %v1664
    %v1785 = vadd.f32 %v1546, %v1668
    %v1786 = vadd.f32 %v1547, %v1667
    %v1787 = vadd.f32 %v1549, %v1671
    %v1788 = vadd.f32 %v1550, %v1670
    %v1789 = vadd.f32 %v1552, %v1674
    %v1790 = vadd.f32 %v1553, %v1673
    %v1791 = vadd.f32 %v1555, %v1677
    %v1792 = vadd.f32 %v1556, %v1676
    %v1793 = vadd.f32 %v1558, %v1680
    %v1794 = vadd.f32 %v1559, %v1679
    %v1795 = vadd.f32 %v1561, %v1683
    %v1796 = vadd.f32 %v1562, %v1682
    %v1797 = vadd.f32 %v1564, %v1686
    %v1798 = vadd.f32 %v1565, %v1685
    %v1799 = vadd.f32 %v1567, %v1689
    %v1800 = vadd.f32 %v1568, %v1688
    %v1801 = vadd.f32 %v1570, %v1692
    %v1802 = vadd.f32 %v1571, %v1691
    %v1803 = vadd.f32 %v1573, %v1695
    %v1804 = vadd.f32 %v1574, %v1694
    %v1805 = vadd.f32 %v1576, %v1698
    %v1806 = vadd.f32 %v1577, %v1697
    %v1807 = vadd.f32 %v1579, %v1701
    %v1808 = vadd.f32 %v1580, %v1700
    %v1809 = vadd.f32 %v1582, %v1704
    %v1810 = vadd.f32 %v1583, %v1703
    %v1811 = vadd.f32 %v1585, %v1707
    %v1812 = vadd.f32 %v1586, %v1706
    %v1813 = vadd.f32 %v1588, %v1710
    %v1814 = vadd.f32 %v1589, %v1709
    %v1815 = vadd.f32 %v1591, %v1713
    %v1816 = vadd.f32 %v1592, %v1712
    %v1817 = vadd.f32 %v1594, %v1716
    %v1818 = vadd.f32 %v1595, %v1715
    %v1819 = vadd.f32 %v1597, %v1719
    %v1820 = vadd.f32 %v1598, %v1718
    %v1821 = vadd.f32 %v1600, %v1722
    %v1822 = vadd.f32 %v1601, %v1721
    %v1823 = vadd.f32 %v1603, %v1725
    %v1824 = vadd.f32 %v1604, %v1724
    %v1825 = vadd.f32 %v1606, %v1728
    %v1826 = vadd.f32 %v1607, %v1727
    %v1827 = vadd.f32 %v1609, %v1731
    %v1828 = vadd.f32 %v1610, %v1730
    %v1829 = vadd.f32 %v1612, %v1734
    %v1830 = vadd.f32 %v1613, %v1733
    %vm1863 = vcmask 1046528
    %v1864 = vrot.slane %v1783, 1
    %v1865 = vrot.slane %v1784, 1
    %v1866 = vsel %vm1863, %v1864, %v1865
    %v1867 = vrot.slane %v1785, 1
    %v1868 = vrot.slane %v1786, 1
    %v1869 = vsel %vm1863, %v1867, %v1868
    %v1870 = vrot.slane %v1787, 1
    %v1871 = vrot.slane %v1788, 1
    %v1872 = vsel %vm1863, %v1870, %v1871
    %v1873 = vrot.slane %v1789, 1
    %v1874 = vrot.slane %v1790, 1
    %v1875 = vsel %vm1863, %v1873, %v1874
    %v1876 = vrot.slane %v1791, 1
    %v1877 = vrot.slane %v1792, 1
    %v1878 = vsel %vm1863, %v1876, %v1877
    %v1879 = vrot.slane %v1793, 1
    %v1880 = vrot.slane %v1794, 1
    %v1881 = vsel %vm1863, %v1879, %v1880
    %v1882 = vrot.slane %v1795, 1
    %v1883 = vrot.slane %v1796, 1
    %v1884 = vsel %vm1863, %v1882, %v1883
    %v1885 = vrot.slane %v1797, 1
    %v1886 = vrot.slane %v1798, 1
    %v1887 = vsel %vm1863, %v1885, %v1886
    %v1888 = vrot.slane %v1807, 1
    %v1889 = vrot.slane %v1808, 1
    %v1890 = vsel %vm1863, %v1888, %v1889
    %v1891 = vrot.slane %v1809, 1
    %v1892 = vrot.slane %v1810, 1
    %v1893 = vsel %vm1863, %v1891, %v1892
    %v1894 = vrot.slane %v1811, 1
    %v1895 = vrot.slane %v1812, 1
    %v1896 = vsel %vm1863, %v1894, %v1895
    %v1897 = vrot.slane %v1813, 1
    %v1898 = vrot.slane %v1814, 1
    %v1899 = vsel %vm1863, %v1897, %v1898
    %v1900 = vrot.slane %v1815, 1
    %v1901 = vrot.slane %v1816, 1
    %v1902 = vsel %vm1863, %v1900, %v1901
    %v1903 = vrot.slane %v1817, 1
    %v1904 = vrot.slane %v1818, 1
    %v1905 = vsel %vm1863, %v1903, %v1904
    %v1906 = vrot.slane %v1819, 1
    %v1907 = vrot.slane %v1820, 1
    %v1908 = vsel %vm1863, %v1906, %v1907
    %v1909 = vrot.slane %v1821, 1
    %v1910 = vrot.slane %v1822, 1
    %v1911 = vsel %vm1863, %v1909, %v1910
    %1912 = vrot.lane.b32.xlu0 %v1866, 6
    %v1913 = vpop.permute.xlu0 %1912
    %1914 = vrot.lane.b32.xlu0 %v1869, 6
    %v1915 = vpop.permute.xlu0 %1914
    %1916 = vrot.lane.b32.xlu0 %v1872, 6
    %v1917 = vpop.permute.xlu0 %1916
    %1918 = vrot.lane.b32.xlu0 %v1875, 6
    %v1919 = vpop.permute.xlu0 %1918
    %1920 = vrot.lane.b32.xlu0 %v1878, 6
    %v1921 = vpop.permute.xlu0 %1920
    %1922 = vrot.lane.b32.xlu0 %v1881, 6
    %v1923 = vpop.permute.xlu0 %1922
    %1924 = vrot.lane.b32.xlu0 %v1884, 6
    %v1925 = vpop.permute.xlu0 %1924
    %1926 = vrot.lane.b32.xlu0 %v1887, 6
    %v1927 = vpop.permute.xlu0 %1926
    %1928 = vrot.lane.b32.xlu0 %v1890, 6
    %v1929 = vpop.permute.xlu0 %1928
    %1930 = vrot.lane.b32.xlu0 %v1893, 6
    %v1931 = vpop.permute.xlu0 %1930
    %1932 = vrot.lane.b32.xlu0 %v1896, 6
    %v1933 = vpop.permute.xlu0 %1932
    %1934 = vrot.lane.b32.xlu0 %v1899, 6
    %v1935 = vpop.permute.xlu0 %1934
    %1936 = vrot.lane.b32.xlu0 %v1902, 6
    %v1937 = vpop.permute.xlu0 %1936
    %1938 = vrot.lane.b32.xlu0 %v1905, 6
    %v1939 = vpop.permute.xlu0 %1938
    %1940 = vrot.lane.b32.xlu0 %v1908, 6
    %v1941 = vpop.permute.xlu0 %1940
    %1942 = vrot.lane.b32.xlu0 %v1911, 6
    %v1943 = vpop.permute.xlu0 %1942
    %vm1960 = vcmask 1045504
    %v1961 = vrot.slane %v1783, 2
    %v1962 = vrot.slane %v1784, 2
    %v1963 = vsel %vm1960, %v1961, %v1962
    %v1964 = vrot.slane %v1785, 2
    %v1965 = vrot.slane %v1786, 2
    %v1966 = vsel %vm1960, %v1964, %v1965
    %v1967 = vrot.slane %v1787, 2
    %v1968 = vrot.slane %v1788, 2
    %v1969 = vsel %vm1960, %v1967, %v1968
    %v1970 = vrot.slane %v1789, 2
    %v1971 = vrot.slane %v1790, 2
    %v1972 = vsel %vm1960, %v1970, %v1971
    %v1973 = vrot.slane %v1791, 2
    %v1974 = vrot.slane %v1792, 2
    %v1975 = vsel %vm1960, %v1973, %v1974
    %v1976 = vrot.slane %v1793, 2
    %v1977 = vrot.slane %v1794, 2
    %v1978 = vsel %vm1960, %v1976, %v1977
    %v1979 = vrot.slane %v1795, 2
    %v1980 = vrot.slane %v1796, 2
    %v1981 = vsel %vm1960, %v1979, %v1980
    %v1982 = vrot.slane %v1797, 2
    %v1983 = vrot.slane %v1798, 2
    %v1984 = vsel %vm1960, %v1982, %v1983
    %v1985 = vrot.slane %v1807, 2
    %v1986 = vrot.slane %v1808, 2
    %v1987 = vsel %vm1960, %v1985, %v1986
    %v1988 = vrot.slane %v1809, 2
    %v1989 = vrot.slane %v1810, 2
    %v1990 = vsel %vm1960, %v1988, %v1989
    %v1991 = vrot.slane %v1811, 2
    %v1992 = vrot.slane %v1812, 2
    %v1993 = vsel %vm1960, %v1991, %v1992
    %v1994 = vrot.slane %v1813, 2
    %v1995 = vrot.slane %v1814, 2
    %v1996 = vsel %vm1960, %v1994, %v1995
    %v1997 = vrot.slane %v1815, 2
    %v1998 = vrot.slane %v1816, 2
    %v1999 = vsel %vm1960, %v1997, %v1998
    %v2000 = vrot.slane %v1817, 2
    %v2001 = vrot.slane %v1818, 2
    %v2002 = vsel %vm1960, %v2000, %v2001
    %v2003 = vrot.slane %v1819, 2
    %v2004 = vrot.slane %v1820, 2
    %v2005 = vsel %vm1960, %v2003, %v2004
    %v2006 = vrot.slane %v1821, 2
    %v2007 = vrot.slane %v1822, 2
    %v2008 = vsel %vm1960, %v2006, %v2007
    %2009 = vrot.lane.b32.xlu0 %v1963, 12
    %v2010 = vpop.permute.xlu0 %2009
    %2011 = vrot.lane.b32.xlu0 %v1966, 12
    %v2012 = vpop.permute.xlu0 %2011
    %2013 = vrot.lane.b32.xlu0 %v1969, 12
    %v2014 = vpop.permute.xlu0 %2013
    %2015 = vrot.lane.b32.xlu0 %v1972, 12
    %v2016 = vpop.permute.xlu0 %2015
    %2017 = vrot.lane.b32.xlu0 %v1975, 12
    %v2018 = vpop.permute.xlu0 %2017
    %2019 = vrot.lane.b32.xlu0 %v1978, 12
    %v2020 = vpop.permute.xlu0 %2019
    %2021 = vrot.lane.b32.xlu0 %v1981, 12
    %v2022 = vpop.permute.xlu0 %2021
    %2023 = vrot.lane.b32.xlu0 %v1984, 12
    %v2024 = vpop.permute.xlu0 %2023
    %2025 = vrot.lane.b32.xlu0 %v1987, 12
    %v2026 = vpop.permute.xlu0 %2025
    %2027 = vrot.lane.b32.xlu0 %v1990, 12
    %v2028 = vpop.permute.xlu0 %2027
    %2029 = vrot.lane.b32.xlu0 %v1993, 12
    %v2030 = vpop.permute.xlu0 %2029
    %2031 = vrot.lane.b32.xlu0 %v1996, 12
    %v2032 = vpop.permute.xlu0 %2031
    %2033 = vrot.lane.b32.xlu0 %v1999, 12
    %v2034 = vpop.permute.xlu0 %2033
    %2035 = vrot.lane.b32.xlu0 %v2002, 12
    %v2036 = vpop.permute.xlu0 %2035
    %2037 = vrot.lane.b32.xlu0 %v2005, 12
    %v2038 = vpop.permute.xlu0 %2037
    %2039 = vrot.lane.b32.xlu0 %v2008, 12
    %v2040 = vpop.permute.xlu0 %2039
    %v2057 = vrot.slane %v1783, 3
    %v2058 = vrot.slane %v1784, 3
    %v2059 = vsel %vm784, %v2057, %v2058
    %v2060 = vrot.slane %v1785, 3
    %v2061 = vrot.slane %v1786, 3
    %v2062 = vsel %vm784, %v2060, %v2061
    %v2063 = vrot.slane %v1787, 3
    %v2064 = vrot.slane %v1788, 3
    %v2065 = vsel %vm784, %v2063, %v2064
    %v2066 = vrot.slane %v1789, 3
    %v2067 = vrot.slane %v1790, 3
    %v2068 = vsel %vm784, %v2066, %v2067
    %v2069 = vrot.slane %v1791, 3
    %v2070 = vrot.slane %v1792, 3
    %v2071 = vsel %vm784, %v2069, %v2070
    %v2072 = vrot.slane %v1793, 3
    %v2073 = vrot.slane %v1794, 3
    %v2074 = vsel %vm784, %v2072, %v2073
    %v2075 = vrot.slane %v1795, 3
    %v2076 = vrot.slane %v1796, 3
    %v2077 = vsel %vm784, %v2075, %v2076
    %v2078 = vrot.slane %v1797, 3
    %v2079 = vrot.slane %v1798, 3
    %v2080 = vsel %vm784, %v2078, %v2079
    %v2081 = vrot.slane %v1807, 3
    %v2082 = vrot.slane %v1808, 3
    %v2083 = vsel %vm784, %v2081, %v2082
    %v2084 = vrot.slane %v1809, 3
    %v2085 = vrot.slane %v1810, 3
    %v2086 = vsel %vm784, %v2084, %v2085
    %v2087 = vrot.slane %v1811, 3
    %v2088 = vrot.slane %v1812, 3
    %v2089 = vsel %vm784, %v2087, %v2088
    %v2090 = vrot.slane %v1813, 3
    %v2091 = vrot.slane %v1814, 3
    %v2092 = vsel %vm784, %v2090, %v2091
    %v2093 = vrot.slane %v1815, 3
    %v2094 = vrot.slane %v1816, 3
    %v2095 = vsel %vm784, %v2093, %v2094
    %v2096 = vrot.slane %v1817, 3
    %v2097 = vrot.slane %v1818, 3
    %v2098 = vsel %vm784, %v2096, %v2097
    %v2099 = vrot.slane %v1819, 3
    %v2100 = vrot.slane %v1820, 3
    %v2101 = vsel %vm784, %v2099, %v2100
    %v2102 = vrot.slane %v1821, 3
    %v2103 = vrot.slane %v1822, 3
    %v2104 = vsel %vm784, %v2102, %v2103
    %2105 = vrot.lane.b32.xlu0 %v2059, 18
    %v2106 = vpop.permute.xlu0 %2105
    %2107 = vrot.lane.b32.xlu0 %v2062, 18
    %v2108 = vpop.permute.xlu0 %2107
    %2109 = vrot.lane.b32.xlu0 %v2065, 18
    %v2110 = vpop.permute.xlu0 %2109
    %2111 = vrot.lane.b32.xlu0 %v2068, 18
    %v2112 = vpop.permute.xlu0 %2111
    %2113 = vrot.lane.b32.xlu0 %v2071, 18
    %v2114 = vpop.permute.xlu0 %2113
    %2115 = vrot.lane.b32.xlu0 %v2074, 18
    %v2116 = vpop.permute.xlu0 %2115
    %2117 = vrot.lane.b32.xlu0 %v2077, 18
    %v2118 = vpop.permute.xlu0 %2117
    %2119 = vrot.lane.b32.xlu0 %v2080, 18
    %v2120 = vpop.permute.xlu0 %2119
    %2121 = vrot.lane.b32.xlu0 %v2083, 18
    %v2122 = vpop.permute.xlu0 %2121
    %2123 = vrot.lane.b32.xlu0 %v2086, 18
    %v2124 = vpop.permute.xlu0 %2123
    %2125 = vrot.lane.b32.xlu0 %v2089, 18
    %v2126 = vpop.permute.xlu0 %2125
    %2127 = vrot.lane.b32.xlu0 %v2092, 18
    %v2128 = vpop.permute.xlu0 %2127
    %2129 = vrot.lane.b32.xlu0 %v2095, 18
    %v2130 = vpop.permute.xlu0 %2129
    %2131 = vrot.lane.b32.xlu0 %v2098, 18
    %v2132 = vpop.permute.xlu0 %2131
    %2133 = vrot.lane.b32.xlu0 %v2101, 18
    %v2134 = vpop.permute.xlu0 %2133
    %2135 = vrot.lane.b32.xlu0 %v2104, 18
    %v2136 = vpop.permute.xlu0 %2135
    %v2153 = vrot.slane %v1783, 4
    %v2154 = vrot.slane %v1784, 4
    %v2155 = vsel %vm783, %v2153, %v2154
    %v2156 = vrot.slane %v1785, 4
    %v2157 = vrot.slane %v1786, 4
    %v2158 = vsel %vm783, %v2156, %v2157
    %v2159 = vrot.slane %v1787, 4
    %v2160 = vrot.slane %v1788, 4
    %v2161 = vsel %vm783, %v2159, %v2160
    %v2162 = vrot.slane %v1789, 4
    %v2163 = vrot.slane %v1790, 4
    %v2164 = vsel %vm783, %v2162, %v2163
    %v2165 = vrot.slane %v1791, 4
    %v2166 = vrot.slane %v1792, 4
    %v2167 = vsel %vm783, %v2165, %v2166
    %v2168 = vrot.slane %v1793, 4
    %v2169 = vrot.slane %v1794, 4
    %v2170 = vsel %vm783, %v2168, %v2169
    %v2171 = vrot.slane %v1795, 4
    %v2172 = vrot.slane %v1796, 4
    %v2173 = vsel %vm783, %v2171, %v2172
    %v2174 = vrot.slane %v1797, 4
    %v2175 = vrot.slane %v1798, 4
    %v2176 = vsel %vm783, %v2174, %v2175
    %v2177 = vrot.slane %v1807, 4
    %v2178 = vrot.slane %v1808, 4
    %v2179 = vsel %vm783, %v2177, %v2178
    %v2180 = vrot.slane %v1809, 4
    %v2181 = vrot.slane %v1810, 4
    %v2182 = vsel %vm783, %v2180, %v2181
    %v2183 = vrot.slane %v1811, 4
    %v2184 = vrot.slane %v1812, 4
    %v2185 = vsel %vm783, %v2183, %v2184
    %v2186 = vrot.slane %v1813, 4
    %v2187 = vrot.slane %v1814, 4
    %v2188 = vsel %vm783, %v2186, %v2187
    %v2189 = vrot.slane %v1815, 4
    %v2190 = vrot.slane %v1816, 4
    %v2191 = vsel %vm783, %v2189, %v2190
    %v2192 = vrot.slane %v1817, 4
    %v2193 = vrot.slane %v1818, 4
    %v2194 = vsel %vm783, %v2192, %v2193
    %v2195 = vrot.slane %v1819, 4
    %v2196 = vrot.slane %v1820, 4
    %v2197 = vsel %vm783, %v2195, %v2196
    %v2198 = vrot.slane %v1821, 4
    %v2199 = vrot.slane %v1822, 4
    %v2200 = vsel %vm783, %v2198, %v2199
    %2201 = vrot.lane.b32.xlu0 %v2155, 24
    %v2202 = vpop.permute.xlu0 %2201
    %2203 = vrot.lane.b32.xlu0 %v2158, 24
    %v2204 = vpop.permute.xlu0 %2203
    %2205 = vrot.lane.b32.xlu0 %v2161, 24
    %v2206 = vpop.permute.xlu0 %2205
    %2207 = vrot.lane.b32.xlu0 %v2164, 24
    %v2208 = vpop.permute.xlu0 %2207
    %2209 = vrot.lane.b32.xlu0 %v2167, 24
    %v2210 = vpop.permute.xlu0 %2209
    %2211 = vrot.lane.b32.xlu0 %v2170, 24
    %v2212 = vpop.permute.xlu0 %2211
    %2213 = vrot.lane.b32.xlu0 %v2173, 24
    %v2214 = vpop.permute.xlu0 %2213
    %2215 = vrot.lane.b32.xlu0 %v2176, 24
    %v2216 = vpop.permute.xlu0 %2215
    %2217 = vrot.lane.b32.xlu0 %v2179, 24
    %v2218 = vpop.permute.xlu0 %2217
    %2219 = vrot.lane.b32.xlu0 %v2182, 24
    %v2220 = vpop.permute.xlu0 %2219
    %2221 = vrot.lane.b32.xlu0 %v2185, 24
    %v2222 = vpop.permute.xlu0 %2221
    %2223 = vrot.lane.b32.xlu0 %v2188, 24
    %v2224 = vpop.permute.xlu0 %2223
    %2225 = vrot.lane.b32.xlu0 %v2191, 24
    %v2226 = vpop.permute.xlu0 %2225
    %2227 = vrot.lane.b32.xlu0 %v2194, 24
    %v2228 = vpop.permute.xlu0 %2227
    %2229 = vrot.lane.b32.xlu0 %v2197, 24
    %v2230 = vpop.permute.xlu0 %2229
    %2231 = vrot.lane.b32.xlu0 %v2200, 24
    %v2232 = vpop.permute.xlu0 %2231
    %2251 = vrot.lane.b32.xlu0 %v1785, 30
    %v2252 = vpop.permute.xlu0 %2251
    %2253 = vrot.lane.b32.xlu0 %v1787, 30
    %v2254 = vpop.permute.xlu0 %2253
    %2255 = vrot.lane.b32.xlu0 %v1789, 30
    %v2256 = vpop.permute.xlu0 %2255
    %2257 = vrot.lane.b32.xlu0 %v1791, 30
    %v2258 = vpop.permute.xlu0 %2257
    %2259 = vrot.lane.b32.xlu0 %v1793, 30
    %v2260 = vpop.permute.xlu0 %2259
    %2261 = vrot.lane.b32.xlu0 %v1795, 30
    %v2262 = vpop.permute.xlu0 %2261
    %2263 = vrot.lane.b32.xlu0 %v1797, 30
    %v2264 = vpop.permute.xlu0 %2263
    %2265 = vrot.lane.b32.xlu0 %v1799, 30
    %v2266 = vpop.permute.xlu0 %2265
    %2267 = vrot.lane.b32.xlu0 %v1809, 30
    %v2268 = vpop.permute.xlu0 %2267
    %2269 = vrot.lane.b32.xlu0 %v1811, 30
    %v2270 = vpop.permute.xlu0 %2269
    %2271 = vrot.lane.b32.xlu0 %v1813, 30
    %v2272 = vpop.permute.xlu0 %2271
    %2273 = vrot.lane.b32.xlu0 %v1815, 30
    %v2274 = vpop.permute.xlu0 %2273
    %2275 = vrot.lane.b32.xlu0 %v1817, 30
    %v2276 = vpop.permute.xlu0 %2275
    %2277 = vrot.lane.b32.xlu0 %v1819, 30
    %v2278 = vpop.permute.xlu0 %2277
    %2279 = vrot.lane.b32.xlu0 %v1821, 30
    %v2280 = vpop.permute.xlu0 %2279
    %2281 = vrot.lane.b32.xlu0 %v1823, 30
    %v2282 = vpop.permute.xlu0 %2281
    %v2301 = vrot.slane %v1799, 1
    %v2302 = vrot.slane %v1800, 1
    %v2303 = vsel %vm1863, %v2301, %v2302
    %v2304 = vrot.slane %v1823, 1
    %v2305 = vrot.slane %v1824, 1
    %v2306 = vsel %vm1863, %v2304, %v2305
    %2307 = vrot.lane.b32.xlu0 %v1869, 36
    %v2308 = vpop.permute.xlu0 %2307
    %2309 = vrot.lane.b32.xlu0 %v1872, 36
    %v2310 = vpop.permute.xlu0 %2309
    %2311 = vrot.lane.b32.xlu0 %v1875, 36
    %v2312 = vpop.permute.xlu0 %2311
    %2313 = vrot.lane.b32.xlu0 %v1878, 36
    %v2314 = vpop.permute.xlu0 %2313
    %2315 = vrot.lane.b32.xlu0 %v1881, 36
    %v2316 = vpop.permute.xlu0 %2315
    %2317 = vrot.lane.b32.xlu0 %v1884, 36
    %v2318 = vpop.permute.xlu0 %2317
    %2319 = vrot.lane.b32.xlu0 %v1887, 36
    %v2320 = vpop.permute.xlu0 %2319
    %2321 = vrot.lane.b32.xlu0 %v2303, 36
    %v2322 = vpop.permute.xlu0 %2321
    %2323 = vrot.lane.b32.xlu0 %v1893, 36
    %v2324 = vpop.permute.xlu0 %2323
    %2325 = vrot.lane.b32.xlu0 %v1896, 36
    %v2326 = vpop.permute.xlu0 %2325
    %2327 = vrot.lane.b32.xlu0 %v1899, 36
    %v2328 = vpop.permute.xlu0 %2327
    %2329 = vrot.lane.b32.xlu0 %v1902, 36
    %v2330 = vpop.permute.xlu0 %2329
    %2331 = vrot.lane.b32.xlu0 %v1905, 36
    %v2332 = vpop.permute.xlu0 %2331
    %2333 = vrot.lane.b32.xlu0 %v1908, 36
    %v2334 = vpop.permute.xlu0 %2333
    %2335 = vrot.lane.b32.xlu0 %v1911, 36
    %v2336 = vpop.permute.xlu0 %2335
    %2337 = vrot.lane.b32.xlu0 %v2306, 36
    %v2338 = vpop.permute.xlu0 %2337
    %v2355 = vrot.slane %v1799, 2
    %v2356 = vrot.slane %v1800, 2
    %v2357 = vsel %vm1960, %v2355, %v2356
    %v2358 = vrot.slane %v1823, 2
    %v2359 = vrot.slane %v1824, 2
    %v2360 = vsel %vm1960, %v2358, %v2359
    %2361 = vrot.lane.b32.xlu0 %v1966, 42
    %v2362 = vpop.permute.xlu0 %2361
    %2363 = vrot.lane.b32.xlu0 %v1969, 42
    %v2364 = vpop.permute.xlu0 %2363
    %2365 = vrot.lane.b32.xlu0 %v1972, 42
    %v2366 = vpop.permute.xlu0 %2365
    %2367 = vrot.lane.b32.xlu0 %v1975, 42
    %v2368 = vpop.permute.xlu0 %2367
    %2369 = vrot.lane.b32.xlu0 %v1978, 42
    %v2370 = vpop.permute.xlu0 %2369
    %2371 = vrot.lane.b32.xlu0 %v1981, 42
    %v2372 = vpop.permute.xlu0 %2371
    %2373 = vrot.lane.b32.xlu0 %v1984, 42
    %v2374 = vpop.permute.xlu0 %2373
    %2375 = vrot.lane.b32.xlu0 %v2357, 42
    %v2376 = vpop.permute.xlu0 %2375
    %2377 = vrot.lane.b32.xlu0 %v1990, 42
    %v2378 = vpop.permute.xlu0 %2377
    %2379 = vrot.lane.b32.xlu0 %v1993, 42
    %v2380 = vpop.permute.xlu0 %2379
    %2381 = vrot.lane.b32.xlu0 %v1996, 42
    %v2382 = vpop.permute.xlu0 %2381
    %2383 = vrot.lane.b32.xlu0 %v1999, 42
    %v2384 = vpop.permute.xlu0 %2383
    %2385 = vrot.lane.b32.xlu0 %v2002, 42
    %v2386 = vpop.permute.xlu0 %2385
    %2387 = vrot.lane.b32.xlu0 %v2005, 42
    %v2388 = vpop.permute.xlu0 %2387
    %2389 = vrot.lane.b32.xlu0 %v2008, 42
    %v2390 = vpop.permute.xlu0 %2389
    %2391 = vrot.lane.b32.xlu0 %v2360, 42
    %v2392 = vpop.permute.xlu0 %2391
    %v2409 = vrot.slane %v1799, 3
    %v2410 = vrot.slane %v1800, 3
    %v2411 = vsel %vm784, %v2409, %v2410
    %v2412 = vrot.slane %v1823, 3
    %v2413 = vrot.slane %v1824, 3
    %v2414 = vsel %vm784, %v2412, %v2413
    %2415 = vrot.lane.b32.xlu0 %v2062, 48
    %v2416 = vpop.permute.xlu0 %2415
    %2417 = vrot.lane.b32.xlu0 %v2065, 48
    %v2418 = vpop.permute.xlu0 %2417
    %2419 = vrot.lane.b32.xlu0 %v2068, 48
    %v2420 = vpop.permute.xlu0 %2419
    %2421 = vrot.lane.b32.xlu0 %v2071, 48
    %v2422 = vpop.permute.xlu0 %2421
    %2423 = vrot.lane.b32.xlu0 %v2074, 48
    %v2424 = vpop.permute.xlu0 %2423
    %2425 = vrot.lane.b32.xlu0 %v2077, 48
    %v2426 = vpop.permute.xlu0 %2425
    %2427 = vrot.lane.b32.xlu0 %v2080, 48
    %v2428 = vpop.permute.xlu0 %2427
    %2429 = vrot.lane.b32.xlu0 %v2411, 48
    %v2430 = vpop.permute.xlu0 %2429
    %2431 = vrot.lane.b32.xlu0 %v2086, 48
    %v2432 = vpop.permute.xlu0 %2431
    %2433 = vrot.lane.b32.xlu0 %v2089, 48
    %v2434 = vpop.permute.xlu0 %2433
    %2435 = vrot.lane.b32.xlu0 %v2092, 48
    %v2436 = vpop.permute.xlu0 %2435
    %2437 = vrot.lane.b32.xlu0 %v2095, 48
    %v2438 = vpop.permute.xlu0 %2437
    %2439 = vrot.lane.b32.xlu0 %v2098, 48
    %v2440 = vpop.permute.xlu0 %2439
    %2441 = vrot.lane.b32.xlu0 %v2101, 48
    %v2442 = vpop.permute.xlu0 %2441
    %2443 = vrot.lane.b32.xlu0 %v2104, 48
    %v2444 = vpop.permute.xlu0 %2443
    %2445 = vrot.lane.b32.xlu0 %v2414, 48
    %v2446 = vpop.permute.xlu0 %2445
    %v2463 = vrot.slane %v1799, 4
    %v2464 = vrot.slane %v1800, 4
    %v2465 = vsel %vm783, %v2463, %v2464
    %v2466 = vrot.slane %v1823, 4
    %v2467 = vrot.slane %v1824, 4
    %v2468 = vsel %vm783, %v2466, %v2467
    %2469 = vrot.lane.b32.xlu0 %v2158, 54
    %v2470 = vpop.permute.xlu0 %2469
    %2471 = vrot.lane.b32.xlu0 %v2161, 54
    %v2472 = vpop.permute.xlu0 %2471
    %2473 = vrot.lane.b32.xlu0 %v2164, 54
    %v2474 = vpop.permute.xlu0 %2473
    %2475 = vrot.lane.b32.xlu0 %v2167, 54
    %v2476 = vpop.permute.xlu0 %2475
    %2477 = vrot.lane.b32.xlu0 %v2170, 54
    %v2478 = vpop.permute.xlu0 %2477
    %2479 = vrot.lane.b32.xlu0 %v2173, 54
    %v2480 = vpop.permute.xlu0 %2479
    %2481 = vrot.lane.b32.xlu0 %v2176, 54
    %v2482 = vpop.permute.xlu0 %2481
    %2483 = vrot.lane.b32.xlu0 %v2465, 54
    %v2484 = vpop.permute.xlu0 %2483
    %2485 = vrot.lane.b32.xlu0 %v2182, 54
    %v2486 = vpop.permute.xlu0 %2485
    %2487 = vrot.lane.b32.xlu0 %v2185, 54
    %v2488 = vpop.permute.xlu0 %2487
    %2489 = vrot.lane.b32.xlu0 %v2188, 54
    %v2490 = vpop.permute.xlu0 %2489
    %2491 = vrot.lane.b32.xlu0 %v2191, 54
    %v2492 = vpop.permute.xlu0 %2491
    %2493 = vrot.lane.b32.xlu0 %v2194, 54
    %v2494 = vpop.permute.xlu0 %2493
    %2495 = vrot.lane.b32.xlu0 %v2197, 54
    %v2496 = vpop.permute.xlu0 %2495
    %2497 = vrot.lane.b32.xlu0 %v2200, 54
    %v2498 = vpop.permute.xlu0 %2497
    %2499 = vrot.lane.b32.xlu0 %v2468, 54
    %v2500 = vpop.permute.xlu0 %2499
    %2519 = vrot.lane.b32.xlu0 %v1787, 60
    %v2520 = vpop.permute.xlu0 %2519
    %2521 = vrot.lane.b32.xlu0 %v1789, 60
    %v2522 = vpop.permute.xlu0 %2521
    %2523 = vrot.lane.b32.xlu0 %v1791, 60
    %v2524 = vpop.permute.xlu0 %2523
    %2525 = vrot.lane.b32.xlu0 %v1793, 60
    %v2526 = vpop.permute.xlu0 %2525
    %2527 = vrot.lane.b32.xlu0 %v1795, 60
    %v2528 = vpop.permute.xlu0 %2527
    %2529 = vrot.lane.b32.xlu0 %v1797, 60
    %v2530 = vpop.permute.xlu0 %2529
    %2531 = vrot.lane.b32.xlu0 %v1799, 60
    %v2532 = vpop.permute.xlu0 %2531
    %2533 = vrot.lane.b32.xlu0 %v1801, 60
    %v2534 = vpop.permute.xlu0 %2533
    %2535 = vrot.lane.b32.xlu0 %v1811, 60
    %v2536 = vpop.permute.xlu0 %2535
    %2537 = vrot.lane.b32.xlu0 %v1813, 60
    %v2538 = vpop.permute.xlu0 %2537
    %2539 = vrot.lane.b32.xlu0 %v1815, 60
    %v2540 = vpop.permute.xlu0 %2539
    %2541 = vrot.lane.b32.xlu0 %v1817, 60
    %v2542 = vpop.permute.xlu0 %2541
    %2543 = vrot.lane.b32.xlu0 %v1819, 60
    %v2544 = vpop.permute.xlu0 %2543
    %2545 = vrot.lane.b32.xlu0 %v1821, 60
    %v2546 = vpop.permute.xlu0 %2545
    %2547 = vrot.lane.b32.xlu0 %v1823, 60
    %v2548 = vpop.permute.xlu0 %2547
    %2549 = vrot.lane.b32.xlu0 %v1825, 60
    %v2550 = vpop.permute.xlu0 %2549
    %v2569 = vrot.slane %v1801, 1
    %v2570 = vrot.slane %v1802, 1
    %v2571 = vsel %vm1863, %v2569, %v2570
    %v2572 = vrot.slane %v1825, 1
    %v2573 = vrot.slane %v1826, 1
    %v2574 = vsel %vm1863, %v2572, %v2573
    %2575 = vrot.lane.b32.xlu0 %v1872, 66
    %v2576 = vpop.permute.xlu0 %2575
    %2577 = vrot.lane.b32.xlu0 %v1875, 66
    %v2578 = vpop.permute.xlu0 %2577
    %2579 = vrot.lane.b32.xlu0 %v1878, 66
    %v2580 = vpop.permute.xlu0 %2579
    %2581 = vrot.lane.b32.xlu0 %v1881, 66
    %v2582 = vpop.permute.xlu0 %2581
    %2583 = vrot.lane.b32.xlu0 %v1884, 66
    %v2584 = vpop.permute.xlu0 %2583
    %2585 = vrot.lane.b32.xlu0 %v1887, 66
    %v2586 = vpop.permute.xlu0 %2585
    %2587 = vrot.lane.b32.xlu0 %v2303, 66
    %v2588 = vpop.permute.xlu0 %2587
    %2589 = vrot.lane.b32.xlu0 %v2571, 66
    %v2590 = vpop.permute.xlu0 %2589
    %2591 = vrot.lane.b32.xlu0 %v1896, 66
    %v2592 = vpop.permute.xlu0 %2591
    %2593 = vrot.lane.b32.xlu0 %v1899, 66
    %v2594 = vpop.permute.xlu0 %2593
    %2595 = vrot.lane.b32.xlu0 %v1902, 66
    %v2596 = vpop.permute.xlu0 %2595
    %2597 = vrot.lane.b32.xlu0 %v1905, 66
    %v2598 = vpop.permute.xlu0 %2597
    %2599 = vrot.lane.b32.xlu0 %v1908, 66
    %v2600 = vpop.permute.xlu0 %2599
    %2601 = vrot.lane.b32.xlu0 %v1911, 66
    %v2602 = vpop.permute.xlu0 %2601
    %2603 = vrot.lane.b32.xlu0 %v2306, 66
    %v2604 = vpop.permute.xlu0 %2603
    %2605 = vrot.lane.b32.xlu0 %v2574, 66
    %v2606 = vpop.permute.xlu0 %2605
    %v2623 = vrot.slane %v1801, 2
    %v2624 = vrot.slane %v1802, 2
    %v2625 = vsel %vm1960, %v2623, %v2624
    %v2626 = vrot.slane %v1825, 2
    %v2627 = vrot.slane %v1826, 2
    %v2628 = vsel %vm1960, %v2626, %v2627
    %2629 = vrot.lane.b32.xlu0 %v1969, 72
    %v2630 = vpop.permute.xlu0 %2629
    %2631 = vrot.lane.b32.xlu0 %v1972, 72
    %v2632 = vpop.permute.xlu0 %2631
    %2633 = vrot.lane.b32.xlu0 %v1975, 72
    %v2634 = vpop.permute.xlu0 %2633
    %2635 = vrot.lane.b32.xlu0 %v1978, 72
    %v2636 = vpop.permute.xlu0 %2635
    %2637 = vrot.lane.b32.xlu0 %v1981, 72
    %v2638 = vpop.permute.xlu0 %2637
    %2639 = vrot.lane.b32.xlu0 %v1984, 72
    %v2640 = vpop.permute.xlu0 %2639
    %2641 = vrot.lane.b32.xlu0 %v2357, 72
    %v2642 = vpop.permute.xlu0 %2641
    %2643 = vrot.lane.b32.xlu0 %v2625, 72
    %v2644 = vpop.permute.xlu0 %2643
    %2645 = vrot.lane.b32.xlu0 %v1993, 72
    %v2646 = vpop.permute.xlu0 %2645
    %2647 = vrot.lane.b32.xlu0 %v1996, 72
    %v2648 = vpop.permute.xlu0 %2647
    %2649 = vrot.lane.b32.xlu0 %v1999, 72
    %v2650 = vpop.permute.xlu0 %2649
    %2651 = vrot.lane.b32.xlu0 %v2002, 72
    %v2652 = vpop.permute.xlu0 %2651
    %2653 = vrot.lane.b32.xlu0 %v2005, 72
    %v2654 = vpop.permute.xlu0 %2653
    %2655 = vrot.lane.b32.xlu0 %v2008, 72
    %v2656 = vpop.permute.xlu0 %2655
    %2657 = vrot.lane.b32.xlu0 %v2360, 72
    %v2658 = vpop.permute.xlu0 %2657
    %2659 = vrot.lane.b32.xlu0 %v2628, 72
    %v2660 = vpop.permute.xlu0 %2659
    %v2677 = vrot.slane %v1801, 3
    %v2678 = vrot.slane %v1802, 3
    %v2679 = vsel %vm784, %v2677, %v2678
    %v2680 = vrot.slane %v1825, 3
    %v2681 = vrot.slane %v1826, 3
    %v2682 = vsel %vm784, %v2680, %v2681
    %2683 = vrot.lane.b32.xlu0 %v2065, 78
    %v2684 = vpop.permute.xlu0 %2683
    %2685 = vrot.lane.b32.xlu0 %v2068, 78
    %v2686 = vpop.permute.xlu0 %2685
    %2687 = vrot.lane.b32.xlu0 %v2071, 78
    %v2688 = vpop.permute.xlu0 %2687
    %2689 = vrot.lane.b32.xlu0 %v2074, 78
    %v2690 = vpop.permute.xlu0 %2689
    %2691 = vrot.lane.b32.xlu0 %v2077, 78
    %v2692 = vpop.permute.xlu0 %2691
    %2693 = vrot.lane.b32.xlu0 %v2080, 78
    %v2694 = vpop.permute.xlu0 %2693
    %2695 = vrot.lane.b32.xlu0 %v2411, 78
    %v2696 = vpop.permute.xlu0 %2695
    %2697 = vrot.lane.b32.xlu0 %v2679, 78
    %v2698 = vpop.permute.xlu0 %2697
    %2699 = vrot.lane.b32.xlu0 %v2089, 78
    %v2700 = vpop.permute.xlu0 %2699
    %2701 = vrot.lane.b32.xlu0 %v2092, 78
    %v2702 = vpop.permute.xlu0 %2701
    %2703 = vrot.lane.b32.xlu0 %v2095, 78
    %v2704 = vpop.permute.xlu0 %2703
    %2705 = vrot.lane.b32.xlu0 %v2098, 78
    %v2706 = vpop.permute.xlu0 %2705
    %2707 = vrot.lane.b32.xlu0 %v2101, 78
    %v2708 = vpop.permute.xlu0 %2707
    %2709 = vrot.lane.b32.xlu0 %v2104, 78
    %v2710 = vpop.permute.xlu0 %2709
    %2711 = vrot.lane.b32.xlu0 %v2414, 78
    %v2712 = vpop.permute.xlu0 %2711
    %2713 = vrot.lane.b32.xlu0 %v2682, 78
    %v2714 = vpop.permute.xlu0 %2713
    %v2731 = vrot.slane %v1801, 4
    %v2732 = vrot.slane %v1802, 4
    %v2733 = vsel %vm783, %v2731, %v2732
    %v2734 = vrot.slane %v1825, 4
    %v2735 = vrot.slane %v1826, 4
    %v2736 = vsel %vm783, %v2734, %v2735
    %2737 = vrot.lane.b32.xlu0 %v2161, 84
    %v2738 = vpop.permute.xlu0 %2737
    %2739 = vrot.lane.b32.xlu0 %v2164, 84
    %v2740 = vpop.permute.xlu0 %2739
    %2741 = vrot.lane.b32.xlu0 %v2167, 84
    %v2742 = vpop.permute.xlu0 %2741
    %2743 = vrot.lane.b32.xlu0 %v2170, 84
    %v2744 = vpop.permute.xlu0 %2743
    %2745 = vrot.lane.b32.xlu0 %v2173, 84
    %v2746 = vpop.permute.xlu0 %2745
    %2747 = vrot.lane.b32.xlu0 %v2176, 84
    %v2748 = vpop.permute.xlu0 %2747
    %2749 = vrot.lane.b32.xlu0 %v2465, 84
    %v2750 = vpop.permute.xlu0 %2749
    %2751 = vrot.lane.b32.xlu0 %v2733, 84
    %v2752 = vpop.permute.xlu0 %2751
    %2753 = vrot.lane.b32.xlu0 %v2185, 84
    %v2754 = vpop.permute.xlu0 %2753
    %2755 = vrot.lane.b32.xlu0 %v2188, 84
    %v2756 = vpop.permute.xlu0 %2755
    %2757 = vrot.lane.b32.xlu0 %v2191, 84
    %v2758 = vpop.permute.xlu0 %2757
    %2759 = vrot.lane.b32.xlu0 %v2194, 84
    %v2760 = vpop.permute.xlu0 %2759
    %2761 = vrot.lane.b32.xlu0 %v2197, 84
    %v2762 = vpop.permute.xlu0 %2761
    %2763 = vrot.lane.b32.xlu0 %v2200, 84
    %v2764 = vpop.permute.xlu0 %2763
    %2765 = vrot.lane.b32.xlu0 %v2468, 84
    %v2766 = vpop.permute.xlu0 %2765
    %2767 = vrot.lane.b32.xlu0 %v2736, 84
    %v2768 = vpop.permute.xlu0 %2767
    %2787 = vrot.lane.b32.xlu0 %v1789, 90
    %v2788 = vpop.permute.xlu0 %2787
    %2789 = vrot.lane.b32.xlu0 %v1791, 90
    %v2790 = vpop.permute.xlu0 %2789
    %2791 = vrot.lane.b32.xlu0 %v1793, 90
    %v2792 = vpop.permute.xlu0 %2791
    %2793 = vrot.lane.b32.xlu0 %v1795, 90
    %v2794 = vpop.permute.xlu0 %2793
    %2795 = vrot.lane.b32.xlu0 %v1797, 90
    %v2796 = vpop.permute.xlu0 %2795
    %2797 = vrot.lane.b32.xlu0 %v1799, 90
    %v2798 = vpop.permute.xlu0 %2797
    %2799 = vrot.lane.b32.xlu0 %v1801, 90
    %v2800 = vpop.permute.xlu0 %2799
    %2801 = vrot.lane.b32.xlu0 %v1803, 90
    %v2802 = vpop.permute.xlu0 %2801
    %2803 = vrot.lane.b32.xlu0 %v1813, 90
    %v2804 = vpop.permute.xlu0 %2803
    %2805 = vrot.lane.b32.xlu0 %v1815, 90
    %v2806 = vpop.permute.xlu0 %2805
    %2807 = vrot.lane.b32.xlu0 %v1817, 90
    %v2808 = vpop.permute.xlu0 %2807
    %2809 = vrot.lane.b32.xlu0 %v1819, 90
    %v2810 = vpop.permute.xlu0 %2809
    %2811 = vrot.lane.b32.xlu0 %v1821, 90
    %v2812 = vpop.permute.xlu0 %2811
    %2813 = vrot.lane.b32.xlu0 %v1823, 90
    %v2814 = vpop.permute.xlu0 %2813
    %2815 = vrot.lane.b32.xlu0 %v1825, 90
    %v2816 = vpop.permute.xlu0 %2815
    %2817 = vrot.lane.b32.xlu0 %v1827, 90
    %v2818 = vpop.permute.xlu0 %2817
    %vm2835 = vcmask 48128
    %v2836 = vsel %vm2835, %v1783, %v1913
    %v2837 = vsel %vm2835, %v1785, %v1915
    %v2838 = vsel %vm2835, %v1787, %v1917
    %v2839 = vsel %vm2835, %v1789, %v1919
    %v2840 = vsel %vm2835, %v1791, %v1921
    %v2841 = vsel %vm2835, %v1793, %v1923
    %v2842 = vsel %vm2835, %v1795, %v1925
    %v2843 = vsel %vm2835, %v1797, %v1927
    %v2844 = vsel %vm2835, %v1807, %v1929
    %v2845 = vsel %vm2835, %v1809, %v1931
    %v2846 = vsel %vm2835, %v1811, %v1933
    %v2847 = vsel %vm2835, %v1813, %v1935
    %v2848 = vsel %vm2835, %v1815, %v1937
    %v2849 = vsel %vm2835, %v1817, %v1939
    %v2850 = vsel %vm2835, %v1819, %v1941
    %v2851 = vsel %vm2835, %v1821, %v1943
    %vm2852 = vcmask 97280
    %v2853 = vsel %vm2852, %v2836, %v2010
    %v2854 = vsel %vm2852, %v2837, %v2012
    %v2855 = vsel %vm2852, %v2838, %v2014
    %v2856 = vsel %vm2852, %v2839, %v2016
    %v2857 = vsel %vm2852, %v2840, %v2018
    %v2858 = vsel %vm2852, %v2841, %v2020
    %v2859 = vsel %vm2852, %v2842, %v2022
    %v2860 = vsel %vm2852, %v2843, %v2024
    %v2861 = vsel %vm2852, %v2844, %v2026
    %v2862 = vsel %vm2852, %v2845, %v2028
    %v2863 = vsel %vm2852, %v2846, %v2030
    %v2864 = vsel %vm2852, %v2847, %v2032
    %v2865 = vsel %vm2852, %v2848, %v2034
    %v2866 = vsel %vm2852, %v2849, %v2036
    %v2867 = vsel %vm2852, %v2850, %v2038
    %v2868 = vsel %vm2852, %v2851, %v2040
    %vm2869 = vcmask 146432
    %v2870 = vsel %vm2869, %v2853, %v2106
    %v2871 = vsel %vm2869, %v2854, %v2108
    %v2872 = vsel %vm2869, %v2855, %v2110
    %v2873 = vsel %vm2869, %v2856, %v2112
    %v2874 = vsel %vm2869, %v2857, %v2114
    %v2875 = vsel %vm2869, %v2858, %v2116
    %v2876 = vsel %vm2869, %v2859, %v2118
    %v2877 = vsel %vm2869, %v2860, %v2120
    %v2878 = vsel %vm2869, %v2861, %v2122
    %v2879 = vsel %vm2869, %v2862, %v2124
    %v2880 = vsel %vm2869, %v2863, %v2126
    %v2881 = vsel %vm2869, %v2864, %v2128
    %v2882 = vsel %vm2869, %v2865, %v2130
    %v2883 = vsel %vm2869, %v2866, %v2132
    %v2884 = vsel %vm2869, %v2867, %v2134
    %v2885 = vsel %vm2869, %v2868, %v2136
    %vm2886 = vcmask 195584
    %v2887 = vsel %vm2886, %v2870, %v2202
    %v2888 = vsel %vm2886, %v2871, %v2204
    %v2889 = vsel %vm2886, %v2872, %v2206
    %v2890 = vsel %vm2886, %v2873, %v2208
    %v2891 = vsel %vm2886, %v2874, %v2210
    %v2892 = vsel %vm2886, %v2875, %v2212
    %v2893 = vsel %vm2886, %v2876, %v2214
    %v2894 = vsel %vm2886, %v2877, %v2216
    %v2895 = vsel %vm2886, %v2878, %v2218
    %v2896 = vsel %vm2886, %v2879, %v2220
    %v2897 = vsel %vm2886, %v2880, %v2222
    %v2898 = vsel %vm2886, %v2881, %v2224
    %v2899 = vsel %vm2886, %v2882, %v2226
    %v2900 = vsel %vm2886, %v2883, %v2228
    %v2901 = vsel %vm2886, %v2884, %v2230
    %v2902 = vsel %vm2886, %v2885, %v2232
    %vm2903 = vcmask 244736
    %v2904 = vsel %vm2903, %v2887, %v2252
    %v2905 = vsel %vm2903, %v2888, %v2254
    %v2906 = vsel %vm2903, %v2889, %v2256
    %v2907 = vsel %vm2903, %v2890, %v2258
    %v2908 = vsel %vm2903, %v2891, %v2260
    %v2909 = vsel %vm2903, %v2892, %v2262
    %v2910 = vsel %vm2903, %v2893, %v2264
    %v2911 = vsel %vm2903, %v2894, %v2266
    %v2912 = vsel %vm2903, %v2895, %v2268
    %v2913 = vsel %vm2903, %v2896, %v2270
    %v2914 = vsel %vm2903, %v2897, %v2272
    %v2915 = vsel %vm2903, %v2898, %v2274
    %v2916 = vsel %vm2903, %v2899, %v2276
    %v2917 = vsel %vm2903, %v2900, %v2278
    %v2918 = vsel %vm2903, %v2901, %v2280
    %v2919 = vsel %vm2903, %v2902, %v2282
    %vm2920 = vcmask 293888
    %v2921 = vsel %vm2920, %v2904, %v2308
    %v2922 = vsel %vm2920, %v2905, %v2310
    %v2923 = vsel %vm2920, %v2906, %v2312
    %v2924 = vsel %vm2920, %v2907, %v2314
    %v2925 = vsel %vm2920, %v2908, %v2316
    %v2926 = vsel %vm2920, %v2909, %v2318
    %v2927 = vsel %vm2920, %v2910, %v2320
    %v2928 = vsel %vm2920, %v2911, %v2322
    %v2929 = vsel %vm2920, %v2912, %v2324
    %v2930 = vsel %vm2920, %v2913, %v2326
    %v2931 = vsel %vm2920, %v2914, %v2328
    %v2932 = vsel %vm2920, %v2915, %v2330
    %v2933 = vsel %vm2920, %v2916, %v2332
    %v2934 = vsel %vm2920, %v2917, %v2334
    %v2935 = vsel %vm2920, %v2918, %v2336
    %v2936 = vsel %vm2920, %v2919, %v2338
    %vm2937 = vcmask 343040
    %v2938 = vsel %vm2937, %v2921, %v2362
    %v2939 = vsel %vm2937, %v2922, %v2364
    %v2940 = vsel %vm2937, %v2923, %v2366
    %v2941 = vsel %vm2937, %v2924, %v2368
    %v2942 = vsel %vm2937, %v2925, %v2370
    %v2943 = vsel %vm2937, %v2926, %v2372
    %v2944 = vsel %vm2937, %v2927, %v2374
    %v2945 = vsel %vm2937, %v2928, %v2376
    %v2946 = vsel %vm2937, %v2929, %v2378
    %v2947 = vsel %vm2937, %v2930, %v2380
    %v2948 = vsel %vm2937, %v2931, %v2382
    %v2949 = vsel %vm2937, %v2932, %v2384
    %v2950 = vsel %vm2937, %v2933, %v2386
    %v2951 = vsel %vm2937, %v2934, %v2388
    %v2952 = vsel %vm2937, %v2935, %v2390
    %v2953 = vsel %vm2937, %v2936, %v2392
    %vm2954 = vcmask 392192
    %v2955 = vsel %vm2954, %v2938, %v2416
    %v2956 = vsel %vm2954, %v2939, %v2418
    %v2957 = vsel %vm2954, %v2940, %v2420
    %v2958 = vsel %vm2954, %v2941, %v2422
    %v2959 = vsel %vm2954, %v2942, %v2424
    %v2960 = vsel %vm2954, %v2943, %v2426
    %v2961 = vsel %vm2954, %v2944, %v2428
    %v2962 = vsel %vm2954, %v2945, %v2430
    %v2963 = vsel %vm2954, %v2946, %v2432
    %v2964 = vsel %vm2954, %v2947, %v2434
    %v2965 = vsel %vm2954, %v2948, %v2436
    %v2966 = vsel %vm2954, %v2949, %v2438
    %v2967 = vsel %vm2954, %v2950, %v2440
    %v2968 = vsel %vm2954, %v2951, %v2442
    %v2969 = vsel %vm2954, %v2952, %v2444
    %v2970 = vsel %vm2954, %v2953, %v2446
    %vm2971 = vcmask 441344
    %v2972 = vsel %vm2971, %v2955, %v2470
    %v2973 = vsel %vm2971, %v2956, %v2472
    %v2974 = vsel %vm2971, %v2957, %v2474
    %v2975 = vsel %vm2971, %v2958, %v2476
    %v2976 = vsel %vm2971, %v2959, %v2478
    %v2977 = vsel %vm2971, %v2960, %v2480
    %v2978 = vsel %vm2971, %v2961, %v2482
    %v2979 = vsel %vm2971, %v2962, %v2484
    %v2980 = vsel %vm2971, %v2963, %v2486
    %v2981 = vsel %vm2971, %v2964, %v2488
    %v2982 = vsel %vm2971, %v2965, %v2490
    %v2983 = vsel %vm2971, %v2966, %v2492
    %v2984 = vsel %vm2971, %v2967, %v2494
    %v2985 = vsel %vm2971, %v2968, %v2496
    %v2986 = vsel %vm2971, %v2969, %v2498
    %v2987 = vsel %vm2971, %v2970, %v2500
    %vm2988 = vcmask 490496
    %v2989 = vsel %vm2988, %v2972, %v2520
    %v2990 = vsel %vm2988, %v2973, %v2522
    %v2991 = vsel %vm2988, %v2974, %v2524
    %v2992 = vsel %vm2988, %v2975, %v2526
    %v2993 = vsel %vm2988, %v2976, %v2528
    %v2994 = vsel %vm2988, %v2977, %v2530
    %v2995 = vsel %vm2988, %v2978, %v2532
    %v2996 = vsel %vm2988, %v2979, %v2534
    %v2997 = vsel %vm2988, %v2980, %v2536
    %v2998 = vsel %vm2988, %v2981, %v2538
    %v2999 = vsel %vm2988, %v2982, %v2540
    %v3000 = vsel %vm2988, %v2983, %v2542
    %v3001 = vsel %vm2988, %v2984, %v2544
    %v3002 = vsel %vm2988, %v2985, %v2546
    %v3003 = vsel %vm2988, %v2986, %v2548
    %v3004 = vsel %vm2988, %v2987, %v2550
    %vm3005 = vcmask 539648
    %v3006 = vsel %vm3005, %v2989, %v2576
    %v3007 = vsel %vm3005, %v2990, %v2578
    %v3008 = vsel %vm3005, %v2991, %v2580
    %v3009 = vsel %vm3005, %v2992, %v2582
    %v3010 = vsel %vm3005, %v2993, %v2584
    %v3011 = vsel %vm3005, %v2994, %v2586
    %v3012 = vsel %vm3005, %v2995, %v2588
    %v3013 = vsel %vm3005, %v2996, %v2590
    %v3014 = vsel %vm3005, %v2997, %v2592
    %v3015 = vsel %vm3005, %v2998, %v2594
    %v3016 = vsel %vm3005, %v2999, %v2596
    %v3017 = vsel %vm3005, %v3000, %v2598
    %v3018 = vsel %vm3005, %v3001, %v2600
    %v3019 = vsel %vm3005, %v3002, %v2602
    %v3020 = vsel %vm3005, %v3003, %v2604
    %v3021 = vsel %vm3005, %v3004, %v2606
    %vm3022 = vcmask 588800
    %v3023 = vsel %vm3022, %v3006, %v2630
    %v3024 = vsel %vm3022, %v3007, %v2632
    %v3025 = vsel %vm3022, %v3008, %v2634
    %v3026 = vsel %vm3022, %v3009, %v2636
    %v3027 = vsel %vm3022, %v3010, %v2638
    %v3028 = vsel %vm3022, %v3011, %v2640
    %v3029 = vsel %vm3022, %v3012, %v2642
    %v3030 = vsel %vm3022, %v3013, %v2644
    %v3031 = vsel %vm3022, %v3014, %v2646
    %v3032 = vsel %vm3022, %v3015, %v2648
    %v3033 = vsel %vm3022, %v3016, %v2650
    %v3034 = vsel %vm3022, %v3017, %v2652
    %v3035 = vsel %vm3022, %v3018, %v2654
    %v3036 = vsel %vm3022, %v3019, %v2656
    %v3037 = vsel %vm3022, %v3020, %v2658
    %v3038 = vsel %vm3022, %v3021, %v2660
    %vm3039 = vcmask 637952
    %v3040 = vsel %vm3039, %v3023, %v2684
    %v3041 = vsel %vm3039, %v3024, %v2686
    %v3042 = vsel %vm3039, %v3025, %v2688
    %v3043 = vsel %vm3039, %v3026, %v2690
    %v3044 = vsel %vm3039, %v3027, %v2692
    %v3045 = vsel %vm3039, %v3028, %v2694
    %v3046 = vsel %vm3039, %v3029, %v2696
    %v3047 = vsel %vm3039, %v3030, %v2698
    %v3048 = vsel %vm3039, %v3031, %v2700
    %v3049 = vsel %vm3039, %v3032, %v2702
    %v3050 = vsel %vm3039, %v3033, %v2704
    %v3051 = vsel %vm3039, %v3034, %v2706
    %v3052 = vsel %vm3039, %v3035, %v2708
    %v3053 = vsel %vm3039, %v3036, %v2710
    %v3054 = vsel %vm3039, %v3037, %v2712
    %v3055 = vsel %vm3039, %v3038, %v2714
    %vm3056 = vcmask 687104
    %v3057 = vsel %vm3056, %v3040, %v2738
    %v3058 = vsel %vm3056, %v3041, %v2740
    %v3059 = vsel %vm3056, %v3042, %v2742
    %v3060 = vsel %vm3056, %v3043, %v2744
    %v3061 = vsel %vm3056, %v3044, %v2746
    %v3062 = vsel %vm3056, %v3045, %v2748
    %v3063 = vsel %vm3056, %v3046, %v2750
    %v3064 = vsel %vm3056, %v3047, %v2752
    %v3065 = vsel %vm3056, %v3048, %v2754
    %v3066 = vsel %vm3056, %v3049, %v2756
    %v3067 = vsel %vm3056, %v3050, %v2758
    %v3068 = vsel %vm3056, %v3051, %v2760
    %v3069 = vsel %vm3056, %v3052, %v2762
    %v3070 = vsel %vm3056, %v3053, %v2764
    %v3071 = vsel %vm3056, %v3054, %v2766
    %v3072 = vsel %vm3056, %v3055, %v2768
    %vm3073 = vcmask 736256
    %v3074 = vsel %vm3073, %v3057, %v2788
    %v3075 = vsel %vm3073, %v3058, %v2790
    %v3076 = vsel %vm3073, %v3059, %v2792
    %v3077 = vsel %vm3073, %v3060, %v2794
    %v3078 = vsel %vm3073, %v3061, %v2796
    %v3079 = vsel %vm3073, %v3062, %v2798
    %v3080 = vsel %vm3073, %v3063, %v2800
    %v3081 = vsel %vm3073, %v3064, %v2802
    %v3082 = vsel %vm3073, %v3065, %v2804
    %v3083 = vsel %vm3073, %v3066, %v2806
    %v3084 = vsel %vm3073, %v3067, %v2808
    %v3085 = vsel %vm3073, %v3068, %v2810
    %v3086 = vsel %vm3073, %v3069, %v2812
    %v3087 = vsel %vm3073, %v3070, %v2814
    %v3088 = vsel %vm3073, %v3071, %v2816
    %v3089 = vsel %vm3073, %v3072, %v2818
    %v3092 = vrot.slane %v1803, 1
    %v3093 = vrot.slane %v1804, 1
    %v3094 = vsel %vm1863, %v3092, %v3093
    %v3095 = vrot.slane %v1827, 1
    %v3096 = vrot.slane %v1828, 1
    %v3097 = vsel %vm1863, %v3095, %v3096
    %3098 = vrot.lane.b32.xlu0 %v1874, 6
    %v3099 = vpop.permute.xlu0 %3098
    %3100 = vrot.lane.b32.xlu0 %v1877, 6
    %v3101 = vpop.permute.xlu0 %3100
    %3102 = vrot.lane.b32.xlu0 %v1880, 6
    %v3103 = vpop.permute.xlu0 %3102
    %3104 = vrot.lane.b32.xlu0 %v1883, 6
    %v3105 = vpop.permute.xlu0 %3104
    %3106 = vrot.lane.b32.xlu0 %v1886, 6
    %v3107 = vpop.permute.xlu0 %3106
    %3108 = vrot.lane.b32.xlu0 %v2303, 6
    %v3109 = vpop.permute.xlu0 %3108
    %3110 = vrot.lane.b32.xlu0 %v2302, 6
    %v3111 = vpop.permute.xlu0 %3110
    %3112 = vrot.lane.b32.xlu0 %v2571, 6
    %v3113 = vpop.permute.xlu0 %3112
    %3114 = vrot.lane.b32.xlu0 %v2570, 6
    %v3115 = vpop.permute.xlu0 %3114
    %3116 = vrot.lane.b32.xlu0 %v3094, 6
    %v3117 = vpop.permute.xlu0 %3116
    %3118 = vrot.lane.b32.xlu0 %v3093, 6
    %v3119 = vpop.permute.xlu0 %3118
    %3120 = vrot.lane.b32.xlu0 %v1898, 6
    %v3121 = vpop.permute.xlu0 %3120
    %3122 = vrot.lane.b32.xlu0 %v1901, 6
    %v3123 = vpop.permute.xlu0 %3122
    %3124 = vrot.lane.b32.xlu0 %v1904, 6
    %v3125 = vpop.permute.xlu0 %3124
    %3126 = vrot.lane.b32.xlu0 %v1907, 6
    %v3127 = vpop.permute.xlu0 %3126
    %3128 = vrot.lane.b32.xlu0 %v1910, 6
    %v3129 = vpop.permute.xlu0 %3128
    %3130 = vrot.lane.b32.xlu0 %v2306, 6
    %v3131 = vpop.permute.xlu0 %3130
    %3132 = vrot.lane.b32.xlu0 %v2305, 6
    %v3133 = vpop.permute.xlu0 %3132
    %3134 = vrot.lane.b32.xlu0 %v2574, 6
    %v3135 = vpop.permute.xlu0 %3134
    %3136 = vrot.lane.b32.xlu0 %v2573, 6
    %v3137 = vpop.permute.xlu0 %3136
    %3138 = vrot.lane.b32.xlu0 %v3097, 6
    %v3139 = vpop.permute.xlu0 %3138
    %3140 = vrot.lane.b32.xlu0 %v3096, 6
    %v3141 = vpop.permute.xlu0 %3140
    %v3164 = vrot.slane %v1803, 2
    %v3165 = vrot.slane %v1804, 2
    %v3166 = vsel %vm1960, %v3164, %v3165
    %v3167 = vrot.slane %v1827, 2
    %v3168 = vrot.slane %v1828, 2
    %v3169 = vsel %vm1960, %v3167, %v3168
    %3170 = vrot.lane.b32.xlu0 %v1971, 12
    %v3171 = vpop.permute.xlu0 %3170
    %3172 = vrot.lane.b32.xlu0 %v1974, 12
    %v3173 = vpop.permute.xlu0 %3172
    %3174 = vrot.lane.b32.xlu0 %v1977, 12
    %v3175 = vpop.permute.xlu0 %3174
    %3176 = vrot.lane.b32.xlu0 %v1980, 12
    %v3177 = vpop.permute.xlu0 %3176
    %3178 = vrot.lane.b32.xlu0 %v1983, 12
    %v3179 = vpop.permute.xlu0 %3178
    %3180 = vrot.lane.b32.xlu0 %v2357, 12
    %v3181 = vpop.permute.xlu0 %3180
    %3182 = vrot.lane.b32.xlu0 %v2356, 12
    %v3183 = vpop.permute.xlu0 %3182
    %3184 = vrot.lane.b32.xlu0 %v2625, 12
    %v3185 = vpop.permute.xlu0 %3184
    %3186 = vrot.lane.b32.xlu0 %v2624, 12
    %v3187 = vpop.permute.xlu0 %3186
    %3188 = vrot.lane.b32.xlu0 %v3166, 12
    %v3189 = vpop.permute.xlu0 %3188
    %3190 = vrot.lane.b32.xlu0 %v3165, 12
    %v3191 = vpop.permute.xlu0 %3190
    %3192 = vrot.lane.b32.xlu0 %v1995, 12
    %v3193 = vpop.permute.xlu0 %3192
    %3194 = vrot.lane.b32.xlu0 %v1998, 12
    %v3195 = vpop.permute.xlu0 %3194
    %3196 = vrot.lane.b32.xlu0 %v2001, 12
    %v3197 = vpop.permute.xlu0 %3196
    %3198 = vrot.lane.b32.xlu0 %v2004, 12
    %v3199 = vpop.permute.xlu0 %3198
    %3200 = vrot.lane.b32.xlu0 %v2007, 12
    %v3201 = vpop.permute.xlu0 %3200
    %3202 = vrot.lane.b32.xlu0 %v2360, 12
    %v3203 = vpop.permute.xlu0 %3202
    %3204 = vrot.lane.b32.xlu0 %v2359, 12
    %v3205 = vpop.permute.xlu0 %3204
    %3206 = vrot.lane.b32.xlu0 %v2628, 12
    %v3207 = vpop.permute.xlu0 %3206
    %3208 = vrot.lane.b32.xlu0 %v2627, 12
    %v3209 = vpop.permute.xlu0 %3208
    %3210 = vrot.lane.b32.xlu0 %v3169, 12
    %v3211 = vpop.permute.xlu0 %3210
    %3212 = vrot.lane.b32.xlu0 %v3168, 12
    %v3213 = vpop.permute.xlu0 %3212
    %v3236 = vrot.slane %v1803, 3
    %v3237 = vrot.slane %v1804, 3
    %v3238 = vsel %vm784, %v3236, %v3237
    %v3239 = vrot.slane %v1827, 3
    %v3240 = vrot.slane %v1828, 3
    %v3241 = vsel %vm784, %v3239, %v3240
    %3242 = vrot.lane.b32.xlu0 %v2067, 18
    %v3243 = vpop.permute.xlu0 %3242
    %3244 = vrot.lane.b32.xlu0 %v2070, 18
    %v3245 = vpop.permute.xlu0 %3244
    %3246 = vrot.lane.b32.xlu0 %v2073, 18
    %v3247 = vpop.permute.xlu0 %3246
    %3248 = vrot.lane.b32.xlu0 %v2076, 18
    %v3249 = vpop.permute.xlu0 %3248
    %3250 = vrot.lane.b32.xlu0 %v2079, 18
    %v3251 = vpop.permute.xlu0 %3250
    %3252 = vrot.lane.b32.xlu0 %v2411, 18
    %v3253 = vpop.permute.xlu0 %3252
    %3254 = vrot.lane.b32.xlu0 %v2410, 18
    %v3255 = vpop.permute.xlu0 %3254
    %3256 = vrot.lane.b32.xlu0 %v2679, 18
    %v3257 = vpop.permute.xlu0 %3256
    %3258 = vrot.lane.b32.xlu0 %v2678, 18
    %v3259 = vpop.permute.xlu0 %3258
    %3260 = vrot.lane.b32.xlu0 %v3238, 18
    %v3261 = vpop.permute.xlu0 %3260
    %3262 = vrot.lane.b32.xlu0 %v3237, 18
    %v3263 = vpop.permute.xlu0 %3262
    %3264 = vrot.lane.b32.xlu0 %v2091, 18
    %v3265 = vpop.permute.xlu0 %3264
    %3266 = vrot.lane.b32.xlu0 %v2094, 18
    %v3267 = vpop.permute.xlu0 %3266
    %3268 = vrot.lane.b32.xlu0 %v2097, 18
    %v3269 = vpop.permute.xlu0 %3268
    %3270 = vrot.lane.b32.xlu0 %v2100, 18
    %v3271 = vpop.permute.xlu0 %3270
    %3272 = vrot.lane.b32.xlu0 %v2103, 18
    %v3273 = vpop.permute.xlu0 %3272
    %3274 = vrot.lane.b32.xlu0 %v2414, 18
    %v3275 = vpop.permute.xlu0 %3274
    %3276 = vrot.lane.b32.xlu0 %v2413, 18
    %v3277 = vpop.permute.xlu0 %3276
    %3278 = vrot.lane.b32.xlu0 %v2682, 18
    %v3279 = vpop.permute.xlu0 %3278
    %3280 = vrot.lane.b32.xlu0 %v2681, 18
    %v3281 = vpop.permute.xlu0 %3280
    %3282 = vrot.lane.b32.xlu0 %v3241, 18
    %v3283 = vpop.permute.xlu0 %3282
    %3284 = vrot.lane.b32.xlu0 %v3240, 18
    %v3285 = vpop.permute.xlu0 %3284
    %v3310 = vrot.slane %v1791, 7
    %v3311 = vrot.slane %v1793, 7
    %v3312 = vrot.slane %v1795, 7
    %v3313 = vrot.slane %v1797, 7
    %v3314 = vrot.slane %v1799, 7
    %v3315 = vrot.slane %v1801, 7
    %v3316 = vrot.slane %v1803, 7
    %v3317 = vrot.slane %v1805, 7
    %v3318 = vrot.slane %v1815, 7
    %v3319 = vrot.slane %v1817, 7
    %v3320 = vrot.slane %v1819, 7
    %v3321 = vrot.slane %v1821, 7
    %v3322 = vrot.slane %v1823, 7
    %v3323 = vrot.slane %v1825, 7
    %v3324 = vrot.slane %v1827, 7
    %v3325 = vrot.slane %v1829, 7
    %3326 = vrot.lane.b32.xlu0 %v3310, 24
    %v3327 = vpop.permute.xlu0 %3326
    %3328 = vrot.lane.b32.xlu0 %v3311, 24
    %v3329 = vpop.permute.xlu0 %3328
    %3330 = vrot.lane.b32.xlu0 %v3312, 24
    %v3331 = vpop.permute.xlu0 %3330
    %3332 = vrot.lane.b32.xlu0 %v3313, 24
    %v3333 = vpop.permute.xlu0 %3332
    %3334 = vrot.lane.b32.xlu0 %v3314, 24
    %v3335 = vpop.permute.xlu0 %3334
    %3336 = vrot.lane.b32.xlu0 %v3315, 24
    %v3337 = vpop.permute.xlu0 %3336
    %3338 = vrot.lane.b32.xlu0 %v3316, 24
    %v3339 = vpop.permute.xlu0 %3338
    %3340 = vrot.lane.b32.xlu0 %v3317, 24
    %v3341 = vpop.permute.xlu0 %3340
    %3342 = vrot.lane.b32.xlu0 %v3318, 24
    %v3343 = vpop.permute.xlu0 %3342
    %3344 = vrot.lane.b32.xlu0 %v3319, 24
    %v3345 = vpop.permute.xlu0 %3344
    %3346 = vrot.lane.b32.xlu0 %v3320, 24
    %v3347 = vpop.permute.xlu0 %3346
    %3348 = vrot.lane.b32.xlu0 %v3321, 24
    %v3349 = vpop.permute.xlu0 %3348
    %3350 = vrot.lane.b32.xlu0 %v3322, 24
    %v3351 = vpop.permute.xlu0 %3350
    %3352 = vrot.lane.b32.xlu0 %v3323, 24
    %v3353 = vpop.permute.xlu0 %3352
    %3354 = vrot.lane.b32.xlu0 %v3324, 24
    %v3355 = vpop.permute.xlu0 %3354
    %3356 = vrot.lane.b32.xlu0 %v3325, 24
    %v3357 = vpop.permute.xlu0 %3356
    %3376 = vrot.lane.b32.xlu0 %v1792, 30
    %v3377 = vpop.permute.xlu0 %3376
    %3378 = vrot.lane.b32.xlu0 %v1794, 30
    %v3379 = vpop.permute.xlu0 %3378
    %3380 = vrot.lane.b32.xlu0 %v1796, 30
    %v3381 = vpop.permute.xlu0 %3380
    %3382 = vrot.lane.b32.xlu0 %v1798, 30
    %v3383 = vpop.permute.xlu0 %3382
    %3384 = vrot.lane.b32.xlu0 %v1800, 30
    %v3385 = vpop.permute.xlu0 %3384
    %3386 = vrot.lane.b32.xlu0 %v1801, 30
    %v3387 = vpop.permute.xlu0 %3386
    %3388 = vrot.lane.b32.xlu0 %v1802, 30
    %v3389 = vpop.permute.xlu0 %3388
    %3390 = vrot.lane.b32.xlu0 %v1803, 30
    %v3391 = vpop.permute.xlu0 %3390
    %3392 = vrot.lane.b32.xlu0 %v1804, 30
    %v3393 = vpop.permute.xlu0 %3392
    %3394 = vrot.lane.b32.xlu0 %v1805, 30
    %v3395 = vpop.permute.xlu0 %3394
    %3396 = vrot.lane.b32.xlu0 %v1806, 30
    %v3397 = vpop.permute.xlu0 %3396
    %3398 = vrot.lane.b32.xlu0 %v1816, 30
    %v3399 = vpop.permute.xlu0 %3398
    %3400 = vrot.lane.b32.xlu0 %v1818, 30
    %v3401 = vpop.permute.xlu0 %3400
    %3402 = vrot.lane.b32.xlu0 %v1820, 30
    %v3403 = vpop.permute.xlu0 %3402
    %3404 = vrot.lane.b32.xlu0 %v1822, 30
    %v3405 = vpop.permute.xlu0 %3404
    %3406 = vrot.lane.b32.xlu0 %v1824, 30
    %v3407 = vpop.permute.xlu0 %3406
    %3408 = vrot.lane.b32.xlu0 %v1825, 30
    %v3409 = vpop.permute.xlu0 %3408
    %3410 = vrot.lane.b32.xlu0 %v1826, 30
    %v3411 = vpop.permute.xlu0 %3410
    %3412 = vrot.lane.b32.xlu0 %v1827, 30
    %v3413 = vpop.permute.xlu0 %3412
    %3414 = vrot.lane.b32.xlu0 %v1828, 30
    %v3415 = vpop.permute.xlu0 %3414
    %3416 = vrot.lane.b32.xlu0 %v1829, 30
    %v3417 = vpop.permute.xlu0 %3416
    %3418 = vrot.lane.b32.xlu0 %v1830, 30
    %v3419 = vpop.permute.xlu0 %3418
    %v3442 = vrot.slane %v1805, 1
    %v3443 = vrot.slane %v1806, 1
    %v3444 = vsel %vm1863, %v3442, %v3443
    %v3445 = vrot.slane %v1829, 1
    %v3446 = vrot.slane %v1830, 1
    %v3447 = vsel %vm1863, %v3445, %v3446
    %3448 = vrot.lane.b32.xlu0 %v1877, 36
    %v3449 = vpop.permute.xlu0 %3448
    %3450 = vrot.lane.b32.xlu0 %v1880, 36
    %v3451 = vpop.permute.xlu0 %3450
    %3452 = vrot.lane.b32.xlu0 %v1883, 36
    %v3453 = vpop.permute.xlu0 %3452
    %3454 = vrot.lane.b32.xlu0 %v1886, 36
    %v3455 = vpop.permute.xlu0 %3454
    %3456 = vrot.lane.b32.xlu0 %v2302, 36
    %v3457 = vpop.permute.xlu0 %3456
    %3458 = vrot.lane.b32.xlu0 %v2571, 36
    %v3459 = vpop.permute.xlu0 %3458
    %3460 = vrot.lane.b32.xlu0 %v2570, 36
    %v3461 = vpop.permute.xlu0 %3460
    %3462 = vrot.lane.b32.xlu0 %v3094, 36
    %v3463 = vpop.permute.xlu0 %3462
    %3464 = vrot.lane.b32.xlu0 %v3093, 36
    %v3465 = vpop.permute.xlu0 %3464
    %3466 = vrot.lane.b32.xlu0 %v3444, 36
    %v3467 = vpop.permute.xlu0 %3466
    %3468 = vrot.lane.b32.xlu0 %v3443, 36
    %v3469 = vpop.permute.xlu0 %3468
    %3470 = vrot.lane.b32.xlu0 %v1901, 36
    %v3471 = vpop.permute.xlu0 %3470
    %3472 = vrot.lane.b32.xlu0 %v1904, 36
    %v3473 = vpop.permute.xlu0 %3472
    %3474 = vrot.lane.b32.xlu0 %v1907, 36
    %v3475 = vpop.permute.xlu0 %3474
    %3476 = vrot.lane.b32.xlu0 %v1910, 36
    %v3477 = vpop.permute.xlu0 %3476
    %3478 = vrot.lane.b32.xlu0 %v2305, 36
    %v3479 = vpop.permute.xlu0 %3478
    %3480 = vrot.lane.b32.xlu0 %v2574, 36
    %v3481 = vpop.permute.xlu0 %3480
    %3482 = vrot.lane.b32.xlu0 %v2573, 36
    %v3483 = vpop.permute.xlu0 %3482
    %3484 = vrot.lane.b32.xlu0 %v3097, 36
    %v3485 = vpop.permute.xlu0 %3484
    %3486 = vrot.lane.b32.xlu0 %v3096, 36
    %v3487 = vpop.permute.xlu0 %3486
    %3488 = vrot.lane.b32.xlu0 %v3447, 36
    %v3489 = vpop.permute.xlu0 %3488
    %3490 = vrot.lane.b32.xlu0 %v3446, 36
    %v3491 = vpop.permute.xlu0 %3490
    %v3514 = vrot.slane %v1805, 2
    %v3515 = vrot.slane %v1806, 2
    %v3516 = vsel %vm1960, %v3514, %v3515
    %v3517 = vrot.slane %v1829, 2
    %v3518 = vrot.slane %v1830, 2
    %v3519 = vsel %vm1960, %v3517, %v3518
    %3520 = vrot.lane.b32.xlu0 %v1974, 42
    %v3521 = vpop.permute.xlu0 %3520
    %3522 = vrot.lane.b32.xlu0 %v1977, 42
    %v3523 = vpop.permute.xlu0 %3522
    %3524 = vrot.lane.b32.xlu0 %v1980, 42
    %v3525 = vpop.permute.xlu0 %3524
    %3526 = vrot.lane.b32.xlu0 %v1983, 42
    %v3527 = vpop.permute.xlu0 %3526
    %3528 = vrot.lane.b32.xlu0 %v2356, 42
    %v3529 = vpop.permute.xlu0 %3528
    %3530 = vrot.lane.b32.xlu0 %v2625, 42
    %v3531 = vpop.permute.xlu0 %3530
    %3532 = vrot.lane.b32.xlu0 %v2624, 42
    %v3533 = vpop.permute.xlu0 %3532
    %3534 = vrot.lane.b32.xlu0 %v3166, 42
    %v3535 = vpop.permute.xlu0 %3534
    %3536 = vrot.lane.b32.xlu0 %v3165, 42
    %v3537 = vpop.permute.xlu0 %3536
    %3538 = vrot.lane.b32.xlu0 %v3516, 42
    %v3539 = vpop.permute.xlu0 %3538
    %3540 = vrot.lane.b32.xlu0 %v3515, 42
    %v3541 = vpop.permute.xlu0 %3540
    %3542 = vrot.lane.b32.xlu0 %v1998, 42
    %v3543 = vpop.permute.xlu0 %3542
    %3544 = vrot.lane.b32.xlu0 %v2001, 42
    %v3545 = vpop.permute.xlu0 %3544
    %3546 = vrot.lane.b32.xlu0 %v2004, 42
    %v3547 = vpop.permute.xlu0 %3546
    %3548 = vrot.lane.b32.xlu0 %v2007, 42
    %v3549 = vpop.permute.xlu0 %3548
    %3550 = vrot.lane.b32.xlu0 %v2359, 42
    %v3551 = vpop.permute.xlu0 %3550
    %3552 = vrot.lane.b32.xlu0 %v2628, 42
    %v3553 = vpop.permute.xlu0 %3552
    %3554 = vrot.lane.b32.xlu0 %v2627, 42
    %v3555 = vpop.permute.xlu0 %3554
    %3556 = vrot.lane.b32.xlu0 %v3169, 42
    %v3557 = vpop.permute.xlu0 %3556
    %3558 = vrot.lane.b32.xlu0 %v3168, 42
    %v3559 = vpop.permute.xlu0 %3558
    %3560 = vrot.lane.b32.xlu0 %v3519, 42
    %v3561 = vpop.permute.xlu0 %3560
    %3562 = vrot.lane.b32.xlu0 %v3518, 42
    %v3563 = vpop.permute.xlu0 %3562
    %v3586 = vrot.slane %v1805, 3
    %v3587 = vrot.slane %v1806, 3
    %v3588 = vsel %vm784, %v3586, %v3587
    %v3589 = vrot.slane %v1829, 3
    %v3590 = vrot.slane %v1830, 3
    %v3591 = vsel %vm784, %v3589, %v3590
    %3592 = vrot.lane.b32.xlu0 %v2070, 48
    %v3593 = vpop.permute.xlu0 %3592
    %3594 = vrot.lane.b32.xlu0 %v2073, 48
    %v3595 = vpop.permute.xlu0 %3594
    %3596 = vrot.lane.b32.xlu0 %v2076, 48
    %v3597 = vpop.permute.xlu0 %3596
    %3598 = vrot.lane.b32.xlu0 %v2079, 48
    %v3599 = vpop.permute.xlu0 %3598
    %3600 = vrot.lane.b32.xlu0 %v2410, 48
    %v3601 = vpop.permute.xlu0 %3600
    %3602 = vrot.lane.b32.xlu0 %v2679, 48
    %v3603 = vpop.permute.xlu0 %3602
    %3604 = vrot.lane.b32.xlu0 %v2678, 48
    %v3605 = vpop.permute.xlu0 %3604
    %3606 = vrot.lane.b32.xlu0 %v3238, 48
    %v3607 = vpop.permute.xlu0 %3606
    %3608 = vrot.lane.b32.xlu0 %v3237, 48
    %v3609 = vpop.permute.xlu0 %3608
    %3610 = vrot.lane.b32.xlu0 %v3588, 48
    %v3611 = vpop.permute.xlu0 %3610
    %3612 = vrot.lane.b32.xlu0 %v3587, 48
    %v3613 = vpop.permute.xlu0 %3612
    %3614 = vrot.lane.b32.xlu0 %v2094, 48
    %v3615 = vpop.permute.xlu0 %3614
    %3616 = vrot.lane.b32.xlu0 %v2097, 48
    %v3617 = vpop.permute.xlu0 %3616
    %3618 = vrot.lane.b32.xlu0 %v2100, 48
    %v3619 = vpop.permute.xlu0 %3618
    %3620 = vrot.lane.b32.xlu0 %v2103, 48
    %v3621 = vpop.permute.xlu0 %3620
    %3622 = vrot.lane.b32.xlu0 %v2413, 48
    %v3623 = vpop.permute.xlu0 %3622
    %3624 = vrot.lane.b32.xlu0 %v2682, 48
    %v3625 = vpop.permute.xlu0 %3624
    %3626 = vrot.lane.b32.xlu0 %v2681, 48
    %v3627 = vpop.permute.xlu0 %3626
    %3628 = vrot.lane.b32.xlu0 %v3241, 48
    %v3629 = vpop.permute.xlu0 %3628
    %3630 = vrot.lane.b32.xlu0 %v3240, 48
    %v3631 = vpop.permute.xlu0 %3630
    %3632 = vrot.lane.b32.xlu0 %v3591, 48
    %v3633 = vpop.permute.xlu0 %3632
    %3634 = vrot.lane.b32.xlu0 %v3590, 48
    %v3635 = vpop.permute.xlu0 %3634
    %v3658 = vsel %vm2835, %v1790, %v3099
    %v3659 = vsel %vm2835, %v1792, %v3101
    %v3660 = vsel %vm2835, %v1794, %v3103
    %v3661 = vsel %vm2835, %v1796, %v3105
    %v3662 = vsel %vm2835, %v1798, %v3107
    %v3663 = vsel %vm2835, %v1799, %v3109
    %v3664 = vsel %vm2835, %v1800, %v3111
    %v3665 = vsel %vm2835, %v1801, %v3113
    %v3666 = vsel %vm2835, %v1802, %v3115
    %v3667 = vsel %vm2835, %v1803, %v3117
    %v3668 = vsel %vm2835, %v1804, %v3119
    %v3669 = vsel %vm2835, %v1814, %v3121
    %v3670 = vsel %vm2835, %v1816, %v3123
    %v3671 = vsel %vm2835, %v1818, %v3125
    %v3672 = vsel %vm2835, %v1820, %v3127
    %v3673 = vsel %vm2835, %v1822, %v3129
    %v3674 = vsel %vm2835, %v1823, %v3131
    %v3675 = vsel %vm2835, %v1824, %v3133
    %v3676 = vsel %vm2835, %v1825, %v3135
    %v3677 = vsel %vm2835, %v1826, %v3137
    %v3678 = vsel %vm2835, %v1827, %v3139
    %v3679 = vsel %vm2835, %v1828, %v3141
    %v3680 = vsel %vm2852, %v3658, %v3171
    %v3681 = vsel %vm2852, %v3659, %v3173
    %v3682 = vsel %vm2852, %v3660, %v3175
    %v3683 = vsel %vm2852, %v3661, %v3177
    %v3684 = vsel %vm2852, %v3662, %v3179
    %v3685 = vsel %vm2852, %v3663, %v3181
    %v3686 = vsel %vm2852, %v3664, %v3183
    %v3687 = vsel %vm2852, %v3665, %v3185
    %v3688 = vsel %vm2852, %v3666, %v3187
    %v3689 = vsel %vm2852, %v3667, %v3189
    %v3690 = vsel %vm2852, %v3668, %v3191
    %v3691 = vsel %vm2852, %v3669, %v3193
    %v3692 = vsel %vm2852, %v3670, %v3195
    %v3693 = vsel %vm2852, %v3671, %v3197
    %v3694 = vsel %vm2852, %v3672, %v3199
    %v3695 = vsel %vm2852, %v3673, %v3201
    %v3696 = vsel %vm2852, %v3674, %v3203
    %v3697 = vsel %vm2852, %v3675, %v3205
    %v3698 = vsel %vm2852, %v3676, %v3207
    %v3699 = vsel %vm2852, %v3677, %v3209
    %v3700 = vsel %vm2852, %v3678, %v3211
    %v3701 = vsel %vm2852, %v3679, %v3213
    %v3702 = vsel %vm2869, %v3680, %v3243
    %v3703 = vsel %vm2869, %v3681, %v3245
    %v3704 = vsel %vm2869, %v3682, %v3247
    %v3705 = vsel %vm2869, %v3683, %v3249
    %v3706 = vsel %vm2869, %v3684, %v3251
    %v3707 = vsel %vm2869, %v3685, %v3253
    %v3708 = vsel %vm2869, %v3686, %v3255
    %v3709 = vsel %vm2869, %v3687, %v3257
    %v3710 = vsel %vm2869, %v3688, %v3259
    %v3711 = vsel %vm2869, %v3689, %v3261
    %v3712 = vsel %vm2869, %v3690, %v3263
    %v3713 = vsel %vm2869, %v3691, %v3265
    %v3714 = vsel %vm2869, %v3692, %v3267
    %v3715 = vsel %vm2869, %v3693, %v3269
    %v3716 = vsel %vm2869, %v3694, %v3271
    %v3717 = vsel %vm2869, %v3695, %v3273
    %v3718 = vsel %vm2869, %v3696, %v3275
    %v3719 = vsel %vm2869, %v3697, %v3277
    %v3720 = vsel %vm2869, %v3698, %v3279
    %v3721 = vsel %vm2869, %v3699, %v3281
    %v3722 = vsel %vm2869, %v3700, %v3283
    %v3723 = vsel %vm2869, %v3701, %v3285
    %v3724 = vsel %vm2886, %v2873, %v3327
    %v3725 = vsel %vm2886, %v3702, %v3327
    %v3726 = vsel %vm2886, %v2874, %v3329
    %v3727 = vsel %vm2886, %v3703, %v3329
    %v3728 = vsel %vm2886, %v2875, %v3331
    %v3729 = vsel %vm2886, %v3704, %v3331
    %v3730 = vsel %vm2886, %v2876, %v3333
    %v3731 = vsel %vm2886, %v3705, %v3333
    %v3732 = vsel %vm2886, %v2877, %v3335
    %v3733 = vsel %vm2886, %v3706, %v3335
    %v3734 = vsel %vm2886, %v3707, %v3337
    %v3735 = vsel %vm2886, %v3708, %v3337
    %v3736 = vsel %vm2886, %v3709, %v3339
    %v3737 = vsel %vm2886, %v3710, %v3339
    %v3738 = vsel %vm2886, %v3711, %v3341
    %v3739 = vsel %vm2886, %v3712, %v3341
    %v3740 = vsel %vm2886, %v2881, %v3343
    %v3741 = vsel %vm2886, %v3713, %v3343
    %v3742 = vsel %vm2886, %v2882, %v3345
    %v3743 = vsel %vm2886, %v3714, %v3345
    %v3744 = vsel %vm2886, %v2883, %v3347
    %v3745 = vsel %vm2886, %v3715, %v3347
    %v3746 = vsel %vm2886, %v2884, %v3349
    %v3747 = vsel %vm2886, %v3716, %v3349
    %v3748 = vsel %vm2886, %v2885, %v3351
    %v3749 = vsel %vm2886, %v3717, %v3351
    %v3750 = vsel %vm2886, %v3718, %v3353
    %v3751 = vsel %vm2886, %v3719, %v3353
    %v3752 = vsel %vm2886, %v3720, %v3355
    %v3753 = vsel %vm2886, %v3721, %v3355
    %v3754 = vsel %vm2886, %v3722, %v3357
    %v3755 = vsel %vm2886, %v3723, %v3357
    %v3756 = vsel %vm2903, %v3724, %v2258
    %v3757 = vsel %vm2903, %v3725, %v3377
    %v3758 = vsel %vm2903, %v3726, %v2260
    %v3759 = vsel %vm2903, %v3727, %v3379
    %v3760 = vsel %vm2903, %v3728, %v2262
    %v3761 = vsel %vm2903, %v3729, %v3381
    %v3762 = vsel %vm2903, %v3730, %v2264
    %v3763 = vsel %vm2903, %v3731, %v3383
    %v3764 = vsel %vm2903, %v3732, %v2266
    %v3765 = vsel %vm2903, %v3733, %v3385
    %v3766 = vsel %vm2903, %v3734, %v3387
    %v3767 = vsel %vm2903, %v3735, %v3389
    %v3768 = vsel %vm2903, %v3736, %v3391
    %v3769 = vsel %vm2903, %v3737, %v3393
    %v3770 = vsel %vm2903, %v3738, %v3395
    %v3771 = vsel %vm2903, %v3739, %v3397
    %v3772 = vsel %vm2903, %v3740, %v2274
    %v3773 = vsel %vm2903, %v3741, %v3399
    %v3774 = vsel %vm2903, %v3742, %v2276
    %v3775 = vsel %vm2903, %v3743, %v3401
    %v3776 = vsel %vm2903, %v3744, %v2278
    %v3777 = vsel %vm2903, %v3745, %v3403
    %v3778 = vsel %vm2903, %v3746, %v2280
    %v3779 = vsel %vm2903, %v3747, %v3405
    %v3780 = vsel %vm2903, %v3748, %v2282
    %v3781 = vsel %vm2903, %v3749, %v3407
    %v3782 = vsel %vm2903, %v3750, %v3409
    %v3783 = vsel %vm2903, %v3751, %v3411
    %v3784 = vsel %vm2903, %v3752, %v3413
    %v3785 = vsel %vm2903, %v3753, %v3415
    %v3786 = vsel %vm2903, %v3754, %v3417
    %v3787 = vsel %vm2903, %v3755, %v3419
    %v3788 = vsel %vm2920, %v3756, %v2314
    %v3789 = vsel %vm2920, %v3757, %v3449
    %v3790 = vsel %vm2920, %v3758, %v2316
    %v3791 = vsel %vm2920, %v3759, %v3451
    %v3792 = vsel %vm2920, %v3760, %v2318
    %v3793 = vsel %vm2920, %v3761, %v3453
    %v3794 = vsel %vm2920, %v3762, %v2320
    %v3795 = vsel %vm2920, %v3763, %v3455
    %v3796 = vsel %vm2920, %v3764, %v2322
    %v3797 = vsel %vm2920, %v3765, %v3457
    %v3798 = vsel %vm2920, %v3766, %v3459
    %v3799 = vsel %vm2920, %v3767, %v3461
    %v3800 = vsel %vm2920, %v3768, %v3463
    %v3801 = vsel %vm2920, %v3769, %v3465
    %v3802 = vsel %vm2920, %v3770, %v3467
    %v3803 = vsel %vm2920, %v3771, %v3469
    %v3804 = vsel %vm2920, %v3772, %v2330
    %v3805 = vsel %vm2920, %v3773, %v3471
    %v3806 = vsel %vm2920, %v3774, %v2332
    %v3807 = vsel %vm2920, %v3775, %v3473
    %v3808 = vsel %vm2920, %v3776, %v2334
    %v3809 = vsel %vm2920, %v3777, %v3475
    %v3810 = vsel %vm2920, %v3778, %v2336
    %v3811 = vsel %vm2920, %v3779, %v3477
    %v3812 = vsel %vm2920, %v3780, %v2338
    %v3813 = vsel %vm2920, %v3781, %v3479
    %v3814 = vsel %vm2920, %v3782, %v3481
    %v3815 = vsel %vm2920, %v3783, %v3483
    %v3816 = vsel %vm2920, %v3784, %v3485
    %v3817 = vsel %vm2920, %v3785, %v3487
    %v3818 = vsel %vm2920, %v3786, %v3489
    %v3819 = vsel %vm2920, %v3787, %v3491
    %v3820 = vsel %vm2937, %v3788, %v2368
    %v3821 = vsel %vm2937, %v3789, %v3521
    %v3822 = vsel %vm2937, %v3790, %v2370
    %v3823 = vsel %vm2937, %v3791, %v3523
    %v3824 = vsel %vm2937, %v3792, %v2372
    %v3825 = vsel %vm2937, %v3793, %v3525
    %v3826 = vsel %vm2937, %v3794, %v2374
    %v3827 = vsel %vm2937, %v3795, %v3527
    %v3828 = vsel %vm2937, %v3796, %v2376
    %v3829 = vsel %vm2937, %v3797, %v3529
    %v3830 = vsel %vm2937, %v3798, %v3531
    %v3831 = vsel %vm2937, %v3799, %v3533
    %v3832 = vsel %vm2937, %v3800, %v3535
    %v3833 = vsel %vm2937, %v3801, %v3537
    %v3834 = vsel %vm2937, %v3802, %v3539
    %v3835 = vsel %vm2937, %v3803, %v3541
    %v3836 = vsel %vm2937, %v3804, %v2384
    %v3837 = vsel %vm2937, %v3805, %v3543
    %v3838 = vsel %vm2937, %v3806, %v2386
    %v3839 = vsel %vm2937, %v3807, %v3545
    %v3840 = vsel %vm2937, %v3808, %v2388
    %v3841 = vsel %vm2937, %v3809, %v3547
    %v3842 = vsel %vm2937, %v3810, %v2390
    %v3843 = vsel %vm2937, %v3811, %v3549
    %v3844 = vsel %vm2937, %v3812, %v2392
    %v3845 = vsel %vm2937, %v3813, %v3551
    %v3846 = vsel %vm2937, %v3814, %v3553
    %v3847 = vsel %vm2937, %v3815, %v3555
    %v3848 = vsel %vm2937, %v3816, %v3557
    %v3849 = vsel %vm2937, %v3817, %v3559
    %v3850 = vsel %vm2937, %v3818, %v3561
    %v3851 = vsel %vm2937, %v3819, %v3563
    %v3852 = vsel %vm2954, %v3820, %v2422
    %v3853 = vsel %vm2954, %v3821, %v3593
    %v3854 = vsel %vm2954, %v3822, %v2424
    %v3855 = vsel %vm2954, %v3823, %v3595
    %v3856 = vsel %vm2954, %v3824, %v2426
    %v3857 = vsel %vm2954, %v3825, %v3597
    %v3858 = vsel %vm2954, %v3826, %v2428
    %v3859 = vsel %vm2954, %v3827, %v3599
    %v3860 = vsel %vm2954, %v3828, %v2430
    %v3861 = vsel %vm2954, %v3829, %v3601
    %v3862 = vsel %vm2954, %v3830, %v3603
    %v3863 = vsel %vm2954, %v3831, %v3605
    %v3864 = vsel %vm2954, %v3832, %v3607
    %v3865 = vsel %vm2954, %v3833, %v3609
    %v3866 = vsel %vm2954, %v3834, %v3611
    %v3867 = vsel %vm2954, %v3835, %v3613
    %v3868 = vsel %vm2954, %v3836, %v2438
    %v3869 = vsel %vm2954, %v3837, %v3615
    %v3870 = vsel %vm2954, %v3838, %v2440
    %v3871 = vsel %vm2954, %v3839, %v3617
    %v3872 = vsel %vm2954, %v3840, %v2442
    %v3873 = vsel %vm2954, %v3841, %v3619
    %v3874 = vsel %vm2954, %v3842, %v2444
    %v3875 = vsel %vm2954, %v3843, %v3621
    %v3876 = vsel %vm2954, %v3844, %v2446
    %v3877 = vsel %vm2954, %v3845, %v3623
    %v3878 = vsel %vm2954, %v3846, %v3625
    %v3879 = vsel %vm2954, %v3847, %v3627
    %v3880 = vsel %vm2954, %v3848, %v3629
    %v3881 = vsel %vm2954, %v3849, %v3631
    %v3882 = vsel %vm2954, %v3850, %v3633
    %v3883 = vsel %vm2954, %v3851, %v3635
    %v3916 = vrot.slane %v3852, 1
    %v3917 = vrot.slane %v3853, 1
    %v3918 = vsel %vm1863, %v3916, %v3917
    %v3919 = vrot.slane %v3854, 1
    %v3920 = vrot.slane %v3855, 1
    %v3921 = vsel %vm1863, %v3919, %v3920
    %v3922 = vrot.slane %v3856, 1
    %v3923 = vrot.slane %v3857, 1
    %v3924 = vsel %vm1863, %v3922, %v3923
    %v3925 = vrot.slane %v3858, 1
    %v3926 = vrot.slane %v3859, 1
    %v3927 = vsel %vm1863, %v3925, %v3926
    %v3928 = vrot.slane %v3860, 1
    %v3929 = vrot.slane %v3861, 1
    %v3930 = vsel %vm1863, %v3928, %v3929
    %v3931 = vrot.slane %v3862, 1
    %v3932 = vrot.slane %v3863, 1
    %v3933 = vsel %vm1863, %v3931, %v3932
    %v3934 = vrot.slane %v3864, 1
    %v3935 = vrot.slane %v3865, 1
    %v3936 = vsel %vm1863, %v3934, %v3935
    %v3937 = vrot.slane %v3866, 1
    %v3938 = vrot.slane %v3867, 1
    %v3939 = vsel %vm1863, %v3937, %v3938
    %v3940 = vrot.slane %v3868, 1
    %v3941 = vrot.slane %v3869, 1
    %v3942 = vsel %vm1863, %v3940, %v3941
    %v3943 = vrot.slane %v3870, 1
    %v3944 = vrot.slane %v3871, 1
    %v3945 = vsel %vm1863, %v3943, %v3944
    %v3946 = vrot.slane %v3872, 1
    %v3947 = vrot.slane %v3873, 1
    %v3948 = vsel %vm1863, %v3946, %v3947
    %v3949 = vrot.slane %v3874, 1
    %v3950 = vrot.slane %v3875, 1
    %v3951 = vsel %vm1863, %v3949, %v3950
    %v3952 = vrot.slane %v3876, 1
    %v3953 = vrot.slane %v3877, 1
    %v3954 = vsel %vm1863, %v3952, %v3953
    %v3955 = vrot.slane %v3878, 1
    %v3956 = vrot.slane %v3879, 1
    %v3957 = vsel %vm1863, %v3955, %v3956
    %v3958 = vrot.slane %v3880, 1
    %v3959 = vrot.slane %v3881, 1
    %v3960 = vsel %vm1863, %v3958, %v3959
    %v3961 = vrot.slane %v3882, 1
    %v3962 = vrot.slane %v3883, 1
    %v3963 = vsel %vm1863, %v3961, %v3962
    %3964 = vrot.lane.b32.xlu0 %v3918, 96
    %v3965 = vpop.permute.xlu0 %3964
    %3966 = vrot.lane.b32.xlu0 %v3921, 96
    %v3967 = vpop.permute.xlu0 %3966
    %3968 = vrot.lane.b32.xlu0 %v3924, 96
    %v3969 = vpop.permute.xlu0 %3968
    %3970 = vrot.lane.b32.xlu0 %v3927, 96
    %v3971 = vpop.permute.xlu0 %3970
    %3972 = vrot.lane.b32.xlu0 %v3930, 96
    %v3973 = vpop.permute.xlu0 %3972
    %3974 = vrot.lane.b32.xlu0 %v3933, 96
    %v3975 = vpop.permute.xlu0 %3974
    %3976 = vrot.lane.b32.xlu0 %v3936, 96
    %v3977 = vpop.permute.xlu0 %3976
    %3978 = vrot.lane.b32.xlu0 %v3939, 96
    %v3979 = vpop.permute.xlu0 %3978
    %3980 = vrot.lane.b32.xlu0 %v3942, 96
    %v3981 = vpop.permute.xlu0 %3980
    %3982 = vrot.lane.b32.xlu0 %v3945, 96
    %v3983 = vpop.permute.xlu0 %3982
    %3984 = vrot.lane.b32.xlu0 %v3948, 96
    %v3985 = vpop.permute.xlu0 %3984
    %3986 = vrot.lane.b32.xlu0 %v3951, 96
    %v3987 = vpop.permute.xlu0 %3986
    %3988 = vrot.lane.b32.xlu0 %v3954, 96
    %v3989 = vpop.permute.xlu0 %3988
    %3990 = vrot.lane.b32.xlu0 %v3957, 96
    %v3991 = vpop.permute.xlu0 %3990
    %3992 = vrot.lane.b32.xlu0 %v3960, 96
    %v3993 = vpop.permute.xlu0 %3992
    %3994 = vrot.lane.b32.xlu0 %v3963, 96
    %v3995 = vpop.permute.xlu0 %3994
    %vm4012 = vcmask 785408
    %v4013 = vsel %vm4012, %v3074, %v3965
    %v4014 = vsel %vm4012, %v3075, %v3967
    %v4015 = vsel %vm4012, %v3076, %v3969
    %v4016 = vsel %vm4012, %v3077, %v3971
    %v4017 = vsel %vm4012, %v3078, %v3973
    %v4018 = vsel %vm4012, %v3079, %v3975
    %v4019 = vsel %vm4012, %v3080, %v3977
    %v4020 = vsel %vm4012, %v3081, %v3979
    %v4021 = vsel %vm4012, %v3082, %v3981
    %v4022 = vsel %vm4012, %v3083, %v3983
    %v4023 = vsel %vm4012, %v3084, %v3985
    %v4024 = vsel %vm4012, %v3085, %v3987
    %v4025 = vsel %vm4012, %v3086, %v3989
    %v4026 = vsel %vm4012, %v3087, %v3991
    %v4027 = vsel %vm4012, %v3088, %v3993
    %v4028 = vsel %vm4012, %v3089, %v3995
    %v4029 = vpack.c.bf16 %v4014, %v4013
    %v4030 = vpack.c.bf16 %v3967, %v3965
    %v4031 = vpack.c.bf16 %v4016, %v4015
    %v4032 = vpack.c.bf16 %v3971, %v3969
    %v4033 = vpack.c.bf16 %v4018, %v4017
    %v4034 = vpack.c.bf16 %v3975, %v3973
    %v4035 = vpack.c.bf16 %v4020, %v4019
    %v4036 = vpack.c.bf16 %v3979, %v3977
    %v4037 = vpack.c.bf16 %v4022, %v4021
    %v4038 = vpack.c.bf16 %v3983, %v3981
    %v4039 = vpack.c.bf16 %v4024, %v4023
    %v4040 = vpack.c.bf16 %v3987, %v3985
    %v4041 = vpack.c.bf16 %v4026, %v4025
    %v4042 = vpack.c.bf16 %v3991, %v3989
    %v4043 = vpack.c.bf16 %v4028, %v4027
    %v4044 = vpack.c.bf16 %v3995, %v3993
    %v4045 = vld [vmem:[%s3] sm:$0xf]
    %v4046 = vld [vmem:[%s3 + $0x4] sm:$0xf]
    %v4047 = vld [vmem:[%s3 + $0x8] sm:$0xf]
    %v4048 = vld [vmem:[%s3 + $0xc] sm:$0xf]
    %v4049 = vld [vmem:[%s3 + $0x10] sm:$0xf]
    %v4050 = vld [vmem:[%s3 + $0x14] sm:$0xf]
    %v4051 = vld [vmem:[%s3 + $0x18] sm:$0xf]
    %v4052 = vld [vmem:[%s3 + $0x1c] sm:$0xf]
    %v4053 = vld [vmem:[%s3 + $0x20] sm:$0xf]
    %v4054 = vld [vmem:[%s3 + $0x24] sm:$0xf]
    %v4055 = vld [vmem:[%s3 + $0x28] sm:$0xf]
    %v4056 = vld [vmem:[%s3 + $0x2c] sm:$0xf]
    %v4057 = vld [vmem:[%s3 + $0x30] sm:$0xf]
    %v4058 = vld [vmem:[%s3 + $0x34] sm:$0xf]
    %v4059 = vld [vmem:[%s3 + $0x38] sm:$0xf]
    %v4060 = vld [vmem:[%s3 + $0x3c] sm:$0xf]
    %v4061 = vld [vmem:[%s3 + $0x40] sm:$0xf]
    %v4062 = vld [vmem:[%s3 + $0x44] sm:$0xf]
    %v4063 = vld [vmem:[%s3 + $0x48] sm:$0x7]
    %v4064 = vld [vmem:[%s4] sm:$0x1]
    %v4066 = vlaneseq
    %v4067 = vshrl.u32 %v4066, 7
    %v4068 = vsub.s32 0, %v4067
    %v4069 = vrot.slane %v4064, %v4068
    %v4090 = vunpack.c.l.b16 %v4045
    %v4091 = vunpack.c.l.b16 %v4046
    %v4092 = vunpack.c.l.b16 %v4047
    %v4093 = vunpack.c.l.b16 %v4048
    %v4094 = vunpack.c.l.b16 %v4049
    %v4095 = vunpack.c.l.b16 %v4050
    %v4096 = vunpack.c.l.b16 %v4051
    %v4097 = vunpack.c.l.b16 %v4052
    %v4098 = vunpack.c.l.b16 %v4053
    %v4099 = vunpack.c.l.b16 %v4054
    %v4100 = vunpack.c.l.b16 %v4055
    %v4101 = vunpack.c.l.b16 %v4056
    %v4102 = vunpack.c.l.b16 %v4057
    %v4103 = vunpack.c.l.b16 %v4058
    %v4104 = vunpack.c.l.b16 %v4059
    %v4105 = vunpack.c.l.b16 %v4060
    %v4106 = vunpack.c.l.b16 %v4061
    %v4107 = vunpack.c.l.b16 %v4062
    %v4108 = vunpack.c.l.b16 %v4063
    %v4109 = vpack.c.b16 %v4091, %v4090
    %v4110 = vpack.c.b16 %v4093, %v4092
    %v4111 = vpack.c.b16 %v4095, %v4094
    %v4112 = vpack.c.b16 %v4097, %v4096
    %v4113 = vpack.c.b16 %v4099, %v4098
    %v4114 = vpack.c.b16 %v4101, %v4100
    %v4115 = vpack.c.b16 %v4103, %v4102
    %v4116 = vpack.c.b16 %v4105, %v4104
    %v4117 = vpack.c.b16 %v4107, %v4106
    %v4118 = vpack.c.b16 %v4108, %v4108
    %vm4128 = vcmask 179200
    %v4130 = vsel %vm4128, %v4030, 0
    %v4133 = vsel %vm4128, %v4032, 0
    %v4136 = vsel %vm4128, %v4034, 0
    %v4139 = vsel %vm4128, %v4036, 0
    %v4142 = vsel %vm4128, %v4038, 0
    %v4145 = vsel %vm4128, %v4040, 0
    %v4148 = vsel %vm4128, %v4042, 0
    %v4151 = vsel %vm4128, %v4044, 0
    %vm4153 = vcmask 1042432
    %v4155 = vsel %vm4153, %v4118, 0
    %4157 = vmatprep.subr.bf16.mxu0 0
    %4158 = vmatpush1.bf16.msra.mxu0 %v4109
    %4159 = vmatprep.subr.bf16.mxu0 0
    %4160 = vmatpush1.bf16.msra.mxu0 %v4110
    %4161 = vmatprep.subr.bf16.mxu0 0
    %4162 = vmatpush1.bf16.msra.mxu0 %v4111
    %4163 = vmatprep.subr.bf16.mxu0 0
    %4164 = vmatpush1.bf16.msra.mxu0 %v4112
    %4165 = vmatprep.subr.bf16.mxu0 0
    %4166 = vmatpush1.bf16.msra.mxu0 %v4113
    %4167 = vmatprep.subr.bf16.mxu0 0
    %4168 = vmatpush1.bf16.msra.mxu0 %v4114
    %4169 = vmatprep.subr.bf16.mxu0 0
    %4170 = vmatpush1.bf16.msra.mxu0 %v4115
    %4171 = vmatprep.subr.bf16.mxu0 0
    %4172 = vmatpush1.bf16.msra.mxu0 %v4116
    %4173 = vmatprep.subr.bf16.mxu0 0
    %4174 = vmatpush1.bf16.msra.mxu0 %v4117
    %4175 = vmatprep.subr.bf16.mxu0 0
    %4176 = vmatpush1.bf16.msra.mxu0 %v4155
    %4177 = vmatprep.subr.bf16.mxu0 0
    %4178 = vmatpush1.bf16.msra.mxu0 0
    %4179 = vmatprep.subr.bf16.mxu0 0
    %4180 = vmatpush1.bf16.msra.mxu0 0
    %4181 = vmatprep.subr.bf16.mxu0 0
    %4182 = vmatpush1.bf16.msra.mxu0 0
    %4183 = vmatprep.subr.bf16.mxu0 0
    %4184 = vmatpush1.bf16.msra.mxu0 0
    %4185 = vmatprep.subr.bf16.mxu0 0
    %4186 = vmatpush1.bf16.msra.mxu0 0
    %4187 = vmatprep.subr.bf16.mxu0 0
    %4188 = vmatpush1.bf16.msra.mxu0 0
    %4189 = vmatprep.mubr.bf16.mxu0 %v4130
    %4190 = vmatmul.mubr.bf16.gmra.mrb[0].mxu0 %v4029
    %v4191 = vpop.f32.mrb[0].mxu0
    %v4192 = vadd.f32 %v4069, %v4191
    %v4193 = vpop.f32.mrb[0].mxu0
    %v4194 = vpop.f32.mrb[0].mxu0
    %v4195 = vadd.f32 %v4069, %v4194
    %v4196 = vpop.f32.mrb[0].mxu0
    %4197 = vmatprep.mubr.bf16.mxu0 %v4133
    %4198 = vmatmul.mubr.bf16.gmra.mrb[0].mxu0 %v4031
    %v4199 = vpop.f32.mrb[0].mxu0
    %v4200 = vadd.f32 %v4069, %v4199
    %v4201 = vpop.f32.mrb[0].mxu0
    %v4202 = vpop.f32.mrb[0].mxu0
    %v4203 = vadd.f32 %v4069, %v4202
    %v4204 = vpop.f32.mrb[0].mxu0
    %4205 = vmatprep.mubr.bf16.mxu0 %v4136
    %4206 = vmatmul.mubr.bf16.gmra.mrb[0].mxu0 %v4033
    %v4207 = vpop.f32.mrb[0].mxu0
    %v4208 = vadd.f32 %v4069, %v4207
    %v4209 = vpop.f32.mrb[0].mxu0
    %v4210 = vpop.f32.mrb[0].mxu0
    %v4211 = vadd.f32 %v4069, %v4210
    %v4212 = vpop.f32.mrb[0].mxu0
    %4213 = vmatprep.mubr.bf16.mxu0 %v4139
    %4214 = vmatmul.mubr.bf16.gmra.mrb[0].mxu0 %v4035
    %v4215 = vpop.f32.mrb[0].mxu0
    %v4216 = vadd.f32 %v4069, %v4215
    %v4217 = vpop.f32.mrb[0].mxu0
    %v4218 = vpop.f32.mrb[0].mxu0
    %v4219 = vadd.f32 %v4069, %v4218
    %v4220 = vpop.f32.mrb[0].mxu0
    %4221 = vmatprep.mubr.bf16.mxu0 %v4142
    %4222 = vmatmul.mubr.bf16.gmra.mrb[0].mxu0 %v4037
    %v4223 = vpop.f32.mrb[0].mxu0
    %v4224 = vadd.f32 %v4069, %v4223
    %v4225 = vpop.f32.mrb[0].mxu0
    %v4226 = vpop.f32.mrb[0].mxu0
    %v4227 = vadd.f32 %v4069, %v4226
    %v4228 = vpop.f32.mrb[0].mxu0
    %4229 = vmatprep.mubr.bf16.mxu0 %v4145
    %4230 = vmatmul.mubr.bf16.gmra.mrb[0].mxu0 %v4039
    %v4231 = vpop.f32.mrb[0].mxu0
    %v4232 = vadd.f32 %v4069, %v4231
    %v4233 = vpop.f32.mrb[0].mxu0
    %v4234 = vpop.f32.mrb[0].mxu0
    %v4235 = vadd.f32 %v4069, %v4234
    %v4236 = vpop.f32.mrb[0].mxu0
    %4237 = vmatprep.mubr.bf16.mxu0 %v4148
    %4238 = vmatmul.mubr.bf16.gmra.mrb[0].mxu0 %v4041
    %v4239 = vpop.f32.mrb[0].mxu0
    %v4240 = vadd.f32 %v4069, %v4239
    %v4241 = vpop.f32.mrb[0].mxu0
    %v4242 = vpop.f32.mrb[0].mxu0
    %v4243 = vadd.f32 %v4069, %v4242
    %v4244 = vpop.f32.mrb[0].mxu0
    %4245 = vmatprep.mubr.bf16.mxu0 %v4151
    %4246 = vmatmul.mubr.bf16.gmra.mrb[0].mxu0 %v4043
    %v4247 = vpop.f32.mrb[0].mxu0
    %v4248 = vadd.f32 %v4069, %v4247
    %v4249 = vpop.f32.mrb[0].mxu0
    %v4250 = vpop.f32.mrb[0].mxu0
    %v4251 = vadd.f32 %v4069, %v4250
    %v4252 = vpop.f32.mrb[0].mxu0
    %4253 = vdwg.mxu0
    %v4254 = vmax.f32 %v4192, 0.0
    %v4255 = vmax.f32 %v4195, 0.0
    %v4256 = vmax.f32 %v4200, 0.0
    %v4257 = vmax.f32 %v4203, 0.0
    %v4258 = vmax.f32 %v4208, 0.0
    %v4259 = vmax.f32 %v4211, 0.0
    %v4260 = vmax.f32 %v4216, 0.0
    %v4261 = vmax.f32 %v4219, 0.0
    %v4262 = vmax.f32 %v4224, 0.0
    %v4263 = vmax.f32 %v4227, 0.0
    %v4264 = vmax.f32 %v4232, 0.0
    %v4265 = vmax.f32 %v4235, 0.0
    %v4266 = vmax.f32 %v4240, 0.0
    %v4267 = vmax.f32 %v4243, 0.0
    %v4268 = vmax.f32 %v4248, 0.0
    %v4269 = vmax.f32 %v4251, 0.0
    %v4270 = vadd.f32 %v4254, %v4255
    %v4271 = vadd.f32 %v4262, %v4263
    %v4274 = vrot.slane %v4270, 1
    %v4275 = vrot.slane %v4271, 1
    %v4278 = vadd.f32 %v4270, %v4274
    %v4279 = vadd.f32 %v4271, %v4275
    %v4280 = vadd.f32 %v4256, %v4257
    %v4281 = vadd.f32 %v4264, %v4265
    %v4284 = vrot.slane %v4280, 1
    %v4285 = vrot.slane %v4281, 1
    %v4288 = vadd.f32 %v4280, %v4284
    %v4289 = vadd.f32 %v4281, %v4285
    %v4290 = vadd.f32 %v4258, %v4259
    %v4291 = vadd.f32 %v4266, %v4267
    %v4294 = vrot.slane %v4290, 1
    %v4295 = vrot.slane %v4291, 1
    %v4298 = vadd.f32 %v4290, %v4294
    %v4299 = vadd.f32 %v4291, %v4295
    %v4300 = vadd.f32 %v4260, %v4261
    %v4301 = vadd.f32 %v4268, %v4269
    %v4304 = vrot.slane %v4300, 1
    %v4305 = vrot.slane %v4301, 1
    %v4308 = vadd.f32 %v4300, %v4304
    %v4309 = vadd.f32 %v4301, %v4305
    %v4312 = vrot.slane %v4279, 7
    %vm4313 = vcmask 1041409
    %v4314 = vsel %vm4313, %v4312, %v4278
    %v4316 = vrot.slane %v4278, 2
    %v4317 = vrot.slane %v4279, 1
    %v4318 = vsel %vm4313, %v4317, %v4316
    %4319 = vrot.lane.b32.xlu0 %v4318, 16
    %v4320 = vpop.permute.xlu0 %4319
    %v4322 = vrot.slane %v4278, 4
    %v4323 = vrot.slane %v4279, 3
    %v4324 = vsel %vm4313, %v4323, %v4322
    %4325 = vrot.lane.b32.xlu0 %v4324, 32
    %v4326 = vpop.permute.xlu0 %4325
    %v4328 = vrot.slane %v4278, 6
    %v4329 = vrot.slane %v4279, 5
    %v4330 = vsel %vm4313, %v4329, %v4328
    %4331 = vrot.lane.b32.xlu0 %v4330, 48
    %v4332 = vpop.permute.xlu0 %4331
    %v4336 = vrot.slane %v4289, 7
    %v4337 = vsel %vm4313, %v4336, %v4288
    %4338 = vrot.lane.b32.xlu0 %v4337, 64
    %v4339 = vpop.permute.xlu0 %4338
    %v4341 = vrot.slane %v4288, 2
    %v4342 = vrot.slane %v4289, 1
    %v4343 = vsel %vm4313, %v4342, %v4341
    %4344 = vrot.lane.b32.xlu0 %v4343, 80
    %v4345 = vpop.permute.xlu0 %4344
    %v4347 = vrot.slane %v4288, 4
    %v4348 = vrot.slane %v4289, 3
    %v4349 = vsel %vm4313, %v4348, %v4347
    %4350 = vrot.lane.b32.xlu0 %v4349, 96
    %v4351 = vpop.permute.xlu0 %4350
    %v4353 = vrot.slane %v4288, 6
    %v4354 = vrot.slane %v4289, 5
    %v4355 = vsel %vm4313, %v4354, %v4353
    %4356 = vrot.lane.b32.xlu0 %v4355, 112
    %v4357 = vpop.permute.xlu0 %4356
    %v4361 = vrot.slane %v4299, 7
    %v4362 = vsel %vm4313, %v4361, %v4298
    %v4364 = vrot.slane %v4298, 2
    %v4365 = vrot.slane %v4299, 1
    %v4366 = vsel %vm4313, %v4365, %v4364
    %4367 = vrot.lane.b32.xlu0 %v4366, 16
    %v4368 = vpop.permute.xlu0 %4367
    %v4370 = vrot.slane %v4298, 4
    %v4371 = vrot.slane %v4299, 3
    %v4372 = vsel %vm4313, %v4371, %v4370
    %4373 = vrot.lane.b32.xlu0 %v4372, 32
    %v4374 = vpop.permute.xlu0 %4373
    %v4376 = vrot.slane %v4298, 6
    %v4377 = vrot.slane %v4299, 5
    %v4378 = vsel %vm4313, %v4377, %v4376
    %4379 = vrot.lane.b32.xlu0 %v4378, 48
    %v4380 = vpop.permute.xlu0 %4379
    %v4384 = vrot.slane %v4309, 7
    %v4385 = vsel %vm4313, %v4384, %v4308
    %4386 = vrot.lane.b32.xlu0 %v4385, 64
    %v4387 = vpop.permute.xlu0 %4386
    %v4389 = vrot.slane %v4308, 2
    %v4390 = vrot.slane %v4309, 1
    %v4391 = vsel %vm4313, %v4390, %v4389
    %4392 = vrot.lane.b32.xlu0 %v4391, 80
    %v4393 = vpop.permute.xlu0 %4392
    %v4395 = vrot.slane %v4308, 4
    %v4396 = vrot.slane %v4309, 3
    %v4397 = vsel %vm4313, %v4396, %v4395
    %4398 = vrot.lane.b32.xlu0 %v4397, 96
    %v4399 = vpop.permute.xlu0 %4398
    %v4401 = vrot.slane %v4308, 6
    %v4402 = vrot.slane %v4309, 5
    %v4403 = vsel %vm4313, %v4402, %v4401
    %4404 = vrot.lane.b32.xlu0 %v4403, 112
    %v4405 = vpop.permute.xlu0 %4404
    %vm4407 = vcmask 130048
    %v4408 = vsel %vm4407, %v4314, %v4320
    %vm4409 = vcmask 261120
    %v4410 = vsel %vm4409, %v4408, %v4326
    %v4411 = vsel %vm2954, %v4410, %v4332
    %vm4412 = vcmask 523264
    %v4413 = vsel %vm4412, %v4411, %v4339
    %vm4414 = vcmask 654336
    %v4415 = vsel %vm4414, %v4413, %v4345
    %v4416 = vsel %vm4012, %v4415, %v4351
    %vm4417 = vcmask 916480
    %v4418 = vsel %vm4417, %v4416, %v4357
    %v4419 = vsel %vm4407, %v4362, %v4368
    %v4420 = vsel %vm4409, %v4419, %v4374
    %v4421 = vsel %vm2954, %v4420, %v4380
    %v4422 = vsel %vm4412, %v4421, %v4387
    %v4423 = vsel %vm4414, %v4422, %v4393
    %v4424 = vsel %vm4012, %v4423, %v4399
    %v4425 = vsel %vm4417, %v4424, %v4405
    %v4426 = vpack.c.bf16 %v4418, %v4418
    %v4427 = vpack.c.bf16 %v4425, %v4425
    %v4428 = vld [vmem:[%s5] sm:$0xf]
    %v4429 = vld [vmem:[%s5 + $0x4] sm:$0xf]
    %v4430 = vld [vmem:[%s5 + $0x8] sm:$0xf]
    %v4431 = vld [vmem:[%s5 + $0xc] sm:$0xf]
    %v4432 = vld [vmem:[%s5 + $0x10] sm:$0xf]
    %v4433 = vld [vmem:[%s5 + $0x14] sm:$0xf]
    %v4434 = vld [vmem:[%s5 + $0x18] sm:$0xf]
    %v4435 = vld [vmem:[%s5 + $0x1c] sm:$0xf]
    %v4436 = vld [vmem:[%s5 + $0x20] sm:$0xf]
    %v4437 = vld [vmem:[%s5 + $0x24] sm:$0xf]
    %v4438 = vld [vmem:[%s5 + $0x28] sm:$0xf]
    %v4439 = vld [vmem:[%s5 + $0x2c] sm:$0xf]
    %v4440 = vld [vmem:[%s5 + $0x30] sm:$0xf]
    %v4441 = vld [vmem:[%s5 + $0x34] sm:$0xf]
    %v4442 = vld [vmem:[%s5 + $0x38] sm:$0xf]
    %v4443 = vld [vmem:[%s5 + $0x3c] sm:$0xf]
    %v4444 = vld [vmem:[%s5 + $0x40] sm:$0xf]
    %v4445 = vld [vmem:[%s5 + $0x44] sm:$0xf]
    %v4446 = vld [vmem:[%s5 + $0x48] sm:$0xf]
    %v4447 = vld [vmem:[%s5 + $0x4c] sm:$0xf]
    %v4448 = vld [vmem:[%s5 + $0x50] sm:$0xf]
    %v4449 = vld [vmem:[%s5 + $0x54] sm:$0xf]
    %v4450 = vld [vmem:[%s5 + $0x58] sm:$0xf]
    %v4451 = vld [vmem:[%s5 + $0x5c] sm:$0xf]
    %v4452 = vld [vmem:[%s5 + $0x60] sm:$0xf]
    %v4453 = vld [vmem:[%s5 + $0x64] sm:$0xf]
    %v4454 = vld [vmem:[%s5 + $0x68] sm:$0xf]
    %v4455 = vld [vmem:[%s5 + $0x6c] sm:$0xf]
    %v4456 = vld [vmem:[%s5 + $0x70] sm:$0xf]
    %v4457 = vld [vmem:[%s5 + $0x74] sm:$0xf]
    %v4458 = vld [vmem:[%s5 + $0x78] sm:$0xf]
    %v4459 = vld [vmem:[%s5 + $0x7c] sm:$0xf]
    %v4460 = vld [vmem:[%s6] sm:$0x1]
    %v4462 = vlaneseq
    %v4463 = vshrl.u32 %v4462, 7
    %v4464 = vsub.s32 0, %v4463
    %v4465 = vrot.slane %v4460, %v4464
    %v4499 = vunpack.c.l.b16 %v4428
    %v4500 = vunpack.c.l.b16 %v4429
    %v4501 = vunpack.c.l.b16 %v4430
    %v4502 = vunpack.c.l.b16 %v4431
    %v4503 = vunpack.c.l.b16 %v4432
    %v4504 = vunpack.c.l.b16 %v4433
    %v4505 = vunpack.c.l.b16 %v4434
    %v4506 = vunpack.c.l.b16 %v4435
    %v4507 = vunpack.c.l.b16 %v4436
    %v4508 = vunpack.c.l.b16 %v4437
    %v4509 = vunpack.c.l.b16 %v4438
    %v4510 = vunpack.c.l.b16 %v4439
    %v4511 = vunpack.c.l.b16 %v4440
    %v4512 = vunpack.c.l.b16 %v4441
    %v4513 = vunpack.c.l.b16 %v4442
    %v4514 = vunpack.c.l.b16 %v4443
    %v4515 = vunpack.c.l.b16 %v4444
    %v4516 = vunpack.c.l.b16 %v4445
    %v4517 = vunpack.c.l.b16 %v4446
    %v4518 = vunpack.c.l.b16 %v4447
    %v4519 = vunpack.c.l.b16 %v4448
    %v4520 = vunpack.c.l.b16 %v4449
    %v4521 = vunpack.c.l.b16 %v4450
    %v4522 = vunpack.c.l.b16 %v4451
    %v4523 = vunpack.c.l.b16 %v4452
    %v4524 = vunpack.c.l.b16 %v4453
    %v4525 = vunpack.c.l.b16 %v4454
    %v4526 = vunpack.c.l.b16 %v4455
    %v4527 = vunpack.c.l.b16 %v4456
    %v4528 = vunpack.c.l.b16 %v4457
    %v4529 = vunpack.c.l.b16 %v4458
    %v4530 = vunpack.c.l.b16 %v4459
    %v4531 = vpack.c.b16 %v4500, %v4499
    %v4532 = vpack.c.b16 %v4502, %v4501
    %v4533 = vpack.c.b16 %v4504, %v4503
    %v4534 = vpack.c.b16 %v4506, %v4505
    %v4535 = vpack.c.b16 %v4508, %v4507
    %v4536 = vpack.c.b16 %v4510, %v4509
    %v4537 = vpack.c.b16 %v4512, %v4511
    %v4538 = vpack.c.b16 %v4514, %v4513
    %v4539 = vpack.c.b16 %v4516, %v4515
    %v4540 = vpack.c.b16 %v4518, %v4517
    %v4541 = vpack.c.b16 %v4520, %v4519
    %v4542 = vpack.c.b16 %v4522, %v4521
    %v4543 = vpack.c.b16 %v4524, %v4523
    %v4544 = vpack.c.b16 %v4526, %v4525
    %v4545 = vpack.c.b16 %v4528, %v4527
    %v4546 = vpack.c.b16 %v4530, %v4529
    %4563 = vmatprep.subr.bf16.mxu0 0
    %4564 = vmatpush1.bf16.msra.mxu0 %v4531
    %4565 = vmatprep.subr.bf16.mxu0 0
    %4566 = vmatpush1.bf16.msra.mxu0 %v4532
    %4567 = vmatprep.subr.bf16.mxu0 0
    %4568 = vmatpush1.bf16.msra.mxu0 %v4533
    %4569 = vmatprep.subr.bf16.mxu0 0
    %4570 = vmatpush1.bf16.msra.mxu0 %v4534
    %4571 = vmatprep.subr.bf16.mxu0 0
    %4572 = vmatpush1.bf16.msra.mxu0 %v4535
    %4573 = vmatprep.subr.bf16.mxu0 0
    %4574 = vmatpush1.bf16.msra.mxu0 %v4536
    %4575 = vmatprep.subr.bf16.mxu0 0
    %4576 = vmatpush1.bf16.msra.mxu0 %v4537
    %4577 = vmatprep.subr.bf16.mxu0 0
    %4578 = vmatpush1.bf16.msra.mxu0 %v4538
    %4579 = vmatprep.subr.bf16.mxu0 0
    %4580 = vmatpush1.bf16.msra.mxu0 %v4539
    %4581 = vmatprep.subr.bf16.mxu0 0
    %4582 = vmatpush1.bf16.msra.mxu0 %v4540
    %4583 = vmatprep.subr.bf16.mxu0 0
    %4584 = vmatpush1.bf16.msra.mxu0 %v4541
    %4585 = vmatprep.subr.bf16.mxu0 0
    %4586 = vmatpush1.bf16.msra.mxu0 %v4542
    %4587 = vmatprep.subr.bf16.mxu0 0
    %4588 = vmatpush1.bf16.msra.mxu0 %v4543
    %4589 = vmatprep.subr.bf16.mxu0 0
    %4590 = vmatpush1.bf16.msra.mxu0 %v4544
    %4591 = vmatprep.subr.bf16.mxu0 0
    %4592 = vmatpush1.bf16.msra.mxu0 %v4545
    %4593 = vmatprep.subr.bf16.mxu0 0
    %4594 = vmatpush1.bf16.msra.mxu0 %v4546
    %4595 = vmatprep.mubr.bf16.mxu0 %v4427
    %4596 = vmatmul.mubr.bf16.gmra.mrb[0].mxu0 %v4426
    %v4597 = vpop.f32.mrb[0].mxu0
    %v4598 = vadd.f32 %v4465, %v4597
    %v4599 = vpop.f32.mrb[0].mxu0
    %v4600 = vpop.f32.mrb[0].mxu0
    %v4601 = vpop.f32.mrb[0].mxu0
    %4602 = vdwg.mxu0
    %v4603 = vmax.f32 %v4598, 0.0
    %v4604 = vpack.c.bf16 %v4603, %v4603
    %v4605 = vld [vmem:[%s7] sm:$0xf]
    %v4606 = vld [vmem:[%s7 + $0x4] sm:$0xf]
    %v4607 = vld [vmem:[%s7 + $0x8] sm:$0xf]
    %v4608 = vld [vmem:[%s7 + $0xc] sm:$0xf]
    %v4609 = vld [vmem:[%s7 + $0x10] sm:$0xf]
    %v4610 = vld [vmem:[%s7 + $0x14] sm:$0xf]
    %v4611 = vld [vmem:[%s7 + $0x18] sm:$0xf]
    %v4612 = vld [vmem:[%s7 + $0x1c] sm:$0xf]
    %v4613 = vld [vmem:[%s7 + $0x20] sm:$0xf]
    %v4614 = vld [vmem:[%s7 + $0x24] sm:$0xf]
    %v4615 = vld [vmem:[%s7 + $0x28] sm:$0xf]
    %v4616 = vld [vmem:[%s7 + $0x2c] sm:$0xf]
    %v4617 = vld [vmem:[%s7 + $0x30] sm:$0xf]
    %v4618 = vld [vmem:[%s7 + $0x34] sm:$0xf]
    %v4619 = vld [vmem:[%s7 + $0x38] sm:$0xf]
    %v4620 = vld [vmem:[%s8] sm:$0x1]
    %v4622 = vlaneseq
    %v4623 = vshrl.u32 %v4622, 7
    %v4624 = vsub.s32 0, %v4623
    %v4625 = vrot.slane %v4620, %v4624
    %v4642 = vunpack.c.l.b16 %v4605
    %v4643 = vunpack.c.l.b16 %v4606
    %v4644 = vunpack.c.l.b16 %v4607
    %v4645 = vunpack.c.l.b16 %v4608
    %v4646 = vunpack.c.l.b16 %v4609
    %v4647 = vunpack.c.l.b16 %v4610
    %v4648 = vunpack.c.l.b16 %v4611
    %v4649 = vunpack.c.l.b16 %v4612
    %v4650 = vunpack.c.l.b16 %v4613
    %v4651 = vunpack.c.l.b16 %v4614
    %v4652 = vunpack.c.l.b16 %v4615
    %v4653 = vunpack.c.l.b16 %v4616
    %v4654 = vunpack.c.l.b16 %v4617
    %v4655 = vunpack.c.l.b16 %v4618
    %v4656 = vunpack.c.l.b16 %v4619
    %v4657 = vpack.c.b16 %v4643, %v4642
    %v4658 = vpack.c.b16 %v4645, %v4644
    %v4659 = vpack.c.b16 %v4647, %v4646
    %v4660 = vpack.c.b16 %v4649, %v4648
    %v4661 = vpack.c.b16 %v4651, %v4650
    %v4662 = vpack.c.b16 %v4653, %v4652
    %v4663 = vpack.c.b16 %v4655, %v4654
    %v4664 = vpack.c.b16 %v4656, %v4656
    %vm4672 = vcmask 982016
    %v4674 = vsel %vm4672, %v4604, 0
    %v4677 = vsel %vm783, %v4664, 0
    %4679 = vmatprep.subr.bf16.mxu0 0
    %4680 = vmatpush1.bf16.msra.mxu0 %v4657
    %4681 = vmatprep.subr.bf16.mxu0 0
    %4682 = vmatpush1.bf16.msra.mxu0 %v4658
    %4683 = vmatprep.subr.bf16.mxu0 0
    %4684 = vmatpush1.bf16.msra.mxu0 %v4659
    %4685 = vmatprep.subr.bf16.mxu0 0
    %4686 = vmatpush1.bf16.msra.mxu0 %v4660
    %4687 = vmatprep.subr.bf16.mxu0 0
    %4688 = vmatpush1.bf16.msra.mxu0 %v4661
    %4689 = vmatprep.subr.bf16.mxu0 0
    %4690 = vmatpush1.bf16.msra.mxu0 %v4662
    %4691 = vmatprep.subr.bf16.mxu0 0
    %4692 = vmatpush1.bf16.msra.mxu0 %v4663
    %4693 = vmatprep.subr.bf16.mxu0 0
    %4694 = vmatpush1.bf16.msra.mxu0 %v4677
    %4695 = vmatprep.subr.bf16.mxu0 0
    %4696 = vmatpush1.bf16.msra.mxu0 0
    %4697 = vmatprep.subr.bf16.mxu0 0
    %4698 = vmatpush1.bf16.msra.mxu0 0
    %4699 = vmatprep.subr.bf16.mxu0 0
    %4700 = vmatpush1.bf16.msra.mxu0 0
    %4701 = vmatprep.subr.bf16.mxu0 0
    %4702 = vmatpush1.bf16.msra.mxu0 0
    %4703 = vmatprep.subr.bf16.mxu0 0
    %4704 = vmatpush1.bf16.msra.mxu0 0
    %4705 = vmatprep.subr.bf16.mxu0 0
    %4706 = vmatpush1.bf16.msra.mxu0 0
    %4707 = vmatprep.subr.bf16.mxu0 0
    %4708 = vmatpush1.bf16.msra.mxu0 0
    %4709 = vmatprep.subr.bf16.mxu0 0
    %4710 = vmatpush1.bf16.msra.mxu0 0
    %4711 = vmatprep.mubr.bf16.mxu0 0
    %4712 = vmatmul.mubr.bf16.gmra.mrb[0].mxu0 %v4674
    %v4713 = vpop.f32.mrb[0].mxu0
    %v4714 = vadd.f32 %v4625, %v4713
    %v4715 = vpop.f32.mrb[0].mxu0
    %v4716 = vpop.f32.mrb[0].mxu0
    %v4717 = vpop.f32.mrb[0].mxu0
    %4718 = vdwg.mxu0
    %v4719 = vmax.f32 %v4714, 0.0
    %v4720 = vpack.c.bf16 %v4719, %v4719
    %v4721 = vld [vmem:[%s9] sm:$0xf]
    %v4722 = vld [vmem:[%s9 + $0x4] sm:$0xf]
    %v4723 = vld [vmem:[%s9 + $0x8] sm:$0xf]
    %v4724 = vld [vmem:[%s9 + $0xc] sm:$0xf]
    %v4725 = vld [vmem:[%s9 + $0x10] sm:$0xf]
    %v4726 = vld [vmem:[%s9 + $0x14] sm:$0xf]
    %v4727 = vld [vmem:[%s9 + $0x18] sm:$0xf]
    %v4728 = vld [vmem:[%s9 + $0x1c] sm:$0xf]
    %v4729 = vld [vmem:[%s9 + $0x20] sm:$0xf]
    %v4730 = vld [vmem:[%s9 + $0x24] sm:$0xf]
    %v4731 = vld [vmem:[%s9 + $0x28] sm:$0x3]
    %v4732 = vld [vmem:[%s10] sm:$0x1]
    %v4734 = vlaneseq
    %v4735 = vshrl.u32 %v4734, 7
    %v4736 = vsub.s32 0, %v4735
    %v4737 = vrot.slane %v4732, %v4736
    %v4750 = vunpack.c.l.b16 %v4721
    %v4751 = vunpack.c.l.b16 %v4722
    %v4752 = vunpack.c.l.b16 %v4723
    %v4753 = vunpack.c.l.b16 %v4724
    %v4754 = vunpack.c.l.b16 %v4725
    %v4755 = vunpack.c.l.b16 %v4726
    %v4756 = vunpack.c.l.b16 %v4727
    %v4757 = vunpack.c.l.b16 %v4728
    %v4758 = vunpack.c.l.b16 %v4729
    %v4759 = vunpack.c.l.b16 %v4730
    %v4760 = vunpack.c.l.b16 %v4731
    %v4761 = vpack.c.b16 %v4751, %v4750
    %v4762 = vpack.c.b16 %v4753, %v4752
    %v4763 = vpack.c.b16 %v4755, %v4754
    %v4764 = vpack.c.b16 %v4757, %v4756
    %v4765 = vpack.c.b16 %v4759, %v4758
    %v4766 = vpack.c.b16 %v4760, %v4760
    %v4773 = vsel %vm3056, %v4720, 0
    %vm4775 = vcmask 1041408
    %v4777 = vsel %vm4775, %v4766, 0
    %4779 = vmatprep.subr.bf16.mxu0 0
    %4780 = vmatpush1.bf16.msra.mxu0 %v4761
    %4781 = vmatprep.subr.bf16.mxu0 0
    %4782 = vmatpush1.bf16.msra.mxu0 %v4762
    %4783 = vmatprep.subr.bf16.mxu0 0
    %4784 = vmatpush1.bf16.msra.mxu0 %v4763
    %4785 = vmatprep.subr.bf16.mxu0 0
    %4786 = vmatpush1.bf16.msra.mxu0 %v4764
    %4787 = vmatprep.subr.bf16.mxu0 0
    %4788 = vmatpush1.bf16.msra.mxu0 %v4765
    %4789 = vmatprep.subr.bf16.mxu0 0
    %4790 = vmatpush1.bf16.msra.mxu0 %v4777
    %4791 = vmatprep.subr.bf16.mxu0 0
    %4792 = vmatpush1.bf16.msra.mxu0 0
    %4793 = vmatprep.subr.bf16.mxu0 0
    %4794 = vmatpush1.bf16.msra.mxu0 0
    %4795 = vmatprep.subr.bf16.mxu0 0
    %4796 = vmatpush1.bf16.msra.mxu0 0
    %4797 = vmatprep.subr.bf16.mxu0 0
    %4798 = vmatpush1.bf16.msra.mxu0 0
    %4799 = vmatprep.subr.bf16.mxu0 0
    %4800 = vmatpush1.bf16.msra.mxu0 0
    %4801 = vmatprep.subr.bf16.mxu0 0
    %4802 = vmatpush1.bf16.msra.mxu0 0
    %4803 = vmatprep.subr.bf16.mxu0 0
    %4804 = vmatpush1.bf16.msra.mxu0 0
    %4805 = vmatprep.subr.bf16.mxu0 0
    %4806 = vmatpush1.bf16.msra.mxu0 0
    %4807 = vmatprep.subr.bf16.mxu0 0
    %4808 = vmatpush1.bf16.msra.mxu0 0
    %4809 = vmatprep.subr.bf16.mxu0 0
    %4810 = vmatpush1.bf16.msra.mxu0 0
    %4811 = vmatprep.mubr.bf16.mxu0 0
    %4812 = vmatmul.mubr.bf16.gmra.mrb[0].mxu0 %v4773
    %v4813 = vpop.f32.mrb[0].mxu0
    %v4814 = vadd.f32 %v4737, %v4813
    %v4815 = vpop.f32.mrb[0].mxu0
    %v4816 = vpop.f32.mrb[0].mxu0
    %v4817 = vpop.f32.mrb[0].mxu0
    %4818 = vdwg.mxu0
    %4819 = vst [vmem:[#allocation2] sm:$0x3] %v4814
    // Predicated region
    $region46: #{lenet5_forward.1} parent=1 // pred_check
      _
    $region47: #{lenet5_forward.1} parent=1 // pred_check_branch
      %4821 = sbr.rel (0) target = $region49
    $region48: #{lenet5_forward.1} parent=1 // pred_region
      %s4823 = ssub.s32 32, 32
      %4824 = vsyncadd [#allocation3], %s4823
      %s4826 = sshll.u32 [#allocation2], 4
      %s4827 = int_to_ptr.vmem [resolvable:$true] %s4826
      %4829 = dma.vmem_to_hbm [thread:$0]  %s4827, 32, %s11, [#allocation3]
    $region49: #{lenet5_forward.1} parent=1 // pred_fallthru
      _
    // Predicated region
    $region50: #{lenet5_forward.1} parent=1 // pred_check
      _
    $region51: #{lenet5_forward.1} parent=1 // pred_check_branch
      %4831 = sbr.rel (0) target = $region53
    $region52: #{lenet5_forward.1} parent=1 // pred_region
      %4832 = dma.done [#allocation3], 32
    $region53: #{lenet5_forward.1} parent=1 // pred_fallthru
      _
    %4833 = vsyncpa [#allocation3], 1

</llo_original>
